<compile_context>
chip_gen: v7x
topology: tpu7x:2x2x1
jax: 0.10.0
libtpu: 0.0.40
codegen_flags: <defaults>
</compile_context>

<pallas_src>
import numpy as np
import jax
import jax.numpy as jnp
from jax.experimental import pallas as pl
from jax.experimental.pallas import tpu as pltpu

_VMEM_LIMIT = 32 * 1024 * 1024                      # workload uses well under 1 MiB
_C2_SHIFTS = tuple(kh * 15 + kw for kh in range(3) for kw in range(3))  # conv2 taps
_P2_SHIFTS = (0, 1, 15, 16)                          # conv2 2x2 pool-window corners


# ----------------------------- Pallas kernel --------------------------------

def _net_kernel(p_ref,
                w1c_ref, b1c_ref, w2c_ref, b2c_ref,
                w1f_ref, b1f_ref, w2f_ref, b2f_ref, w3f_ref, b3f_ref,
                o_ref, rhs2_ref, flat_ref):
    """Whole-network forward for one batch block of TB samples.

    p_ref    : (4*TB*225, 9) bf16  conv1 im2col, rows = (corner, sample, ph*15+pw)
    w1c_ref  : (9, 6)   bf16       conv1 weight, rows = kh*3+kw
    w2c_ref  : (54, 16) bf16       conv2 weight, rows = (kh*3+kw)*6 + cin
    w*f_ref  : fc weights (in, out) bf16 ; b*_ref : f32 biases, shape (1, out)
    o_ref    : (TB, 10) f32 logits
    rhs2_ref : (TB*225, 54) f32 scratch -- conv2 im2col built by row shifts
    flat_ref : (TB, 576) f32 scratch -- lane-dense fc1 input, order (qh, qw, co)
    """
    tb = o_ref.shape[0]
    l1 = tb * 225

    # ---- conv1 + bias + ReLU + 2x2 max-pool: one combined-corner matmul ----
    out1 = jnp.dot(p_ref[...], w1c_ref[...],
                   preferred_element_type=jnp.float32)               # (4*l1, 6)
    corner1 = [out1[c * l1:(c + 1) * l1] for c in range(4)]
    h1 = jnp.maximum(jnp.maximum(corner1[0], corner1[1]),
                     jnp.maximum(corner1[2], corner1[3]))
    h1 = jnp.maximum(h1 + b1c_ref[...], 0.0)          # (l1, 6): rows (s, ph*15+pw)

    # ---- conv2 im2col: each 3x3 tap is a static row-shift of h1 ------------
    rhs2_ref[...] = jnp.zeros(rhs2_ref.shape, rhs2_ref.dtype)
    for t, s in enumerate(_C2_SHIFTS):
        rhs2_ref[0:l1 - s, 6 * t:6 * t + 6] = h1[s:, :]
    out2 = jnp.dot(rhs2_ref[...].astype(jnp.bfloat16), w2c_ref[...],
                   preferred_element_type=jnp.float32)               # (l1, 16)

    # ---- conv2 2x2 max-pool via corner row-shifts, then bias + ReLU --------
    cut = l1 - _P2_SHIFTS[-1]
    parts = [out2[s:cut + s] for s in _P2_SHIFTS]
    pmax = jnp.maximum(jnp.maximum(parts[0], parts[1]),
                       jnp.maximum(parts[2], parts[3]))
    pmax = jnp.maximum(pmax + b2c_ref[...], 0.0)                     # (cut, 16)

    # ---- compact the 36 valid pooled positions into a (TB, 576) FC row -----
    # flat column order is (qh, qw, co); fc1 weight columns were permuted
    # offline to match, so this equals PyTorch's x.view(B, -1) semantics.
    for smp in range(tb):
        for q in range(36):
            qh, qw = q // 6, q % 6
            src = smp * 225 + 30 * qh + 2 * qw
            flat_ref[smp:smp + 1, 16 * q:16 * q + 16] = pmax[src:src + 1, :]

    # ---- fc1 -> ReLU -> fc2 -> ReLU -> fc3 (bf16 operands, f32 accumulate) -
    h = jnp.dot(flat_ref[...].astype(jnp.bfloat16), w1f_ref[...],
                preferred_element_type=jnp.float32) + b1f_ref[...]
    h = jnp.maximum(h, 0.0).astype(jnp.bfloat16)
    h = jnp.dot(h, w2f_ref[...], preferred_element_type=jnp.float32) + b2f_ref[...]
    h = jnp.maximum(h, 0.0).astype(jnp.bfloat16)
    o_ref[...] = (jnp.dot(h, w3f_ref[...], preferred_element_type=jnp.float32)
                  + b3f_ref[...]).astype(o_ref.dtype)


# ------------------------------ wrapper --------------------------------------

def net_forward(pp, x_nchw):
    """Pallas forward of Net.  x_nchw: (B, 1, 32, 32) f32 -> (B, 10) f32."""
    B = x_nchw.shape[0]
    # Batch blocking: keep >= 2 grid steps whenever B >= 2 (v7x megacore);
    # fold 8 samples per step once the batch is large enough to amortize it.
    tb = 8 if B >= 16 else 1
    grid_n = -(-B // tb)
    bp = grid_n * tb
    if bp != B:
        pad = jnp.zeros((bp - B,) + x_nchw.shape[1:], x_nchw.dtype)
        x_nchw = jnp.concatenate([x_nchw, pad], axis=0)

    # conv1 im2col corner patches (bf16); rows ordered (corner, sample, ph*15+pw),
    # taps (kh*3+kw) on the last axis.  Pure layout work on the raw input.
    xb = x_nchw[:, 0].astype(jnp.bfloat16)                          # (bp, 32, 32)
    taps = [xb[:, i:i + 30, j:j + 30] for i in range(3) for j in range(3)]
    p9 = jnp.stack(taps, axis=-1)                                   # (bp, 30, 30, 9)
    corners = [p9[:, di:30:2, dj:30:2, :] for di in (0, 1) for dj in (0, 1)]
    pat = jnp.stack(corners, axis=1)                                # (bp, 4, 15, 15, 9)
    pat = pat.reshape(grid_n, tb, 4, 225, 9).transpose(0, 2, 1, 3, 4)
    pat = pat.reshape(grid_n, 4 * tb * 225, 9)

    weights = (pp["w1c"], pp["b1c"], pp["w2c"], pp["b2c"],
               pp["w1f"], pp["b1f"], pp["w2f"], pp["b2f"],
               pp["w3f"], pp["b3f"])
    r1 = 4 * tb * 225

    flops = 2 * bp * (4 * 225 * 9 * 6 + 225 * 54 * 16
                      + 576 * 120 + 120 * 84 + 84 * 10)
    bytes_accessed = (pat.size * pat.dtype.itemsize
                      + sum(int(w.size) * w.dtype.itemsize for w in weights)
                      + bp * 10 * 4)

    out = pl.pallas_call(
        _net_kernel,
        out_shape=jax.ShapeDtypeStruct((grid_n, tb, 10), jnp.float32),
        grid=(grid_n,),
        in_specs=[pl.BlockSpec((None, r1, 9), lambda g: (g, 0, 0))]
                 + [pl.BlockSpec(w.shape, lambda g: (0, 0)) for w in weights],
        out_specs=pl.BlockSpec((None, tb, 10), lambda g: (g, 0, 0)),
        scratch_shapes=[pltpu.VMEM((tb * 225, 54), jnp.float32),
                        pltpu.VMEM((tb, 576), jnp.float32)],
        compiler_params=pltpu.CompilerParams(
            dimension_semantics=("parallel",),
            vmem_limit_bytes=_VMEM_LIMIT),
        cost_estimate=pl.CostEstimate(flops=flops, transcendentals=0,
                                      bytes_accessed=bytes_accessed),
    )(pat, *weights)
    return out.reshape(bp, 10)[:B]


# --------------------------- params & reference ------------------------------

def init_params(key):
    """Deterministic PyTorch-style U(-1/sqrt(fan_in), 1/sqrt(fan_in)) init."""
    def uni(k, shape, fan_in):
        bound = 1.0 / float(fan_in) ** 0.5
        return jax.random.uniform(k, shape, jnp.float32, -bound, bound)

    ks = jax.random.split(key, 10)
    return {
        "conv1_w": uni(ks[0], (6, 1, 3, 3), 1 * 3 * 3),
        "conv1_b": uni(ks[1], (6,), 1 * 3 * 3),
        "conv2_w": uni(ks[2], (16, 6, 3, 3), 6 * 3 * 3),
        "conv2_b": uni(ks[3], (16,), 6 * 3 * 3),
        "fc1_w": uni(ks[4], (120, 576), 576),
        "fc1_b": uni(ks[5], (120,), 576),
        "fc2_w": uni(ks[6], (84, 120), 120),
        "fc2_b": uni(ks[7], (84,), 120),
        "fc3_w": uni(ks[8], (10, 84), 84),
        "fc3_b": uni(ks[9], (10,), 84),
    }


def prepare_params(p):
    """One-time weight layout prep: matmul forms, bf16 copies, fc1 column perm."""
    w1c = jnp.asarray(p["conv1_w"]).reshape(6, 9).T.astype(jnp.bfloat16)   # (9, 6)
    w2c = jnp.transpose(p["conv2_w"], (2, 3, 1, 0)).reshape(54, 16)        # (54, 16)
    w2c = w2c.astype(jnp.bfloat16)

    # fc1 columns reordered from PyTorch's (co, qh, qw) flatten to the kernel's
    # lane-dense (qh, qw, co) flatten.
    perm = np.empty(576, np.int32)
    for co in range(16):
        for qh in range(6):
            for qw in range(6):
                perm[(qh * 6 + qw) * 16 + co] = co * 36 + qh * 6 + qw
    w1f = p["fc1_w"][:, perm].T.astype(jnp.bfloat16)                       # (576, 120)

    return {
        "w1c": w1c, "b1c": p["conv1_b"].reshape(1, 6),
        "w2c": w2c, "b2c": p["conv2_b"].reshape(1, 16),
        "w1f": w1f, "b1f": p["fc1_b"].reshape(1, 120),
        "w2f": p["fc2_w"].T.astype(jnp.bfloat16), "b2f": p["fc2_b"].reshape(1, 84),
        "w3f": p["fc3_w"].T.astype(jnp.bfloat16), "b3f": p["fc3_b"].reshape(1, 10),
    }


def _ref_forward(p, x):
    """Pure-XLA f32 reference of the PyTorch module (independent of the kernel)."""
    dn = ("NCHW", "OIHW", "NCHW")
    y = jax.lax.conv_general_dilated(x, p["conv1_w"], (1, 1), "VALID",
                                     dimension_numbers=dn)
    y = jnp.maximum(y + p["conv1_b"][None, :, None, None], 0.0)
    y = jax.lax.reduce_window(y, -jnp.inf, jax.lax.max,
                              (1, 1, 2, 2), (1, 1, 2, 2), "VALID")
    y = jax.lax.conv_general_dilated(y, p["conv2_w"], (1, 1), "VALID",
                                     dimension_numbers=dn)
    y = jnp.maximum(y + p["conv2_b"][None, :, None, None], 0.0)
    y = jax.lax.reduce_window(y, -jnp.inf, jax.lax.max,
                              (1, 1, 2, 2), (1, 1, 2, 2), "VALID")
    y = y.reshape(y.shape[0], -1)
    y = jnp.maximum(y @ p["fc1_w"].T + p["fc1_b"], 0.0)
    y = jnp.maximum(y @ p["fc2_w"].T + p["fc2_b"], 0.0)
    return y @ p["fc3_w"].T + p["fc3_b"]


if __name__ == "__main__":
    key = jax.random.PRNGKey(0)
    pkey, xkey = jax.random.split(key)
    raw = init_params(pkey)
    pp = prepare_params(raw)                                  # one-time layout prep
    # Input matches the PyTorch module: NCHW, 1 channel, 32x32 (fc1 expects 16*6*6).
    x = jax.random.normal(xkey, (2, 1, 32, 32), jnp.float32)

    out = jax.block_until_ready(jax.jit(net_forward)(pp, x))
    assert out.shape == (2, 10) and out.dtype == jnp.float32

    ref = jax.block_until_ready(jax.jit(_ref_forward)(raw, x))
    # Tolerance accounts for bf16 MXU operands (f32 accumulation) per the
    # perf review; f32 reference stays exact.
    assert bool(jnp.allclose(out, ref, atol=2e-2, rtol=2e-2)), "mismatch vs XLA reference"

    print("KERNEL_OK")
</pallas_src>

<mosaic_0001>
module attributes {stable_mosaic.version = 11 : i64} {
  func.func @_net_kernel(%arg0: i32, %arg1: memref<1x900x9xbf16, #tpu.memory_space<vmem>>, %arg2: memref<9x6xbf16, #tpu.memory_space<vmem>>, %arg3: memref<1x6xf32, #tpu.memory_space<vmem>>, %arg4: memref<54x16xbf16, #tpu.memory_space<vmem>>, %arg5: memref<1x16xf32, #tpu.memory_space<vmem>>, %arg6: memref<576x120xbf16, #tpu.memory_space<vmem>>, %arg7: memref<1x120xf32, #tpu.memory_space<vmem>>, %arg8: memref<120x84xbf16, #tpu.memory_space<vmem>>, %arg9: memref<1x84xf32, #tpu.memory_space<vmem>>, %arg10: memref<84x10xbf16, #tpu.memory_space<vmem>>, %arg11: memref<1x10xf32, #tpu.memory_space<vmem>>, %arg12: memref<1x1x10xf32, #tpu.memory_space<vmem>>, %arg13: memref<225x54xf32, #tpu.memory_space<vmem>>, %arg14: memref<1x576xf32, #tpu.memory_space<vmem>>) attributes {dimension_semantics = [#tpu.dimension_semantics<parallel>], iteration_bounds = array<i64: 2>, scalar_prefetch = 0 : i64, scratch_operands = 2 : i64, tpu.core_type = #tpu.core_type<tc>, window_params = [{transform_indices = @transform_0, window_bounds = array<i64: 1, 900, 9>}, {pipeline_mode = #tpu.pipeline_mode<synchronous>, transform_indices = @transform_1, window_bounds = array<i64: 9, 6>}, {pipeline_mode = #tpu.pipeline_mode<synchronous>, transform_indices = @transform_2, window_bounds = array<i64: 1, 6>}, {pipeline_mode = #tpu.pipeline_mode<synchronous>, transform_indices = @transform_3, window_bounds = array<i64: 54, 16>}, {pipeline_mode = #tpu.pipeline_mode<synchronous>, transform_indices = @transform_4, window_bounds = array<i64: 1, 16>}, {pipeline_mode = #tpu.pipeline_mode<synchronous>, transform_indices = @transform_5, window_bounds = array<i64: 576, 120>}, {pipeline_mode = #tpu.pipeline_mode<synchronous>, transform_indices = @transform_6, window_bounds = array<i64: 1, 120>}, {pipeline_mode = #tpu.pipeline_mode<synchronous>, transform_indices = @transform_7, window_bounds = array<i64: 120, 84>}, {pipeline_mode = #tpu.pipeline_mode<synchronous>, transform_indices = @transform_8, window_bounds = array<i64: 1, 84>}, {pipeline_mode = #tpu.pipeline_mode<synchronous>, transform_indices = @transform_9, window_bounds = array<i64: 84, 10>}, {pipeline_mode = #tpu.pipeline_mode<synchronous>, transform_indices = @transform_10, window_bounds = array<i64: 1, 10>}, {transform_indices = @transform_11, window_bounds = array<i64: 1, 1, 10>}]} {
    %c0 = arith.constant 0 : index
    %c0_0 = arith.constant 0 : index
    %c0_1 = arith.constant 0 : index
    %0 = vector.load %arg1[%c0, %c0_0, %c0_1] : memref<1x900x9xbf16, #tpu.memory_space<vmem>>, vector<1x900x9xbf16>
    %1 = vector.shape_cast %0 : vector<1x900x9xbf16> to vector<900x9xbf16>
    %c0_2 = arith.constant 0 : index
    %c0_3 = arith.constant 0 : index
    %2 = vector.load %arg2[%c0_2, %c0_3] : memref<9x6xbf16, #tpu.memory_space<vmem>>, vector<9x6xbf16>
    %cst = arith.constant dense<0.000000e+00> : vector<900x6xf32>
    %3 = tpu.matmul %1, %2, %cst {dimension_numbers = #tpu.dot_dimension_numbers<[1], [0], [0], [1], [0, 0, 1, 1], [], []>} : vector<900x9xbf16>, vector<9x6xbf16>, vector<900x6xf32> -> vector<900x6xf32>
    %4 = vector.extract_strided_slice %3 {offsets = [0, 0], sizes = [225, 6], strides = [1, 1]} : vector<900x6xf32> to vector<225x6xf32>
    %5 = vector.extract_strided_slice %3 {offsets = [225, 0], sizes = [225, 6], strides = [1, 1]} : vector<900x6xf32> to vector<225x6xf32>
    %6 = vector.extract_strided_slice %3 {offsets = [450, 0], sizes = [225, 6], strides = [1, 1]} : vector<900x6xf32> to vector<225x6xf32>
    %7 = vector.extract_strided_slice %3 {offsets = [675, 0], sizes = [225, 6], strides = [1, 1]} : vector<900x6xf32> to vector<225x6xf32>
    %8 = arith.maximumf %4, %5 : vector<225x6xf32>
    %9 = arith.maximumf %6, %7 : vector<225x6xf32>
    %10 = arith.maximumf %8, %9 : vector<225x6xf32>
    %c0_4 = arith.constant 0 : index
    %c0_5 = arith.constant 0 : index
    %11 = vector.load %arg3[%c0_4, %c0_5] : memref<1x6xf32, #tpu.memory_space<vmem>>, vector<1x6xf32>
    %12 = vector.broadcast %11 : vector<1x6xf32> to vector<225x6xf32>
    %13 = arith.addf %10, %12 : vector<225x6xf32>
    %cst_6 = arith.constant 0.000000e+00 : f32
    %14 = vector.broadcast %cst_6 : f32 to vector<225x6xf32>
    %15 = arith.maximumf %13, %14 : vector<225x6xf32>
    %cst_7 = arith.constant 0.000000e+00 : f32
    %16 = vector.broadcast %cst_7 : f32 to vector<225x54xf32>
    %c0_8 = arith.constant 0 : index
    %c0_9 = arith.constant 0 : index
    %17 = vector.load %arg13[%c0_8, %c0_9] : memref<225x54xf32, #tpu.memory_space<vmem>>, vector<225x54xf32>
    tpu.vector_store %arg13[%c0_8, %c0_9], %16 {strides = array<i32>} : memref<225x54xf32, #tpu.memory_space<vmem>>, vector<225x54xf32>,
    %c0_10 = arith.constant 0 : index
    %c0_11 = arith.constant 0 : index
    %18 = vector.load %arg13[%c0_10, %c0_11] : memref<225x54xf32, #tpu.memory_space<vmem>>, vector<225x6xf32>
    tpu.vector_store %arg13[%c0_10, %c0_11], %15 {strides = array<i32>} : memref<225x54xf32, #tpu.memory_space<vmem>>, vector<225x6xf32>,
    %19 = vector.extract_strided_slice %15 {offsets = [1, 0], sizes = [224, 6], strides = [1, 1]} : vector<225x6xf32> to vector<224x6xf32>
    %c0_12 = arith.constant 0 : index
    %c6 = arith.constant 6 : index
    %20 = vector.load %arg13[%c0_12, %c6] : memref<225x54xf32, #tpu.memory_space<vmem>>, vector<224x6xf32>
    tpu.vector_store %arg13[%c0_12, %c6], %19 {strides = array<i32>} : memref<225x54xf32, #tpu.memory_space<vmem>>, vector<224x6xf32>,
    %21 = vector.extract_strided_slice %15 {offsets = [2, 0], sizes = [223, 6], strides = [1, 1]} : vector<225x6xf32> to vector<223x6xf32>
    %c0_13 = arith.constant 0 : index
    %c12 = arith.constant 12 : index
    %22 = vector.load %arg13[%c0_13, %c12] : memref<225x54xf32, #tpu.memory_space<vmem>>, vector<223x6xf32>
    tpu.vector_store %arg13[%c0_13, %c12], %21 {strides = array<i32>} : memref<225x54xf32, #tpu.memory_space<vmem>>, vector<223x6xf32>,
    %23 = vector.extract_strided_slice %15 {offsets = [15, 0], sizes = [210, 6], strides = [1, 1]} : vector<225x6xf32> to vector<210x6xf32>
    %c0_14 = arith.constant 0 : index
    %c18 = arith.constant 18 : index
    %24 = vector.load %arg13[%c0_14, %c18] : memref<225x54xf32, #tpu.memory_space<vmem>>, vector<210x6xf32>
    tpu.vector_store %arg13[%c0_14, %c18], %23 {strides = array<i32>} : memref<225x54xf32, #tpu.memory_space<vmem>>, vector<210x6xf32>,
    %25 = vector.extract_strided_slice %15 {offsets = [16, 0], sizes = [209, 6], strides = [1, 1]} : vector<225x6xf32> to vector<209x6xf32>
    %c0_15 = arith.constant 0 : index
    %c24 = arith.constant 24 : index
    %26 = vector.load %arg13[%c0_15, %c24] : memref<225x54xf32, #tpu.memory_space<vmem>>, vector<209x6xf32>
    tpu.vector_store %arg13[%c0_15, %c24], %25 {strides = array<i32>} : memref<225x54xf32, #tpu.memory_space<vmem>>, vector<209x6xf32>,
    %27 = vector.extract_strided_slice %15 {offsets = [17, 0], sizes = [208, 6], strides = [1, 1]} : vector<225x6xf32> to vector<208x6xf32>
    %c0_16 = arith.constant 0 : index
    %c30 = arith.constant 30 : index
    %28 = vector.load %arg13[%c0_16, %c30] : memref<225x54xf32, #tpu.memory_space<vmem>>, vector<208x6xf32>
    tpu.vector_store %arg13[%c0_16, %c30], %27 {strides = array<i32>} : memref<225x54xf32, #tpu.memory_space<vmem>>, vector<208x6xf32>,
    %29 = vector.extract_strided_slice %15 {offsets = [30, 0], sizes = [195, 6], strides = [1, 1]} : vector<225x6xf32> to vector<195x6xf32>
    %c0_17 = arith.constant 0 : index
    %c36 = arith.constant 36 : index
    %30 = vector.load %arg13[%c0_17, %c36] : memref<225x54xf32, #tpu.memory_space<vmem>>, vector<195x6xf32>
    tpu.vector_store %arg13[%c0_17, %c36], %29 {strides = array<i32>} : memref<225x54xf32, #tpu.memory_space<vmem>>, vector<195x6xf32>,
    %31 = vector.extract_strided_slice %15 {offsets = [31, 0], sizes = [194, 6], strides = [1, 1]} : vector<225x6xf32> to vector<194x6xf32>
    %c0_18 = arith.constant 0 : index
    %c42 = arith.constant 42 : index
    %32 = vector.load %arg13[%c0_18, %c42] : memref<225x54xf32, #tpu.memory_space<vmem>>, vector<194x6xf32>
    tpu.vector_store %arg13[%c0_18, %c42], %31 {strides = array<i32>} : memref<225x54xf32, #tpu.memory_space<vmem>>, vector<194x6xf32>,
    %33 = vector.extract_strided_slice %15 {offsets = [32, 0], sizes = [193, 6], strides = [1, 1]} : vector<225x6xf32> to vector<193x6xf32>
    %c0_19 = arith.constant 0 : index
    %c48 = arith.constant 48 : index
    %34 = vector.load %arg13[%c0_19, %c48] : memref<225x54xf32, #tpu.memory_space<vmem>>, vector<193x6xf32>
    tpu.vector_store %arg13[%c0_19, %c48], %33 {strides = array<i32>} : memref<225x54xf32, #tpu.memory_space<vmem>>, vector<193x6xf32>,
    %c0_20 = arith.constant 0 : index
    %c0_21 = arith.constant 0 : index
    %35 = vector.load %arg13[%c0_20, %c0_21] : memref<225x54xf32, #tpu.memory_space<vmem>>, vector<225x54xf32>
    %36 = arith.truncf %35 : vector<225x54xf32> to vector<225x54xbf16>
    %c0_22 = arith.constant 0 : index
    %c0_23 = arith.constant 0 : index
    %37 = vector.load %arg4[%c0_22, %c0_23] : memref<54x16xbf16, #tpu.memory_space<vmem>>, vector<54x16xbf16>
    %cst_24 = arith.constant dense<0.000000e+00> : vector<225x16xf32>
    %38 = tpu.matmul %36, %37, %cst_24 {dimension_numbers = #tpu.dot_dimension_numbers<[1], [0], [0], [1], [0, 0, 1, 1], [], []>} : vector<225x54xbf16>, vector<54x16xbf16>, vector<225x16xf32> -> vector<225x16xf32>
    %39 = vector.extract_strided_slice %38 {offsets = [0, 0], sizes = [209, 16], strides = [1, 1]} : vector<225x16xf32> to vector<209x16xf32>
    %40 = vector.extract_strided_slice %38 {offsets = [1, 0], sizes = [209, 16], strides = [1, 1]} : vector<225x16xf32> to vector<209x16xf32>
    %41 = vector.extract_strided_slice %38 {offsets = [15, 0], sizes = [209, 16], strides = [1, 1]} : vector<225x16xf32> to vector<209x16xf32>
    %42 = vector.extract_strided_slice %38 {offsets = [16, 0], sizes = [209, 16], strides = [1, 1]} : vector<225x16xf32> to vector<209x16xf32>
    %43 = arith.maximumf %39, %40 : vector<209x16xf32>
    %44 = arith.maximumf %41, %42 : vector<209x16xf32>
    %45 = arith.maximumf %43, %44 : vector<209x16xf32>
    %c0_25 = arith.constant 0 : index
    %c0_26 = arith.constant 0 : index
    %46 = vector.load %arg5[%c0_25, %c0_26] : memref<1x16xf32, #tpu.memory_space<vmem>>, vector<1x16xf32>
    %47 = vector.broadcast %46 : vector<1x16xf32> to vector<209x16xf32>
    %48 = arith.addf %45, %47 : vector<209x16xf32>
    %cst_27 = arith.constant 0.000000e+00 : f32
    %49 = vector.broadcast %cst_27 : f32 to vector<209x16xf32>
    %50 = arith.maximumf %48, %49 : vector<209x16xf32>
    %51 = vector.extract_strided_slice %50 {offsets = [0, 0], sizes = [1, 16], strides = [1, 1]} : vector<209x16xf32> to vector<1x16xf32>
    %c0_28 = arith.constant 0 : index
    %c0_29 = arith.constant 0 : index
    %52 = vector.load %arg14[%c0_28, %c0_29] : memref<1x576xf32, #tpu.memory_space<vmem>>, vector<1x16xf32>
    tpu.vector_store %arg14[%c0_28, %c0_29], %51 {strides = array<i32>} : memref<1x576xf32, #tpu.memory_space<vmem>>, vector<1x16xf32>,
    %53 = vector.extract_strided_slice %50 {offsets = [2, 0], sizes = [1, 16], strides = [1, 1]} : vector<209x16xf32> to vector<1x16xf32>
    %c0_30 = arith.constant 0 : index
    %c16 = arith.constant 16 : index
    %54 = vector.load %arg14[%c0_30, %c16] : memref<1x576xf32, #tpu.memory_space<vmem>>, vector<1x16xf32>
    tpu.vector_store %arg14[%c0_30, %c16], %53 {strides = array<i32>} : memref<1x576xf32, #tpu.memory_space<vmem>>, vector<1x16xf32>,
    %55 = vector.extract_strided_slice %50 {offsets = [4, 0], sizes = [1, 16], strides = [1, 1]} : vector<209x16xf32> to vector<1x16xf32>
    %c0_31 = arith.constant 0 : index
    %c32 = arith.constant 32 : index
    %56 = vector.load %arg14[%c0_31, %c32] : memref<1x576xf32, #tpu.memory_space<vmem>>, vector<1x16xf32>
    tpu.vector_store %arg14[%c0_31, %c32], %55 {strides = array<i32>} : memref<1x576xf32, #tpu.memory_space<vmem>>, vector<1x16xf32>,
    %57 = vector.extract_strided_slice %50 {offsets = [6, 0], sizes = [1, 16], strides = [1, 1]} : vector<209x16xf32> to vector<1x16xf32>
    %c0_32 = arith.constant 0 : index
    %c48_33 = arith.constant 48 : index
    %58 = vector.load %arg14[%c0_32, %c48_33] : memref<1x576xf32, #tpu.memory_space<vmem>>, vector<1x16xf32>
    tpu.vector_store %arg14[%c0_32, %c48_33], %57 {strides = array<i32>} : memref<1x576xf32, #tpu.memory_space<vmem>>, vector<1x16xf32>,
    %59 = vector.extract_strided_slice %50 {offsets = [8, 0], sizes = [1, 16], strides = [1, 1]} : vector<209x16xf32> to vector<1x16xf32>
    %c0_34 = arith.constant 0 : index
    %c64 = arith.constant 64 : index
    %60 = vector.load %arg14[%c0_34, %c64] : memref<1x576xf32, #tpu.memory_space<vmem>>, vector<1x16xf32>
    tpu.vector_store %arg14[%c0_34, %c64], %59 {strides = array<i32>} : memref<1x576xf32, #tpu.memory_space<vmem>>, vector<1x16xf32>,
    %61 = vector.extract_strided_slice %50 {offsets = [10, 0], sizes = [1, 16], strides = [1, 1]} : vector<209x16xf32> to vector<1x16xf32>
    %c0_35 = arith.constant 0 : index
    %c80 = arith.constant 80 : index
    %62 = vector.load %arg14[%c0_35, %c80] : memref<1x576xf32, #tpu.memory_space<vmem>>, vector<1x16xf32>
    tpu.vector_store %arg14[%c0_35, %c80], %61 {strides = array<i32>} : memref<1x576xf32, #tpu.memory_space<vmem>>, vector<1x16xf32>,
    %63 = vector.extract_strided_slice %50 {offsets = [30, 0], sizes = [1, 16], strides = [1, 1]} : vector<209x16xf32> to vector<1x16xf32>
    %c0_36 = arith.constant 0 : index
    %c96 = arith.constant 96 : index
    %64 = vector.load %arg14[%c0_36, %c96] : memref<1x576xf32, #tpu.memory_space<vmem>>, vector<1x16xf32>
    tpu.vector_store %arg14[%c0_36, %c96], %63 {strides = array<i32>} : memref<1x576xf32, #tpu.memory_space<vmem>>, vector<1x16xf32>,
    %65 = vector.extract_strided_slice %50 {offsets = [32, 0], sizes = [1, 16], strides = [1, 1]} : vector<209x16xf32> to vector<1x16xf32>
    %c0_37 = arith.constant 0 : index
    %c112 = arith.constant 112 : index
    %66 = vector.load %arg14[%c0_37, %c112] : memref<1x576xf32, #tpu.memory_space<vmem>>, vector<1x16xf32>
    tpu.vector_store %arg14[%c0_37, %c112], %65 {strides = array<i32>} : memref<1x576xf32, #tpu.memory_space<vmem>>, vector<1x16xf32>,
    %67 = vector.extract_strided_slice %50 {offsets = [34, 0], sizes = [1, 16], strides = [1, 1]} : vector<209x16xf32> to vector<1x16xf32>
    %c0_38 = arith.constant 0 : index
    %c128 = arith.constant 128 : index
    %68 = vector.load %arg14[%c0_38, %c128] : memref<1x576xf32, #tpu.memory_space<vmem>>, vector<1x16xf32>
    tpu.vector_store %arg14[%c0_38, %c128], %67 {strides = array<i32>} : memref<1x576xf32, #tpu.memory_space<vmem>>, vector<1x16xf32>,
    %69 = vector.extract_strided_slice %50 {offsets = [36, 0], sizes = [1, 16], strides = [1, 1]} : vector<209x16xf32> to vector<1x16xf32>
    %c0_39 = arith.constant 0 : index
    %c144 = arith.constant 144 : index
    %70 = vector.load %arg14[%c0_39, %c144] : memref<1x576xf32, #tpu.memory_space<vmem>>, vector<1x16xf32>
    tpu.vector_store %arg14[%c0_39, %c144], %69 {strides = array<i32>} : memref<1x576xf32, #tpu.memory_space<vmem>>, vector<1x16xf32>,
    %71 = vector.extract_strided_slice %50 {offsets = [38, 0], sizes = [1, 16], strides = [1, 1]} : vector<209x16xf32> to vector<1x16xf32>
    %c0_40 = arith.constant 0 : index
    %c160 = arith.constant 160 : index
    %72 = vector.load %arg14[%c0_40, %c160] : memref<1x576xf32, #tpu.memory_space<vmem>>, vector<1x16xf32>
    tpu.vector_store %arg14[%c0_40, %c160], %71 {strides = array<i32>} : memref<1x576xf32, #tpu.memory_space<vmem>>, vector<1x16xf32>,
    %73 = vector.extract_strided_slice %50 {offsets = [40, 0], sizes = [1, 16], strides = [1, 1]} : vector<209x16xf32> to vector<1x16xf32>
    %c0_41 = arith.constant 0 : index
    %c176 = arith.constant 176 : index
    %74 = vector.load %arg14[%c0_41, %c176] : memref<1x576xf32, #tpu.memory_space<vmem>>, vector<1x16xf32>
    tpu.vector_store %arg14[%c0_41, %c176], %73 {strides = array<i32>} : memref<1x576xf32, #tpu.memory_space<vmem>>, vector<1x16xf32>,
    %75 = vector.extract_strided_slice %50 {offsets = [60, 0], sizes = [1, 16], strides = [1, 1]} : vector<209x16xf32> to vector<1x16xf32>
    %c0_42 = arith.constant 0 : index
    %c192 = arith.constant 192 : index
    %76 = vector.load %arg14[%c0_42, %c192] : memref<1x576xf32, #tpu.memory_space<vmem>>, vector<1x16xf32>
    tpu.vector_store %arg14[%c0_42, %c192], %75 {strides = array<i32>} : memref<1x576xf32, #tpu.memory_space<vmem>>, vector<1x16xf32>,
    %77 = vector.extract_strided_slice %50 {offsets = [62, 0], sizes = [1, 16], strides = [1, 1]} : vector<209x16xf32> to vector<1x16xf32>
    %c0_43 = arith.constant 0 : index
    %c208 = arith.constant 208 : index
    %78 = vector.load %arg14[%c0_43, %c208] : memref<1x576xf32, #tpu.memory_space<vmem>>, vector<1x16xf32>
    tpu.vector_store %arg14[%c0_43, %c208], %77 {strides = array<i32>} : memref<1x576xf32, #tpu.memory_space<vmem>>, vector<1x16xf32>,
    %79 = vector.extract_strided_slice %50 {offsets = [64, 0], sizes = [1, 16], strides = [1, 1]} : vector<209x16xf32> to vector<1x16xf32>
    %c0_44 = arith.constant 0 : index
    %c224 = arith.constant 224 : index
    %80 = vector.load %arg14[%c0_44, %c224] : memref<1x576xf32, #tpu.memory_space<vmem>>, vector<1x16xf32>
    tpu.vector_store %arg14[%c0_44, %c224], %79 {strides = array<i32>} : memref<1x576xf32, #tpu.memory_space<vmem>>, vector<1x16xf32>,
    %81 = vector.extract_strided_slice %50 {offsets = [66, 0], sizes = [1, 16], strides = [1, 1]} : vector<209x16xf32> to vector<1x16xf32>
    %c0_45 = arith.constant 0 : index
    %c240 = arith.constant 240 : index
    %82 = vector.load %arg14[%c0_45, %c240] : memref<1x576xf32, #tpu.memory_space<vmem>>, vector<1x16xf32>
    tpu.vector_store %arg14[%c0_45, %c240], %81 {strides = array<i32>} : memref<1x576xf32, #tpu.memory_space<vmem>>, vector<1x16xf32>,
    %83 = vector.extract_strided_slice %50 {offsets = [68, 0], sizes = [1, 16], strides = [1, 1]} : vector<209x16xf32> to vector<1x16xf32>
    %c0_46 = arith.constant 0 : index
    %c256 = arith.constant 256 : index
    %84 = vector.load %arg14[%c0_46, %c256] : memref<1x576xf32, #tpu.memory_space<vmem>>, vector<1x16xf32>
    tpu.vector_store %arg14[%c0_46, %c256], %83 {strides = array<i32>} : memref<1x576xf32, #tpu.memory_space<vmem>>, vector<1x16xf32>,
    %85 = vector.extract_strided_slice %50 {offsets = [70, 0], sizes = [1, 16], strides = [1, 1]} : vector<209x16xf32> to vector<1x16xf32>
    %c0_47 = arith.constant 0 : index
    %c272 = arith.constant 272 : index
    %86 = vector.load %arg14[%c0_47, %c272] : memref<1x576xf32, #tpu.memory_space<vmem>>, vector<1x16xf32>
    tpu.vector_store %arg14[%c0_47, %c272], %85 {strides = array<i32>} : memref<1x576xf32, #tpu.memory_space<vmem>>, vector<1x16xf32>,
    %87 = vector.extract_strided_slice %50 {offsets = [90, 0], sizes = [1, 16], strides = [1, 1]} : vector<209x16xf32> to vector<1x16xf32>
    %c0_48 = arith.constant 0 : index
    %c288 = arith.constant 288 : index
    %88 = vector.load %arg14[%c0_48, %c288] : memref<1x576xf32, #tpu.memory_space<vmem>>, vector<1x16xf32>
    tpu.vector_store %arg14[%c0_48, %c288], %87 {strides = array<i32>} : memref<1x576xf32, #tpu.memory_space<vmem>>, vector<1x16xf32>,
    %89 = vector.extract_strided_slice %50 {offsets = [92, 0], sizes = [1, 16], strides = [1, 1]} : vector<209x16xf32> to vector<1x16xf32>
    %c0_49 = arith.constant 0 : index
    %c304 = arith.constant 304 : index
    %90 = vector.load %arg14[%c0_49, %c304] : memref<1x576xf32, #tpu.memory_space<vmem>>, vector<1x16xf32>
    tpu.vector_store %arg14[%c0_49, %c304], %89 {strides = array<i32>} : memref<1x576xf32, #tpu.memory_space<vmem>>, vector<1x16xf32>,
    %91 = vector.extract_strided_slice %50 {offsets = [94, 0], sizes = [1, 16], strides = [1, 1]} : vector<209x16xf32> to vector<1x16xf32>
    %c0_50 = arith.constant 0 : index
    %c320 = arith.constant 320 : index
    %92 = vector.load %arg14[%c0_50, %c320] : memref<1x576xf32, #tpu.memory_space<vmem>>, vector<1x16xf32>
    tpu.vector_store %arg14[%c0_50, %c320], %91 {strides = array<i32>} : memref<1x576xf32, #tpu.memory_space<vmem>>, vector<1x16xf32>,
    %93 = vector.extract_strided_slice %50 {offsets = [96, 0], sizes = [1, 16], strides = [1, 1]} : vector<209x16xf32> to vector<1x16xf32>
    %c0_51 = arith.constant 0 : index
    %c336 = arith.constant 336 : index
    %94 = vector.load %arg14[%c0_51, %c336] : memref<1x576xf32, #tpu.memory_space<vmem>>, vector<1x16xf32>
    tpu.vector_store %arg14[%c0_51, %c336], %93 {strides = array<i32>} : memref<1x576xf32, #tpu.memory_space<vmem>>, vector<1x16xf32>,
    %95 = vector.extract_strided_slice %50 {offsets = [98, 0], sizes = [1, 16], strides = [1, 1]} : vector<209x16xf32> to vector<1x16xf32>
    %c0_52 = arith.constant 0 : index
    %c352 = arith.constant 352 : index
    %96 = vector.load %arg14[%c0_52, %c352] : memref<1x576xf32, #tpu.memory_space<vmem>>, vector<1x16xf32>
    tpu.vector_store %arg14[%c0_52, %c352], %95 {strides = array<i32>} : memref<1x576xf32, #tpu.memory_space<vmem>>, vector<1x16xf32>,
    %97 = vector.extract_strided_slice %50 {offsets = [100, 0], sizes = [1, 16], strides = [1, 1]} : vector<209x16xf32> to vector<1x16xf32>
    %c0_53 = arith.constant 0 : index
    %c368 = arith.constant 368 : index
    %98 = vector.load %arg14[%c0_53, %c368] : memref<1x576xf32, #tpu.memory_space<vmem>>, vector<1x16xf32>
    tpu.vector_store %arg14[%c0_53, %c368], %97 {strides = array<i32>} : memref<1x576xf32, #tpu.memory_space<vmem>>, vector<1x16xf32>,
    %99 = vector.extract_strided_slice %50 {offsets = [120, 0], sizes = [1, 16], strides = [1, 1]} : vector<209x16xf32> to vector<1x16xf32>
    %c0_54 = arith.constant 0 : index
    %c384 = arith.constant 384 : index
    %100 = vector.load %arg14[%c0_54, %c384] : memref<1x576xf32, #tpu.memory_space<vmem>>, vector<1x16xf32>
    tpu.vector_store %arg14[%c0_54, %c384], %99 {strides = array<i32>} : memref<1x576xf32, #tpu.memory_space<vmem>>, vector<1x16xf32>,
    %101 = vector.extract_strided_slice %50 {offsets = [122, 0], sizes = [1, 16], strides = [1, 1]} : vector<209x16xf32> to vector<1x16xf32>
    %c0_55 = arith.constant 0 : index
    %c400 = arith.constant 400 : index
    %102 = vector.load %arg14[%c0_55, %c400] : memref<1x576xf32, #tpu.memory_space<vmem>>, vector<1x16xf32>
    tpu.vector_store %arg14[%c0_55, %c400], %101 {strides = array<i32>} : memref<1x576xf32, #tpu.memory_space<vmem>>, vector<1x16xf32>,
    %103 = vector.extract_strided_slice %50 {offsets = [124, 0], sizes = [1, 16], strides = [1, 1]} : vector<209x16xf32> to vector<1x16xf32>
    %c0_56 = arith.constant 0 : index
    %c416 = arith.constant 416 : index
    %104 = vector.load %arg14[%c0_56, %c416] : memref<1x576xf32, #tpu.memory_space<vmem>>, vector<1x16xf32>
    tpu.vector_store %arg14[%c0_56, %c416], %103 {strides = array<i32>} : memref<1x576xf32, #tpu.memory_space<vmem>>, vector<1x16xf32>,
    %105 = vector.extract_strided_slice %50 {offsets = [126, 0], sizes = [1, 16], strides = [1, 1]} : vector<209x16xf32> to vector<1x16xf32>
    %c0_57 = arith.constant 0 : index
    %c432 = arith.constant 432 : index
    %106 = vector.load %arg14[%c0_57, %c432] : memref<1x576xf32, #tpu.memory_space<vmem>>, vector<1x16xf32>
    tpu.vector_store %arg14[%c0_57, %c432], %105 {strides = array<i32>} : memref<1x576xf32, #tpu.memory_space<vmem>>, vector<1x16xf32>,
    %107 = vector.extract_strided_slice %50 {offsets = [128, 0], sizes = [1, 16], strides = [1, 1]} : vector<209x16xf32> to vector<1x16xf32>
    %c0_58 = arith.constant 0 : index
    %c448 = arith.constant 448 : index
    %108 = vector.load %arg14[%c0_58, %c448] : memref<1x576xf32, #tpu.memory_space<vmem>>, vector<1x16xf32>
    tpu.vector_store %arg14[%c0_58, %c448], %107 {strides = array<i32>} : memref<1x576xf32, #tpu.memory_space<vmem>>, vector<1x16xf32>,
    %109 = vector.extract_strided_slice %50 {offsets = [130, 0], sizes = [1, 16], strides = [1, 1]} : vector<209x16xf32> to vector<1x16xf32>
    %c0_59 = arith.constant 0 : index
    %c464 = arith.constant 464 : index
    %110 = vector.load %arg14[%c0_59, %c464] : memref<1x576xf32, #tpu.memory_space<vmem>>, vector<1x16xf32>
    tpu.vector_store %arg14[%c0_59, %c464], %109 {strides = array<i32>} : memref<1x576xf32, #tpu.memory_space<vmem>>, vector<1x16xf32>,
    %111 = vector.extract_strided_slice %50 {offsets = [150, 0], sizes = [1, 16], strides = [1, 1]} : vector<209x16xf32> to vector<1x16xf32>
    %c0_60 = arith.constant 0 : index
    %c480 = arith.constant 480 : index
    %112 = vector.load %arg14[%c0_60, %c480] : memref<1x576xf32, #tpu.memory_space<vmem>>, vector<1x16xf32>
    tpu.vector_store %arg14[%c0_60, %c480], %111 {strides = array<i32>} : memref<1x576xf32, #tpu.memory_space<vmem>>, vector<1x16xf32>,
    %113 = vector.extract_strided_slice %50 {offsets = [152, 0], sizes = [1, 16], strides = [1, 1]} : vector<209x16xf32> to vector<1x16xf32>
    %c0_61 = arith.constant 0 : index
    %c496 = arith.constant 496 : index
    %114 = vector.load %arg14[%c0_61, %c496] : memref<1x576xf32, #tpu.memory_space<vmem>>, vector<1x16xf32>
    tpu.vector_store %arg14[%c0_61, %c496], %113 {strides = array<i32>} : memref<1x576xf32, #tpu.memory_space<vmem>>, vector<1x16xf32>,
    %115 = vector.extract_strided_slice %50 {offsets = [154, 0], sizes = [1, 16], strides = [1, 1]} : vector<209x16xf32> to vector<1x16xf32>
    %c0_62 = arith.constant 0 : index
    %c512 = arith.constant 512 : index
    %116 = vector.load %arg14[%c0_62, %c512] : memref<1x576xf32, #tpu.memory_space<vmem>>, vector<1x16xf32>
    tpu.vector_store %arg14[%c0_62, %c512], %115 {strides = array<i32>} : memref<1x576xf32, #tpu.memory_space<vmem>>, vector<1x16xf32>,
    %117 = vector.extract_strided_slice %50 {offsets = [156, 0], sizes = [1, 16], strides = [1, 1]} : vector<209x16xf32> to vector<1x16xf32>
    %c0_63 = arith.constant 0 : index
    %c528 = arith.constant 528 : index
    %118 = vector.load %arg14[%c0_63, %c528] : memref<1x576xf32, #tpu.memory_space<vmem>>, vector<1x16xf32>
    tpu.vector_store %arg14[%c0_63, %c528], %117 {strides = array<i32>} : memref<1x576xf32, #tpu.memory_space<vmem>>, vector<1x16xf32>,
    %119 = vector.extract_strided_slice %50 {offsets = [158, 0], sizes = [1, 16], strides = [1, 1]} : vector<209x16xf32> to vector<1x16xf32>
    %c0_64 = arith.constant 0 : index
    %c544 = arith.constant 544 : index
    %120 = vector.load %arg14[%c0_64, %c544] : memref<1x576xf32, #tpu.memory_space<vmem>>, vector<1x16xf32>
    tpu.vector_store %arg14[%c0_64, %c544], %119 {strides = array<i32>} : memref<1x576xf32, #tpu.memory_space<vmem>>, vector<1x16xf32>,
    %121 = vector.extract_strided_slice %50 {offsets = [160, 0], sizes = [1, 16], strides = [1, 1]} : vector<209x16xf32> to vector<1x16xf32>
    %c0_65 = arith.constant 0 : index
    %c560 = arith.constant 560 : index
    %122 = vector.load %arg14[%c0_65, %c560] : memref<1x576xf32, #tpu.memory_space<vmem>>, vector<1x16xf32>
    tpu.vector_store %arg14[%c0_65, %c560], %121 {strides = array<i32>} : memref<1x576xf32, #tpu.memory_space<vmem>>, vector<1x16xf32>,
    %c0_66 = arith.constant 0 : index
    %c0_67 = arith.constant 0 : index
    %123 = vector.load %arg14[%c0_66, %c0_67] : memref<1x576xf32, #tpu.memory_space<vmem>>, vector<1x576xf32>
    %124 = arith.truncf %123 : vector<1x576xf32> to vector<1x576xbf16>
    %c0_68 = arith.constant 0 : index
    %c0_69 = arith.constant 0 : index
    %125 = vector.load %arg6[%c0_68, %c0_69] : memref<576x120xbf16, #tpu.memory_space<vmem>>, vector<576x120xbf16>
    %cst_70 = arith.constant dense<0.000000e+00> : vector<1x120xf32>
    %126 = tpu.matmul %124, %125, %cst_70 {dimension_numbers = #tpu.dot_dimension_numbers<[1], [0], [0], [1], [0, 0, 1, 1], [], []>} : vector<1x576xbf16>, vector<576x120xbf16>, vector<1x120xf32> -> vector<1x120xf32>
    %c0_71 = arith.constant 0 : index
    %c0_72 = arith.constant 0 : index
    %127 = vector.load %arg7[%c0_71, %c0_72] : memref<1x120xf32, #tpu.memory_space<vmem>>, vector<1x120xf32>
    %128 = arith.addf %126, %127 : vector<1x120xf32>
    %cst_73 = arith.constant 0.000000e+00 : f32
    %129 = vector.broadcast %cst_73 : f32 to vector<1x120xf32>
    %130 = arith.maximumf %128, %129 : vector<1x120xf32>
    %131 = arith.truncf %130 : vector<1x120xf32> to vector<1x120xbf16>
    %c0_74 = arith.constant 0 : index
    %c0_75 = arith.constant 0 : index
    %132 = vector.load %arg8[%c0_74, %c0_75] : memref<120x84xbf16, #tpu.memory_space<vmem>>, vector<120x84xbf16>
    %cst_76 = arith.constant dense<0.000000e+00> : vector<1x84xf32>
    %133 = tpu.matmul %131, %132, %cst_76 {dimension_numbers = #tpu.dot_dimension_numbers<[1], [0], [0], [1], [0, 0, 1, 1], [], []>} : vector<1x120xbf16>, vector<120x84xbf16>, vector<1x84xf32> -> vector<1x84xf32>
    %c0_77 = arith.constant 0 : index
    %c0_78 = arith.constant 0 : index
    %134 = vector.load %arg9[%c0_77, %c0_78] : memref<1x84xf32, #tpu.memory_space<vmem>>, vector<1x84xf32>
    %135 = arith.addf %133, %134 : vector<1x84xf32>
    %cst_79 = arith.constant 0.000000e+00 : f32
    %136 = vector.broadcast %cst_79 : f32 to vector<1x84xf32>
    %137 = arith.maximumf %135, %136 : vector<1x84xf32>
    %138 = arith.truncf %137 : vector<1x84xf32> to vector<1x84xbf16>
    %c0_80 = arith.constant 0 : index
    %c0_81 = arith.constant 0 : index
    %139 = vector.load %arg10[%c0_80, %c0_81] : memref<84x10xbf16, #tpu.memory_space<vmem>>, vector<84x10xbf16>
    %cst_82 = arith.constant dense<0.000000e+00> : vector<1x10xf32>
    %140 = tpu.matmul %138, %139, %cst_82 {dimension_numbers = #tpu.dot_dimension_numbers<[1], [0], [0], [1], [0, 0, 1, 1], [], []>} : vector<1x84xbf16>, vector<84x10xbf16>, vector<1x10xf32> -> vector<1x10xf32>
    %c0_83 = arith.constant 0 : index
    %c0_84 = arith.constant 0 : index
    %141 = vector.load %arg11[%c0_83, %c0_84] : memref<1x10xf32, #tpu.memory_space<vmem>>, vector<1x10xf32>
    %142 = arith.addf %140, %141 : vector<1x10xf32>
    %c0_85 = arith.constant 0 : index
    %c0_86 = arith.constant 0 : index
    %c0_87 = arith.constant 0 : index
    %143 = vector.load %arg12[%c0_85, %c0_86, %c0_87] : memref<1x1x10xf32, #tpu.memory_space<vmem>>, vector<1x1x10xf32>
    %144 = vector.shape_cast %143 : vector<1x1x10xf32> to vector<1x10xf32>
    %145 = vector.shape_cast %142 : vector<1x10xf32> to vector<1x1x10xf32>
    tpu.vector_store %arg12[%c0_85, %c0_86, %c0_87], %145 {strides = array<i32>} : memref<1x1x10xf32, #tpu.memory_space<vmem>>, vector<1x1x10xf32>,
    return
  }
  func.func @transform_0(%arg0: i32) -> (i32, i32, i32) {
    %c0_i32 = arith.constant 0 : i32
    %c0_i32_0 = arith.constant 0 : i32
    %c0_i32_1 = arith.constant 0 : i32
    return %arg0, %c0_i32, %c0_i32_0 : i32, i32, i32
  }
  func.func @transform_1(%arg0: i32) -> (i32, i32) {
    %c0_i32 = arith.constant 0 : i32
    %c0_i32_0 = arith.constant 0 : i32
    %c0_i32_1 = arith.constant 0 : i32
    return %c0_i32, %c0_i32_0 : i32, i32
  }
  func.func @transform_2(%arg0: i32) -> (i32, i32) {
    %c0_i32 = arith.constant 0 : i32
    %c0_i32_0 = arith.constant 0 : i32
    %c0_i32_1 = arith.constant 0 : i32
    return %c0_i32, %c0_i32_0 : i32, i32
  }
  func.func @transform_3(%arg0: i32) -> (i32, i32) {
    %c0_i32 = arith.constant 0 : i32
    %c0_i32_0 = arith.constant 0 : i32
    %c0_i32_1 = arith.constant 0 : i32
    return %c0_i32, %c0_i32_0 : i32, i32
  }
  func.func @transform_4(%arg0: i32) -> (i32, i32) {
    %c0_i32 = arith.constant 0 : i32
    %c0_i32_0 = arith.constant 0 : i32
    %c0_i32_1 = arith.constant 0 : i32
    return %c0_i32, %c0_i32_0 : i32, i32
  }
  func.func @transform_5(%arg0: i32) -> (i32, i32) {
    %c0_i32 = arith.constant 0 : i32
    %c0_i32_0 = arith.constant 0 : i32
    %c0_i32_1 = arith.constant 0 : i32
    return %c0_i32, %c0_i32_0 : i32, i32
  }
  func.func @transform_6(%arg0: i32) -> (i32, i32) {
    %c0_i32 = arith.constant 0 : i32
    %c0_i32_0 = arith.constant 0 : i32
    %c0_i32_1 = arith.constant 0 : i32
    return %c0_i32, %c0_i32_0 : i32, i32
  }
  func.func @transform_7(%arg0: i32) -> (i32, i32) {
    %c0_i32 = arith.constant 0 : i32
    %c0_i32_0 = arith.constant 0 : i32
    %c0_i32_1 = arith.constant 0 : i32
    return %c0_i32, %c0_i32_0 : i32, i32
  }
  func.func @transform_8(%arg0: i32) -> (i32, i32) {
    %c0_i32 = arith.constant 0 : i32
    %c0_i32_0 = arith.constant 0 : i32
    %c0_i32_1 = arith.constant 0 : i32
    return %c0_i32, %c0_i32_0 : i32, i32
  }
  func.func @transform_9(%arg0: i32) -> (i32, i32) {
    %c0_i32 = arith.constant 0 : i32
    %c0_i32_0 = arith.constant 0 : i32
    %c0_i32_1 = arith.constant 0 : i32
    return %c0_i32, %c0_i32_0 : i32, i32
  }
  func.func @transform_10(%arg0: i32) -> (i32, i32) {
    %c0_i32 = arith.constant 0 : i32
    %c0_i32_0 = arith.constant 0 : i32
    %c0_i32_1 = arith.constant 0 : i32
    return %c0_i32, %c0_i32_0 : i32, i32
  }
  func.func @transform_11(%arg0: i32) -> (i32, i32, i32) {
    %c0_i32 = arith.constant 0 : i32
    %c0_i32_0 = arith.constant 0 : i32
    %c0_i32_1 = arith.constant 0 : i32
    return %arg0, %c0_i32, %c0_i32_0 : i32, i32, i32
  }
}

</mosaic_0001>

<llo_original>
// kernel: net_forward.1
$region0: #{net_forward.1}
  #allocation0 [shape = 'u32[]', space=smem, size = 0x4, offset = 0x4, fixed_abs, tag = 'smem constant byte address 0x4 - core index']
  #allocation1 [shape = 'u32[144,128]{1,0:T(1,128)}', space=vmem, size = 0x12000, scoped, tag = 'internal scratch']
  #allocation2 [shape = 'f32[225,54]{1,0:T(8,128)}', space=vmem, size = 0x1d000, scoped, tag = 'scratch operand']
  #allocation3 [shape = 'f32[1,576]{1,0:T(1,128)}', space=vmem, size = 0xa00, scoped, tag = 'scratch operand']
  %s0 = inlined_call_operand.vmem [shape: bf16[2,900,9], index: 0, kind: input, shape index: {}]
  %s1 = inlined_call_operand.vmem [shape: bf16[9,6], index: 1, kind: input, shape index: {}]
  %s2 = inlined_call_operand.vmem [shape: f32[1,6], index: 2, kind: input, shape index: {}]
  %s3 = inlined_call_operand.vmem [shape: bf16[54,16], index: 3, kind: input, shape index: {}]
  %s4 = inlined_call_operand.vmem [shape: f32[1,16], index: 4, kind: input, shape index: {}]
  %s5 = inlined_call_operand.vmem [shape: bf16[576,120], index: 5, kind: input, shape index: {}]
  %s6 = inlined_call_operand.vmem [shape: f32[1,120], index: 6, kind: input, shape index: {}]
  %s7 = inlined_call_operand.vmem [shape: bf16[120,84], index: 7, kind: input, shape index: {}]
  %s8 = inlined_call_operand.vmem [shape: f32[1,84], index: 8, kind: input, shape index: {}]
  %s9 = inlined_call_operand.vmem [shape: bf16[84,10], index: 9, kind: input, shape index: {}]
  %s10 = inlined_call_operand.vmem [shape: f32[1,10], index: 10, kind: input, shape index: {}]
  %s11 = inlined_call_operand.hbm [shape: f32[2,1,10], index: 11, kind: output, shape index: {}]
  %s12 = sld [smem:[#allocation0]]
  $region77: #{net_forward.1} parent=0
    _
  %s14 = ssub.s32 1, %s12
  %s15 = scalar_select 0, %s14, %s12
  $region1: #{net_forward.1} parent=0
    #allocation4 [shape = 'u8[1024]{0}', space=vmem, size = 0x400, scoped, tag = 'output window, operand 0']
    #allocation5 [shape = 's32[2]{0}', space=sflag, size = 0x8, scoped, tag = 'scoped memory for net_forward.1']
    %16 = vsyncpa [#allocation5], 0
    %s17 = scalar_lea.sflag [#allocation5], 1
    %18 = vsyncpa %s17, 0
    loop: start=0, step=1, limit=4
    $region2: #{net_forward.1} parent=1 // loop_pre_header
      _
    $region3: #{net_forward.1} parent=1 // loop_header
      %s20 = sphi 0, %s24
      %p21 = scmp.ge.s32.totalorder %s20, 4
      %s30 = sphi 0, %s32
      %s33 = sphi 0, %s30
      %s34 = sphi 0, %s33
      %s50 = sphi 0, %s34
      %s54 = sphi 0, %s54
      %s56 = sphi 0, %s54
      %s57 = sphi 0, %s56
      %s71 = sphi 0, %s57
      %s75 = sphi 0, %s75
      %s77 = sphi 0, %s75
      %s78 = sphi 0, %s77
      %s92 = sphi 0, %s78
      %s96 = sphi 0, %s96
      %s98 = sphi 0, %s96
      %s99 = sphi 0, %s98
      %s113 = sphi 0, %s99
      %s117 = sphi 0, %s117
      %s119 = sphi 0, %s117
      %s120 = sphi 0, %s119
      %s134 = sphi 0, %s120
      %s138 = sphi 0, %s138
      %s140 = sphi 0, %s138
      %s141 = sphi 0, %s140
      %s155 = sphi 0, %s141
      %s159 = sphi 0, %s159
      %s161 = sphi 0, %s159
      %s162 = sphi 0, %s161
      %s176 = sphi 0, %s162
      %s180 = sphi 0, %s180
      %s182 = sphi 0, %s180
      %s183 = sphi 0, %s182
      %s197 = sphi 0, %s183
      %s201 = sphi 0, %s201
      %s203 = sphi 0, %s201
      %s204 = sphi 0, %s203
      %s218 = sphi 0, %s204
      %s222 = sphi 0, %s222
      %s224 = sphi 0, %s222
      %s225 = sphi 0, %s224
      %s239 = sphi 0, %s225
      %s243 = sphi 0, %s243
      %s245 = sphi 0, %s243
      %s246 = sphi 0, %s245
      %s260 = sphi 0, %s246
      %s266 = sphi 0, %s268
      %s269 = sphi 0, %s266
      %s270 = sphi 0, %s269
      %s286 = sphi 0, %s270
    $region4: #{net_forward.1} parent=1 // loop_header_branch
      %23 = sbr.rel (%p21) target = $region8
    $region5: #{net_forward.1} parent=1 // loop_body
      %s25 = ssub.s32 %s20, 1
      %s26 = ssub.s32 %s20, 2
      %s27 = sadd.s32 %s20, 1
      %s28 = ssub.s32 %s20, %s27
      %p29 = scmp.eq.s32.totalorder %s28, 0
      %s31 = sadd.s32 %s30, 1
      %s32 = scalar_select %p29, %s30, %s31
      %p35 = pneg %p29
      %p36 = scmp.eq.s32.totalorder %s20, 1
      %p37 = por %p35, %p36
      %p38 = scmp.ne.s32.totalorder %s30, %s33
      %p39 = scmp.eq.s32.totalorder %s20, 0
      %p40 = por %p38, %p39
      %p41 = scmp.ne.s32.totalorder %s30, %s33
      %p42 = scmp.eq.s32.totalorder %s25, 1
      %p43 = por %p41, %p42
      %p44 = scmp.ne.s32.totalorder %s33, %s34
      %p45 = scmp.eq.s32.totalorder %s25, 0
      %p46 = por %p44, %p45
      %p47 = scmp.ne.s32.totalorder %s33, %s34
      %p48 = scmp.eq.s32.totalorder %s26, 1
      %p49 = por %p47, %p48
      %p51 = scmp.ne.s32.totalorder %s34, %s50
      %p52 = scmp.eq.s32.totalorder %s26, 0
      %p53 = por %p51, %p52
      %s55 = sadd.s32 %s54, 1
      %p58 = scmp.eq.s32.totalorder %s20, 1
      %p59 = scmp.ne.s32.totalorder %s54, %s56
      %p60 = scmp.eq.s32.totalorder %s20, 0
      %p61 = por %p59, %p60
      %p62 = scmp.ne.s32.totalorder %s54, %s56
      %p63 = scmp.eq.s32.totalorder %s25, 1
      %p64 = por %p62, %p63
      %p65 = scmp.ne.s32.totalorder %s56, %s57
      %p66 = scmp.eq.s32.totalorder %s25, 0
      %p67 = por %p65, %p66
      %p68 = scmp.ne.s32.totalorder %s56, %s57
      %p69 = scmp.eq.s32.totalorder %s26, 1
      %p70 = por %p68, %p69
      %p72 = scmp.ne.s32.totalorder %s57, %s71
      %p73 = scmp.eq.s32.totalorder %s26, 0
      %p74 = por %p72, %p73
      %s76 = sadd.s32 %s75, 1
      %p79 = scmp.eq.s32.totalorder %s20, 1
      %p80 = scmp.ne.s32.totalorder %s75, %s77
      %p81 = scmp.eq.s32.totalorder %s20, 0
      %p82 = por %p80, %p81
      %p83 = scmp.ne.s32.totalorder %s75, %s77
      %p84 = scmp.eq.s32.totalorder %s25, 1
      %p85 = por %p83, %p84
      %p86 = scmp.ne.s32.totalorder %s77, %s78
      %p87 = scmp.eq.s32.totalorder %s25, 0
      %p88 = por %p86, %p87
      %p89 = scmp.ne.s32.totalorder %s77, %s78
      %p90 = scmp.eq.s32.totalorder %s26, 1
      %p91 = por %p89, %p90
      %p93 = scmp.ne.s32.totalorder %s78, %s92
      %p94 = scmp.eq.s32.totalorder %s26, 0
      %p95 = por %p93, %p94
      %s97 = sadd.s32 %s96, 1
      %p100 = scmp.eq.s32.totalorder %s20, 1
      %p101 = scmp.ne.s32.totalorder %s96, %s98
      %p102 = scmp.eq.s32.totalorder %s20, 0
      %p103 = por %p101, %p102
      %p104 = scmp.ne.s32.totalorder %s96, %s98
      %p105 = scmp.eq.s32.totalorder %s25, 1
      %p106 = por %p104, %p105
      %p107 = scmp.ne.s32.totalorder %s98, %s99
      %p108 = scmp.eq.s32.totalorder %s25, 0
      %p109 = por %p107, %p108
      %p110 = scmp.ne.s32.totalorder %s98, %s99
      %p111 = scmp.eq.s32.totalorder %s26, 1
      %p112 = por %p110, %p111
      %p114 = scmp.ne.s32.totalorder %s99, %s113
      %p115 = scmp.eq.s32.totalorder %s26, 0
      %p116 = por %p114, %p115
      %s118 = sadd.s32 %s117, 1
      %p121 = scmp.eq.s32.totalorder %s20, 1
      %p122 = scmp.ne.s32.totalorder %s117, %s119
      %p123 = scmp.eq.s32.totalorder %s20, 0
      %p124 = por %p122, %p123
      %p125 = scmp.ne.s32.totalorder %s117, %s119
      %p126 = scmp.eq.s32.totalorder %s25, 1
      %p127 = por %p125, %p126
      %p128 = scmp.ne.s32.totalorder %s119, %s120
      %p129 = scmp.eq.s32.totalorder %s25, 0
      %p130 = por %p128, %p129
      %p131 = scmp.ne.s32.totalorder %s119, %s120
      %p132 = scmp.eq.s32.totalorder %s26, 1
      %p133 = por %p131, %p132
      %p135 = scmp.ne.s32.totalorder %s120, %s134
      %p136 = scmp.eq.s32.totalorder %s26, 0
      %p137 = por %p135, %p136
      %s139 = sadd.s32 %s138, 1
      %p142 = scmp.eq.s32.totalorder %s20, 1
      %p143 = scmp.ne.s32.totalorder %s138, %s140
      %p144 = scmp.eq.s32.totalorder %s20, 0
      %p145 = por %p143, %p144
      %p146 = scmp.ne.s32.totalorder %s138, %s140
      %p147 = scmp.eq.s32.totalorder %s25, 1
      %p148 = por %p146, %p147
      %p149 = scmp.ne.s32.totalorder %s140, %s141
      %p150 = scmp.eq.s32.totalorder %s25, 0
      %p151 = por %p149, %p150
      %p152 = scmp.ne.s32.totalorder %s140, %s141
      %p153 = scmp.eq.s32.totalorder %s26, 1
      %p154 = por %p152, %p153
      %p156 = scmp.ne.s32.totalorder %s141, %s155
      %p157 = scmp.eq.s32.totalorder %s26, 0
      %p158 = por %p156, %p157
      %s160 = sadd.s32 %s159, 1
      %p163 = scmp.eq.s32.totalorder %s20, 1
      %p164 = scmp.ne.s32.totalorder %s159, %s161
      %p165 = scmp.eq.s32.totalorder %s20, 0
      %p166 = por %p164, %p165
      %p167 = scmp.ne.s32.totalorder %s159, %s161
      %p168 = scmp.eq.s32.totalorder %s25, 1
      %p169 = por %p167, %p168
      %p170 = scmp.ne.s32.totalorder %s161, %s162
      %p171 = scmp.eq.s32.totalorder %s25, 0
      %p172 = por %p170, %p171
      %p173 = scmp.ne.s32.totalorder %s161, %s162
      %p174 = scmp.eq.s32.totalorder %s26, 1
      %p175 = por %p173, %p174
      %p177 = scmp.ne.s32.totalorder %s162, %s176
      %p178 = scmp.eq.s32.totalorder %s26, 0
      %p179 = por %p177, %p178
      %s181 = sadd.s32 %s180, 1
      %p184 = scmp.eq.s32.totalorder %s20, 1
      %p185 = scmp.ne.s32.totalorder %s180, %s182
      %p186 = scmp.eq.s32.totalorder %s20, 0
      %p187 = por %p185, %p186
      %p188 = scmp.ne.s32.totalorder %s180, %s182
      %p189 = scmp.eq.s32.totalorder %s25, 1
      %p190 = por %p188, %p189
      %p191 = scmp.ne.s32.totalorder %s182, %s183
      %p192 = scmp.eq.s32.totalorder %s25, 0
      %p193 = por %p191, %p192
      %p194 = scmp.ne.s32.totalorder %s182, %s183
      %p195 = scmp.eq.s32.totalorder %s26, 1
      %p196 = por %p194, %p195
      %p198 = scmp.ne.s32.totalorder %s183, %s197
      %p199 = scmp.eq.s32.totalorder %s26, 0
      %p200 = por %p198, %p199
      %s202 = sadd.s32 %s201, 1
      %p205 = scmp.eq.s32.totalorder %s20, 1
      %p206 = scmp.ne.s32.totalorder %s201, %s203
      %p207 = scmp.eq.s32.totalorder %s20, 0
      %p208 = por %p206, %p207
      %p209 = scmp.ne.s32.totalorder %s201, %s203
      %p210 = scmp.eq.s32.totalorder %s25, 1
      %p211 = por %p209, %p210
      %p212 = scmp.ne.s32.totalorder %s203, %s204
      %p213 = scmp.eq.s32.totalorder %s25, 0
      %p214 = por %p212, %p213
      %p215 = scmp.ne.s32.totalorder %s203, %s204
      %p216 = scmp.eq.s32.totalorder %s26, 1
      %p217 = por %p215, %p216
      %p219 = scmp.ne.s32.totalorder %s204, %s218
      %p220 = scmp.eq.s32.totalorder %s26, 0
      %p221 = por %p219, %p220
      %s223 = sadd.s32 %s222, 1
      %p226 = scmp.eq.s32.totalorder %s20, 1
      %p227 = scmp.ne.s32.totalorder %s222, %s224
      %p228 = scmp.eq.s32.totalorder %s20, 0
      %p229 = por %p227, %p228
      %p230 = scmp.ne.s32.totalorder %s222, %s224
      %p231 = scmp.eq.s32.totalorder %s25, 1
      %p232 = por %p230, %p231
      %p233 = scmp.ne.s32.totalorder %s224, %s225
      %p234 = scmp.eq.s32.totalorder %s25, 0
      %p235 = por %p233, %p234
      %p236 = scmp.ne.s32.totalorder %s224, %s225
      %p237 = scmp.eq.s32.totalorder %s26, 1
      %p238 = por %p236, %p237
      %p240 = scmp.ne.s32.totalorder %s225, %s239
      %p241 = scmp.eq.s32.totalorder %s26, 0
      %p242 = por %p240, %p241
      %s244 = sadd.s32 %s243, 1
      %p247 = scmp.eq.s32.totalorder %s20, 1
      %p248 = scmp.ne.s32.totalorder %s243, %s245
      %p249 = scmp.eq.s32.totalorder %s20, 0
      %p250 = por %p248, %p249
      %p251 = scmp.ne.s32.totalorder %s243, %s245
      %p252 = scmp.eq.s32.totalorder %s25, 1
      %p253 = por %p251, %p252
      %p254 = scmp.ne.s32.totalorder %s245, %s246
      %p255 = scmp.eq.s32.totalorder %s25, 0
      %p256 = por %p254, %p255
      %p257 = scmp.ne.s32.totalorder %s245, %s246
      %p258 = scmp.eq.s32.totalorder %s26, 1
      %p259 = por %p257, %p258
      %p261 = scmp.ne.s32.totalorder %s246, %s260
      %p262 = scmp.eq.s32.totalorder %s26, 0
      %p263 = por %p261, %p262
      %s264 = ssub.s32 %s20, %s27
      %p265 = scmp.eq.s32.totalorder %s264, 0
      %s267 = sadd.s32 %s266, 1
      %s268 = scalar_select %p265, %s266, %s267
      %p271 = pneg %p265
      %p272 = scmp.eq.s32.totalorder %s20, 1
      %p273 = por %p271, %p272
      %p274 = scmp.ne.s32.totalorder %s266, %s269
      %p275 = scmp.eq.s32.totalorder %s20, 0
      %p276 = por %p274, %p275
      %p277 = scmp.ne.s32.totalorder %s266, %s269
      %p278 = scmp.eq.s32.totalorder %s25, 1
      %p279 = por %p277, %p278
      %p280 = scmp.ne.s32.totalorder %s269, %s270
      %p281 = scmp.eq.s32.totalorder %s25, 0
      %p282 = por %p280, %p281
      %p283 = scmp.ne.s32.totalorder %s269, %s270
      %p284 = scmp.eq.s32.totalorder %s26, 1
      %p285 = por %p283, %p284
      %p287 = scmp.ne.s32.totalorder %s270, %s286
      %p288 = scmp.eq.s32.totalorder %s26, 0
      %p289 = por %p287, %p288
      %p290 = scmp.le.s32.totalorder 1, %s20
      %p291 = scmp.lt.s32.totalorder %s20, 3
      %p292 = pnand %p290, %p291
      %p293 = pneg %p292
      // Predicated region
      $region9: #{net_forward.1} parent=5 // pred_check
        _
      $region10: #{net_forward.1} parent=5 // pred_check_branch
        %295 = sbr.rel (%p292) target = $region12
      $region11: #{net_forward.1} parent=5 // pred_region
        %s296 = ssub.s32 %s20, 1
        // Predicated region
        $region13: #{net_forward.1} parent=11 // pred_check
          %p297 = pneg %p67
        $region14: #{net_forward.1} parent=11 // pred_check_branch
          %299 = sbr.rel (%p297) target = $region16
        $region15: #{net_forward.1} parent=11 // pred_region
          _
        $region16: #{net_forward.1} parent=11 // pred_fallthru
          _
        // Predicated region
        $region17: #{net_forward.1} parent=11 // pred_check
          %p300 = pneg %p88
        $region18: #{net_forward.1} parent=11 // pred_check_branch
          %302 = sbr.rel (%p300) target = $region20
        $region19: #{net_forward.1} parent=11 // pred_region
          _
        $region20: #{net_forward.1} parent=11 // pred_fallthru
          _
        // Predicated region
        $region21: #{net_forward.1} parent=11 // pred_check
          %p303 = pneg %p109
        $region22: #{net_forward.1} parent=11 // pred_check_branch
          %305 = sbr.rel (%p303) target = $region24
        $region23: #{net_forward.1} parent=11 // pred_region
          _
        $region24: #{net_forward.1} parent=11 // pred_fallthru
          _
        // Predicated region
        $region25: #{net_forward.1} parent=11 // pred_check
          %p306 = pneg %p130
        $region26: #{net_forward.1} parent=11 // pred_check_branch
          %308 = sbr.rel (%p306) target = $region28
        $region27: #{net_forward.1} parent=11 // pred_region
          _
        $region28: #{net_forward.1} parent=11 // pred_fallthru
          _
        // Predicated region
        $region29: #{net_forward.1} parent=11 // pred_check
          %p309 = pneg %p151
        $region30: #{net_forward.1} parent=11 // pred_check_branch
          %311 = sbr.rel (%p309) target = $region32
        $region31: #{net_forward.1} parent=11 // pred_region
          _
        $region32: #{net_forward.1} parent=11 // pred_fallthru
          _
        // Predicated region
        $region33: #{net_forward.1} parent=11 // pred_check
          %p312 = pneg %p172
        $region34: #{net_forward.1} parent=11 // pred_check_branch
          %314 = sbr.rel (%p312) target = $region36
        $region35: #{net_forward.1} parent=11 // pred_region
          _
        $region36: #{net_forward.1} parent=11 // pred_fallthru
          _
        // Predicated region
        $region37: #{net_forward.1} parent=11 // pred_check
          %p315 = pneg %p193
        $region38: #{net_forward.1} parent=11 // pred_check_branch
          %317 = sbr.rel (%p315) target = $region40
        $region39: #{net_forward.1} parent=11 // pred_region
          _
        $region40: #{net_forward.1} parent=11 // pred_fallthru
          _
        // Predicated region
        $region41: #{net_forward.1} parent=11 // pred_check
          %p318 = pneg %p214
        $region42: #{net_forward.1} parent=11 // pred_check_branch
          %320 = sbr.rel (%p318) target = $region44
        $region43: #{net_forward.1} parent=11 // pred_region
          _
        $region44: #{net_forward.1} parent=11 // pred_fallthru
          _
        // Predicated region
        $region45: #{net_forward.1} parent=11 // pred_check
          %p321 = pneg %p235
        $region46: #{net_forward.1} parent=11 // pred_check_branch
          %323 = sbr.rel (%p321) target = $region48
        $region47: #{net_forward.1} parent=11 // pred_region
          _
        $region48: #{net_forward.1} parent=11 // pred_fallthru
          _
        // Predicated region
        $region49: #{net_forward.1} parent=11 // pred_check
          %p324 = pneg %p256
        $region50: #{net_forward.1} parent=11 // pred_check_branch
          %326 = sbr.rel (%p324) target = $region52
        $region51: #{net_forward.1} parent=11 // pred_region
          _
        $region52: #{net_forward.1} parent=11 // pred_fallthru
          _
      $region12: #{net_forward.1} parent=5 // pred_fallthru
        _
      %p327 = scmp.lt.s32.totalorder %s20, 2
      // Predicated region
      $region53: #{net_forward.1} parent=5 // pred_check
        %p328 = pneg %p327
      $region54: #{net_forward.1} parent=5 // pred_check_branch
        %330 = sbr.rel (%p328) target = $region56
      $region55: #{net_forward.1} parent=5 // pred_region
        // Predicated region
        $region57: #{net_forward.1} parent=55 // pred_check
          %p331 = pneg %p40
        $region58: #{net_forward.1} parent=55 // pred_check_branch
          %333 = sbr.rel (%p331) target = $region60
        $region59: #{net_forward.1} parent=55 // pred_region
          %p334 = scmp.lt.s32.totalorder %s20, 1
          %s335 = scalar_select %p334, %s20, 1
          %s336 = smul.addr %s335, 113
          %s337 = smul.addr %s336, 4
          %s338 = scalar_lea.vmem %s0, %s337
        $region60: #{net_forward.1} parent=55 // pred_fallthru
          _
      $region56: #{net_forward.1} parent=5 // pred_fallthru
        _
      %p339 = scmp.le.s32.totalorder 1, %s20
      %p340 = scmp.lt.s32.totalorder %s20, 3
      %p341 = pnand %p339, %p340
      %p342 = pneg %p341
      // Predicated region
      $region61: #{net_forward.1} parent=5 // pred_check
        _
      $region62: #{net_forward.1} parent=5 // pred_check_branch
        %344 = sbr.rel (%p341) target = $region64
      $region63: #{net_forward.1} parent=5 // pred_region
        %s345 = ssub.s32 %s20, 1
        %p346 = scmp.lt.s32.totalorder %s25, 1
        %s347 = scalar_select %p346, %s25, 1
        %s348 = smul.addr %s347, 113
        %s349 = smul.addr %s348, 4
        %s350 = scalar_lea.vmem %s0, %s349
        %p351 = pneg %p46
        %p352 = pneg %p43
        %p353 = pneg %p67
        %p354 = pneg %p64
        %p355 = pneg %p88
        %p356 = pneg %p85
        %p357 = pneg %p109
        %p358 = pneg %p106
        %p359 = pneg %p130
        %p360 = pneg %p127
        %p361 = pneg %p151
        %p362 = pneg %p148
        %p363 = pneg %p172
        %p364 = pneg %p169
        %p365 = pneg %p193
        %p366 = pneg %p190
        %p367 = pneg %p214
        %p368 = pneg %p211
        %p369 = pneg %p235
        %p370 = pneg %p232
        %p371 = pneg %p256
        %p372 = pneg %p253
        %p373 = pneg %p282
        %p374 = pneg %p279
        %s375 = sand.u32 %s269, 1
        %s376 = scalar_lea.sflag [#allocation5], %s375
        %s377 = sand.u32 %s269, 1
        %s378 = scalar_lea.vmem [#allocation4], %s377
        %p379 = scmp.lt.s32.totalorder %s25, 1
        %s380 = scalar_select %p379, %s25, 1
        %s381 = smul.addr %s380, 113
        %s382 = smul.addr %s381, 4
        %s383 = scalar_lea.vmem %s0, %s382
        %v385 = vld [vmem:[%s383] sm:$0xf]
        %v386 = vld [vmem:[%s383 + $0x4] sm:$0xf]
        %v387 = vld [vmem:[%s383 + $0x8] sm:$0xf]
        %v388 = vld [vmem:[%s383 + $0xc] sm:$0xf]
        %v389 = vld [vmem:[%s383 + $0x10] sm:$0xf]
        %v390 = vld [vmem:[%s383 + $0x14] sm:$0xf]
        %v391 = vld [vmem:[%s383 + $0x18] sm:$0xf]
        %v392 = vld [vmem:[%s383 + $0x1c] sm:$0xf]
        %v393 = vld [vmem:[%s383 + $0x20] sm:$0xf]
        %v394 = vld [vmem:[%s383 + $0x24] sm:$0xf]
        %v395 = vld [vmem:[%s383 + $0x28] sm:$0xf]
        %v396 = vld [vmem:[%s383 + $0x2c] sm:$0xf]
        %v397 = vld [vmem:[%s383 + $0x30] sm:$0xf]
        %v398 = vld [vmem:[%s383 + $0x34] sm:$0xf]
        %v399 = vld [vmem:[%s383 + $0x38] sm:$0xf]
        %v400 = vld [vmem:[%s383 + $0x3c] sm:$0xf]
        %v401 = vld [vmem:[%s383 + $0x40] sm:$0xf]
        %v402 = vld [vmem:[%s383 + $0x44] sm:$0xf]
        %v403 = vld [vmem:[%s383 + $0x48] sm:$0xf]
        %v404 = vld [vmem:[%s383 + $0x4c] sm:$0xf]
        %v405 = vld [vmem:[%s383 + $0x50] sm:$0xf]
        %v406 = vld [vmem:[%s383 + $0x54] sm:$0xf]
        %v407 = vld [vmem:[%s383 + $0x58] sm:$0xf]
        %v408 = vld [vmem:[%s383 + $0x5c] sm:$0xf]
        %v409 = vld [vmem:[%s383 + $0x60] sm:$0xf]
        %v410 = vld [vmem:[%s383 + $0x64] sm:$0xf]
        %v411 = vld [vmem:[%s383 + $0x68] sm:$0xf]
        %v412 = vld [vmem:[%s383 + $0x6c] sm:$0xf]
        %v413 = vld [vmem:[%s383 + $0x70] sm:$0xf]
        %v414 = vld [vmem:[%s383 + $0x74] sm:$0xf]
        %v415 = vld [vmem:[%s383 + $0x78] sm:$0xf]
        %v416 = vld [vmem:[%s383 + $0x7c] sm:$0xf]
        %v417 = vld [vmem:[%s383 + $0x80] sm:$0xf]
        %v418 = vld [vmem:[%s383 + $0x84] sm:$0xf]
        %v419 = vld [vmem:[%s383 + $0x88] sm:$0xf]
        %v420 = vld [vmem:[%s383 + $0x8c] sm:$0xf]
        %v421 = vld [vmem:[%s383 + $0x90] sm:$0xf]
        %v422 = vld [vmem:[%s383 + $0x94] sm:$0xf]
        %v423 = vld [vmem:[%s383 + $0x98] sm:$0xf]
        %v424 = vld [vmem:[%s383 + $0x9c] sm:$0xf]
        %v425 = vld [vmem:[%s383 + $0xa0] sm:$0xf]
        %v426 = vld [vmem:[%s383 + $0xa4] sm:$0xf]
        %v427 = vld [vmem:[%s383 + $0xa8] sm:$0xf]
        %v428 = vld [vmem:[%s383 + $0xac] sm:$0xf]
        %v429 = vld [vmem:[%s383 + $0xb0] sm:$0xf]
        %v430 = vld [vmem:[%s383 + $0xb4] sm:$0xf]
        %v431 = vld [vmem:[%s383 + $0xb8] sm:$0xf]
        %v432 = vld [vmem:[%s383 + $0xbc] sm:$0xf]
        %v433 = vld [vmem:[%s383 + $0xc0] sm:$0xf]
        %v434 = vld [vmem:[%s383 + $0xc4] sm:$0xf]
        %v435 = vld [vmem:[%s383 + $0xc8] sm:$0xf]
        %v436 = vld [vmem:[%s383 + $0xcc] sm:$0xf]
        %v437 = vld [vmem:[%s383 + $0xd0] sm:$0xf]
        %v438 = vld [vmem:[%s383 + $0xd4] sm:$0xf]
        %v439 = vld [vmem:[%s383 + $0xd8] sm:$0xf]
        %v440 = vld [vmem:[%s383 + $0xdc] sm:$0xf]
        %v441 = vld [vmem:[%s383 + $0xe0] sm:$0xf]
        %v442 = vld [vmem:[%s383 + $0xe4] sm:$0xf]
        %v443 = vld [vmem:[%s383 + $0xe8] sm:$0xf]
        %v444 = vld [vmem:[%s383 + $0xec] sm:$0xf]
        %v445 = vld [vmem:[%s383 + $0xf0] sm:$0xf]
        %v446 = vld [vmem:[%s383 + $0xf4] sm:$0xf]
        %v447 = vld [vmem:[%s383 + $0xf8] sm:$0xf]
        %v448 = vld [vmem:[%s383 + $0xfc] sm:$0xf]
        %v449 = vld [vmem:[%s383 + $0x100] sm:$0xf]
        %v450 = vld [vmem:[%s383 + $0x104] sm:$0xf]
        %v451 = vld [vmem:[%s383 + $0x108] sm:$0xf]
        %v452 = vld [vmem:[%s383 + $0x10c] sm:$0xf]
        %v453 = vld [vmem:[%s383 + $0x110] sm:$0xf]
        %v454 = vld [vmem:[%s383 + $0x114] sm:$0xf]
        %v455 = vld [vmem:[%s383 + $0x118] sm:$0xf]
        %v456 = vld [vmem:[%s383 + $0x11c] sm:$0xf]
        %v457 = vld [vmem:[%s383 + $0x120] sm:$0xf]
        %v458 = vld [vmem:[%s383 + $0x124] sm:$0xf]
        %v459 = vld [vmem:[%s383 + $0x128] sm:$0xf]
        %v460 = vld [vmem:[%s383 + $0x12c] sm:$0xf]
        %v461 = vld [vmem:[%s383 + $0x130] sm:$0xf]
        %v462 = vld [vmem:[%s383 + $0x134] sm:$0xf]
        %v463 = vld [vmem:[%s383 + $0x138] sm:$0xf]
        %v464 = vld [vmem:[%s383 + $0x13c] sm:$0xf]
        %v465 = vld [vmem:[%s383 + $0x140] sm:$0xf]
        %v466 = vld [vmem:[%s383 + $0x144] sm:$0xf]
        %v467 = vld [vmem:[%s383 + $0x148] sm:$0xf]
        %v468 = vld [vmem:[%s383 + $0x14c] sm:$0xf]
        %v469 = vld [vmem:[%s383 + $0x150] sm:$0xf]
        %v470 = vld [vmem:[%s383 + $0x154] sm:$0xf]
        %v471 = vld [vmem:[%s383 + $0x158] sm:$0xf]
        %v472 = vld [vmem:[%s383 + $0x15c] sm:$0xf]
        %v473 = vld [vmem:[%s383 + $0x160] sm:$0xf]
        %v474 = vld [vmem:[%s383 + $0x164] sm:$0xf]
        %v475 = vld [vmem:[%s383 + $0x168] sm:$0xf]
        %v476 = vld [vmem:[%s383 + $0x16c] sm:$0xf]
        %v477 = vld [vmem:[%s383 + $0x170] sm:$0xf]
        %v478 = vld [vmem:[%s383 + $0x174] sm:$0xf]
        %v479 = vld [vmem:[%s383 + $0x178] sm:$0xf]
        %v480 = vld [vmem:[%s383 + $0x17c] sm:$0xf]
        %v481 = vld [vmem:[%s383 + $0x180] sm:$0xf]
        %v482 = vld [vmem:[%s383 + $0x184] sm:$0xf]
        %v483 = vld [vmem:[%s383 + $0x188] sm:$0xf]
        %v484 = vld [vmem:[%s383 + $0x18c] sm:$0xf]
        %v485 = vld [vmem:[%s383 + $0x190] sm:$0xf]
        %v486 = vld [vmem:[%s383 + $0x194] sm:$0xf]
        %v487 = vld [vmem:[%s383 + $0x198] sm:$0xf]
        %v488 = vld [vmem:[%s383 + $0x19c] sm:$0xf]
        %v489 = vld [vmem:[%s383 + $0x1a0] sm:$0xf]
        %v490 = vld [vmem:[%s383 + $0x1a4] sm:$0xf]
        %v491 = vld [vmem:[%s383 + $0x1a8] sm:$0xf]
        %v492 = vld [vmem:[%s383 + $0x1ac] sm:$0xf]
        %v493 = vld [vmem:[%s383 + $0x1b0] sm:$0xf]
        %v494 = vld [vmem:[%s383 + $0x1b4] sm:$0xf]
        %v495 = vld [vmem:[%s383 + $0x1b8] sm:$0xf]
        %v496 = vld [vmem:[%s383 + $0x1bc] sm:$0xf]
        %v497 = vld [vmem:[%s383 + $0x1c0] sm:$0x3]
        %v498 = vld [vmem:[%s1] sm:$0xf]
        %v499 = vld [vmem:[%s1 + $0x4] sm:$0x1]
        %v613 = vunpack.c.l.b16 %v385
        %v614 = vunpack.c.l.b16 %v386
        %v615 = vunpack.c.l.b16 %v387
        %v616 = vunpack.c.l.b16 %v388
        %v617 = vunpack.c.l.b16 %v389
        %v618 = vunpack.c.l.b16 %v390
        %v619 = vunpack.c.l.b16 %v391
        %v620 = vunpack.c.l.b16 %v392
        %v621 = vunpack.c.l.b16 %v393
        %v622 = vunpack.c.l.b16 %v394
        %v623 = vunpack.c.l.b16 %v395
        %v624 = vunpack.c.l.b16 %v396
        %v625 = vunpack.c.l.b16 %v397
        %v626 = vunpack.c.l.b16 %v398
        %v627 = vunpack.c.l.b16 %v399
        %v628 = vunpack.c.l.b16 %v400
        %v629 = vunpack.c.l.b16 %v401
        %v630 = vunpack.c.l.b16 %v402
        %v631 = vunpack.c.l.b16 %v403
        %v632 = vunpack.c.l.b16 %v404
        %v633 = vunpack.c.l.b16 %v405
        %v634 = vunpack.c.l.b16 %v406
        %v635 = vunpack.c.l.b16 %v407
        %v636 = vunpack.c.l.b16 %v408
        %v637 = vunpack.c.l.b16 %v409
        %v638 = vunpack.c.l.b16 %v410
        %v639 = vunpack.c.l.b16 %v411
        %v640 = vunpack.c.l.b16 %v412
        %v641 = vunpack.c.l.b16 %v413
        %v642 = vunpack.c.l.b16 %v414
        %v643 = vunpack.c.l.b16 %v415
        %v644 = vunpack.c.l.b16 %v416
        %v645 = vunpack.c.l.b16 %v417
        %v646 = vunpack.c.l.b16 %v418
        %v647 = vunpack.c.l.b16 %v419
        %v648 = vunpack.c.l.b16 %v420
        %v649 = vunpack.c.l.b16 %v421
        %v650 = vunpack.c.l.b16 %v422
        %v651 = vunpack.c.l.b16 %v423
        %v652 = vunpack.c.l.b16 %v424
        %v653 = vunpack.c.l.b16 %v425
        %v654 = vunpack.c.l.b16 %v426
        %v655 = vunpack.c.l.b16 %v427
        %v656 = vunpack.c.l.b16 %v428
        %v657 = vunpack.c.l.b16 %v429
        %v658 = vunpack.c.l.b16 %v430
        %v659 = vunpack.c.l.b16 %v431
        %v660 = vunpack.c.l.b16 %v432
        %v661 = vunpack.c.l.b16 %v433
        %v662 = vunpack.c.l.b16 %v434
        %v663 = vunpack.c.l.b16 %v435
        %v664 = vunpack.c.l.b16 %v436
        %v665 = vunpack.c.l.b16 %v437
        %v666 = vunpack.c.l.b16 %v438
        %v667 = vunpack.c.l.b16 %v439
        %v668 = vunpack.c.l.b16 %v440
        %v669 = vunpack.c.l.b16 %v441
        %v670 = vunpack.c.l.b16 %v442
        %v671 = vunpack.c.l.b16 %v443
        %v672 = vunpack.c.l.b16 %v444
        %v673 = vunpack.c.l.b16 %v445
        %v674 = vunpack.c.l.b16 %v446
        %v675 = vunpack.c.l.b16 %v447
        %v676 = vunpack.c.l.b16 %v448
        %v677 = vunpack.c.l.b16 %v449
        %v678 = vunpack.c.l.b16 %v450
        %v679 = vunpack.c.l.b16 %v451
        %v680 = vunpack.c.l.b16 %v452
        %v681 = vunpack.c.l.b16 %v453
        %v682 = vunpack.c.l.b16 %v454
        %v683 = vunpack.c.l.b16 %v455
        %v684 = vunpack.c.l.b16 %v456
        %v685 = vunpack.c.l.b16 %v457
        %v686 = vunpack.c.l.b16 %v458
        %v687 = vunpack.c.l.b16 %v459
        %v688 = vunpack.c.l.b16 %v460
        %v689 = vunpack.c.l.b16 %v461
        %v690 = vunpack.c.l.b16 %v462
        %v691 = vunpack.c.l.b16 %v463
        %v692 = vunpack.c.l.b16 %v464
        %v693 = vunpack.c.l.b16 %v465
        %v694 = vunpack.c.l.b16 %v466
        %v695 = vunpack.c.l.b16 %v467
        %v696 = vunpack.c.l.b16 %v468
        %v697 = vunpack.c.l.b16 %v469
        %v698 = vunpack.c.l.b16 %v470
        %v699 = vunpack.c.l.b16 %v471
        %v700 = vunpack.c.l.b16 %v472
        %v701 = vunpack.c.l.b16 %v473
        %v702 = vunpack.c.l.b16 %v474
        %v703 = vunpack.c.l.b16 %v475
        %v704 = vunpack.c.l.b16 %v476
        %v705 = vunpack.c.l.b16 %v477
        %v706 = vunpack.c.l.b16 %v478
        %v707 = vunpack.c.l.b16 %v479
        %v708 = vunpack.c.l.b16 %v480
        %v709 = vunpack.c.l.b16 %v481
        %v710 = vunpack.c.l.b16 %v482
        %v711 = vunpack.c.l.b16 %v483
        %v712 = vunpack.c.l.b16 %v484
        %v713 = vunpack.c.l.b16 %v485
        %v714 = vunpack.c.l.b16 %v486
        %v715 = vunpack.c.l.b16 %v487
        %v716 = vunpack.c.l.b16 %v488
        %v717 = vunpack.c.l.b16 %v489
        %v718 = vunpack.c.l.b16 %v490
        %v719 = vunpack.c.l.b16 %v491
        %v720 = vunpack.c.l.b16 %v492
        %v721 = vunpack.c.l.b16 %v493
        %v722 = vunpack.c.l.b16 %v494
        %v723 = vunpack.c.l.b16 %v495
        %v724 = vunpack.c.l.b16 %v496
        %v725 = vunpack.c.l.b16 %v497
        %v726 = vpack.c.b16 %v614, %v613
        %v727 = vpack.c.b16 %v616, %v615
        %v728 = vpack.c.b16 %v618, %v617
        %v729 = vpack.c.b16 %v620, %v619
        %v730 = vpack.c.b16 %v622, %v621
        %v731 = vpack.c.b16 %v624, %v623
        %v732 = vpack.c.b16 %v626, %v625
        %v733 = vpack.c.b16 %v628, %v627
        %v734 = vpack.c.b16 %v630, %v629
        %v735 = vpack.c.b16 %v632, %v631
        %v736 = vpack.c.b16 %v634, %v633
        %v737 = vpack.c.b16 %v636, %v635
        %v738 = vpack.c.b16 %v638, %v637
        %v739 = vpack.c.b16 %v640, %v639
        %v740 = vpack.c.b16 %v642, %v641
        %v741 = vpack.c.b16 %v644, %v643
        %v742 = vpack.c.b16 %v646, %v645
        %v743 = vpack.c.b16 %v648, %v647
        %v744 = vpack.c.b16 %v650, %v649
        %v745 = vpack.c.b16 %v652, %v651
        %v746 = vpack.c.b16 %v654, %v653
        %v747 = vpack.c.b16 %v656, %v655
        %v748 = vpack.c.b16 %v658, %v657
        %v749 = vpack.c.b16 %v660, %v659
        %v750 = vpack.c.b16 %v662, %v661
        %v751 = vpack.c.b16 %v664, %v663
        %v752 = vpack.c.b16 %v666, %v665
        %v753 = vpack.c.b16 %v668, %v667
        %v754 = vpack.c.b16 %v670, %v669
        %v755 = vpack.c.b16 %v672, %v671
        %v756 = vpack.c.b16 %v674, %v673
        %v757 = vpack.c.b16 %v676, %v675
        %v758 = vpack.c.b16 %v678, %v677
        %v759 = vpack.c.b16 %v680, %v679
        %v760 = vpack.c.b16 %v682, %v681
        %v761 = vpack.c.b16 %v684, %v683
        %v762 = vpack.c.b16 %v686, %v685
        %v763 = vpack.c.b16 %v688, %v687
        %v764 = vpack.c.b16 %v690, %v689
        %v765 = vpack.c.b16 %v692, %v691
        %v766 = vpack.c.b16 %v694, %v693
        %v767 = vpack.c.b16 %v696, %v695
        %v768 = vpack.c.b16 %v698, %v697
        %v769 = vpack.c.b16 %v700, %v699
        %v770 = vpack.c.b16 %v702, %v701
        %v771 = vpack.c.b16 %v704, %v703
        %v772 = vpack.c.b16 %v706, %v705
        %v773 = vpack.c.b16 %v708, %v707
        %v774 = vpack.c.b16 %v710, %v709
        %v775 = vpack.c.b16 %v712, %v711
        %v776 = vpack.c.b16 %v714, %v713
        %v777 = vpack.c.b16 %v716, %v715
        %v778 = vpack.c.b16 %v718, %v717
        %v779 = vpack.c.b16 %v720, %v719
        %v780 = vpack.c.b16 %v722, %v721
        %v781 = vpack.c.b16 %v724, %v723
        %v782 = vpack.c.b16 %v725, %v725
        %v785 = vunpack.c.l.b16 %v498
        %v786 = vunpack.c.l.b16 %v499
        %v787 = vpack.c.b16 %v786, %v785
        %vm788 = vcmask 72704
        %v790 = vsel %vm788, %v726, 0
        %v793 = vsel %vm788, %v727, 0
        %v796 = vsel %vm788, %v728, 0
        %v799 = vsel %vm788, %v729, 0
        %v802 = vsel %vm788, %v730, 0
        %v805 = vsel %vm788, %v731, 0
        %v808 = vsel %vm788, %v732, 0
        %v811 = vsel %vm788, %v733, 0
        %v814 = vsel %vm788, %v734, 0
        %v817 = vsel %vm788, %v735, 0
        %v820 = vsel %vm788, %v736, 0
        %v823 = vsel %vm788, %v737, 0
        %v826 = vsel %vm788, %v738, 0
        %v829 = vsel %vm788, %v739, 0
        %v832 = vsel %vm788, %v740, 0
        %v835 = vsel %vm788, %v741, 0
        %v838 = vsel %vm788, %v742, 0
        %v841 = vsel %vm788, %v743, 0
        %v844 = vsel %vm788, %v744, 0
        %v847 = vsel %vm788, %v745, 0
        %v850 = vsel %vm788, %v746, 0
        %v853 = vsel %vm788, %v747, 0
        %v856 = vsel %vm788, %v748, 0
        %v859 = vsel %vm788, %v749, 0
        %v862 = vsel %vm788, %v750, 0
        %v865 = vsel %vm788, %v751, 0
        %v868 = vsel %vm788, %v752, 0
        %v871 = vsel %vm788, %v753, 0
        %v874 = vsel %vm788, %v754, 0
        %v877 = vsel %vm788, %v755, 0
        %v880 = vsel %vm788, %v756, 0
        %v883 = vsel %vm788, %v757, 0
        %v886 = vsel %vm788, %v758, 0
        %v889 = vsel %vm788, %v759, 0
        %v892 = vsel %vm788, %v760, 0
        %v895 = vsel %vm788, %v761, 0
        %v898 = vsel %vm788, %v762, 0
        %v901 = vsel %vm788, %v763, 0
        %v904 = vsel %vm788, %v764, 0
        %v907 = vsel %vm788, %v765, 0
        %v910 = vsel %vm788, %v766, 0
        %v913 = vsel %vm788, %v767, 0
        %v916 = vsel %vm788, %v768, 0
        %v919 = vsel %vm788, %v769, 0
        %v922 = vsel %vm788, %v770, 0
        %v925 = vsel %vm788, %v771, 0
        %v928 = vsel %vm788, %v772, 0
        %v931 = vsel %vm788, %v773, 0
        %v934 = vsel %vm788, %v774, 0
        %v937 = vsel %vm788, %v775, 0
        %v940 = vsel %vm788, %v776, 0
        %v943 = vsel %vm788, %v777, 0
        %v946 = vsel %vm788, %v778, 0
        %v949 = vsel %vm788, %v779, 0
        %v952 = vsel %vm788, %v780, 0
        %v955 = vsel %vm788, %v781, 0
        %v958 = vsel %vm788, %v782, 0
        %vm960 = vcmask 1043456
        %vm961 = vcmask 1044480
        %v962 = vsel %vm960, 4294967295, 65535
        %v963 = vsel %vm961, %v962, 0
        %v965 = vand.u32 %v787, %v963
        %967 = vmatprep.subr.bf16.mxu0 0
        %968 = vmatpush1.bf16.msra.mxu0 %v965
        %969 = vmatprep.subr.bf16.mxu0 0
        %970 = vmatpush1.bf16.msra.mxu0 0
        %971 = vmatprep.subr.bf16.mxu0 0
        %972 = vmatpush1.bf16.msra.mxu0 0
        %973 = vmatprep.subr.bf16.mxu0 0
        %974 = vmatpush1.bf16.msra.mxu0 0
        %975 = vmatprep.subr.bf16.mxu0 0
        %976 = vmatpush1.bf16.msra.mxu0 0
        %977 = vmatprep.subr.bf16.mxu0 0
        %978 = vmatpush1.bf16.msra.mxu0 0
        %979 = vmatprep.subr.bf16.mxu0 0
        %980 = vmatpush1.bf16.msra.mxu0 0
        %981 = vmatprep.subr.bf16.mxu0 0
        %982 = vmatpush1.bf16.msra.mxu0 0
        %983 = vmatprep.subr.bf16.mxu0 0
        %984 = vmatpush1.bf16.msra.mxu0 0
        %985 = vmatprep.subr.bf16.mxu0 0
        %986 = vmatpush1.bf16.msra.mxu0 0
        %987 = vmatprep.subr.bf16.mxu0 0
        %988 = vmatpush1.bf16.msra.mxu0 0
        %989 = vmatprep.subr.bf16.mxu0 0
        %990 = vmatpush1.bf16.msra.mxu0 0
        %991 = vmatprep.subr.bf16.mxu0 0
        %992 = vmatpush1.bf16.msra.mxu0 0
        %993 = vmatprep.subr.bf16.mxu0 0
        %994 = vmatpush1.bf16.msra.mxu0 0
        %995 = vmatprep.subr.bf16.mxu0 0
        %996 = vmatpush1.bf16.msra.mxu0 0
        %997 = vmatprep.subr.bf16.mxu0 0
        %998 = vmatpush1.bf16.msra.mxu0 0
        %999 = vmatprep.mubr.bf16.mxu0 0
        %1000 = vmatmul.mubr.bf16.gmra.mrb[0].mxu0 %v790
        %v1001 = vpop.f32.mrb[0].mxu0
        %v1002 = vadd.f32 0.0, %v1001
        %v1003 = vpop.f32.mrb[0].mxu0
        %v1004 = vpop.f32.mrb[0].mxu0
        %v1005 = vadd.f32 0.0, %v1004
        %v1006 = vpop.f32.mrb[0].mxu0
        %1007 = vmatprep.mubr.bf16.mxu0 0
        %1008 = vmatmul.mubr.bf16.gmra.mrb[0].mxu0 %v793
        %v1009 = vpop.f32.mrb[0].mxu0
        %v1010 = vadd.f32 0.0, %v1009
        %v1011 = vpop.f32.mrb[0].mxu0
        %v1012 = vpop.f32.mrb[0].mxu0
        %v1013 = vadd.f32 0.0, %v1012
        %v1014 = vpop.f32.mrb[0].mxu0
        %1015 = vmatprep.mubr.bf16.mxu0 0
        %1016 = vmatmul.mubr.bf16.gmra.mrb[0].mxu0 %v796
        %v1017 = vpop.f32.mrb[0].mxu0
        %v1018 = vadd.f32 0.0, %v1017
        %v1019 = vpop.f32.mrb[0].mxu0
        %v1020 = vpop.f32.mrb[0].mxu0
        %v1021 = vadd.f32 0.0, %v1020
        %v1022 = vpop.f32.mrb[0].mxu0
        %1023 = vmatprep.mubr.bf16.mxu0 0
        %1024 = vmatmul.mubr.bf16.gmra.mrb[0].mxu0 %v799
        %v1025 = vpop.f32.mrb[0].mxu0
        %v1026 = vadd.f32 0.0, %v1025
        %v1027 = vpop.f32.mrb[0].mxu0
        %v1028 = vpop.f32.mrb[0].mxu0
        %v1029 = vadd.f32 0.0, %v1028
        %v1030 = vpop.f32.mrb[0].mxu0
        %1031 = vmatprep.mubr.bf16.mxu0 0
        %1032 = vmatmul.mubr.bf16.gmra.mrb[0].mxu0 %v802
        %v1033 = vpop.f32.mrb[0].mxu0
        %v1034 = vadd.f32 0.0, %v1033
        %v1035 = vpop.f32.mrb[0].mxu0
        %v1036 = vpop.f32.mrb[0].mxu0
        %v1037 = vadd.f32 0.0, %v1036
        %v1038 = vpop.f32.mrb[0].mxu0
        %1039 = vmatprep.mubr.bf16.mxu0 0
        %1040 = vmatmul.mubr.bf16.gmra.mrb[0].mxu0 %v805
        %v1041 = vpop.f32.mrb[0].mxu0
        %v1042 = vadd.f32 0.0, %v1041
        %v1043 = vpop.f32.mrb[0].mxu0
        %v1044 = vpop.f32.mrb[0].mxu0
        %v1045 = vadd.f32 0.0, %v1044
        %v1046 = vpop.f32.mrb[0].mxu0
        %1047 = vmatprep.mubr.bf16.mxu0 0
        %1048 = vmatmul.mubr.bf16.gmra.mrb[0].mxu0 %v808
        %v1049 = vpop.f32.mrb[0].mxu0
        %v1050 = vadd.f32 0.0, %v1049
        %v1051 = vpop.f32.mrb[0].mxu0
        %v1052 = vpop.f32.mrb[0].mxu0
        %v1053 = vadd.f32 0.0, %v1052
        %v1054 = vpop.f32.mrb[0].mxu0
        %1055 = vmatprep.mubr.bf16.mxu0 0
        %1056 = vmatmul.mubr.bf16.gmra.mrb[0].mxu0 %v811
        %v1057 = vpop.f32.mrb[0].mxu0
        %v1058 = vadd.f32 0.0, %v1057
        %v1059 = vpop.f32.mrb[0].mxu0
        %v1060 = vpop.f32.mrb[0].mxu0
        %v1061 = vadd.f32 0.0, %v1060
        %v1062 = vpop.f32.mrb[0].mxu0
        %1063 = vmatprep.mubr.bf16.mxu0 0
        %1064 = vmatmul.mubr.bf16.gmra.mrb[0].mxu0 %v814
        %v1065 = vpop.f32.mrb[0].mxu0
        %v1066 = vadd.f32 0.0, %v1065
        %v1067 = vpop.f32.mrb[0].mxu0
        %v1068 = vpop.f32.mrb[0].mxu0
        %v1069 = vadd.f32 0.0, %v1068
        %v1070 = vpop.f32.mrb[0].mxu0
        %1071 = vmatprep.mubr.bf16.mxu0 0
        %1072 = vmatmul.mubr.bf16.gmra.mrb[0].mxu0 %v817
        %v1073 = vpop.f32.mrb[0].mxu0
        %v1074 = vadd.f32 0.0, %v1073
        %v1075 = vpop.f32.mrb[0].mxu0
        %v1076 = vpop.f32.mrb[0].mxu0
        %v1077 = vadd.f32 0.0, %v1076
        %v1078 = vpop.f32.mrb[0].mxu0
        %1079 = vmatprep.mubr.bf16.mxu0 0
        %1080 = vmatmul.mubr.bf16.gmra.mrb[0].mxu0 %v820
        %v1081 = vpop.f32.mrb[0].mxu0
        %v1082 = vadd.f32 0.0, %v1081
        %v1083 = vpop.f32.mrb[0].mxu0
        %v1084 = vpop.f32.mrb[0].mxu0
        %v1085 = vadd.f32 0.0, %v1084
        %v1086 = vpop.f32.mrb[0].mxu0
        %1087 = vmatprep.mubr.bf16.mxu0 0
        %1088 = vmatmul.mubr.bf16.gmra.mrb[0].mxu0 %v823
        %v1089 = vpop.f32.mrb[0].mxu0
        %v1090 = vadd.f32 0.0, %v1089
        %v1091 = vpop.f32.mrb[0].mxu0
        %v1092 = vpop.f32.mrb[0].mxu0
        %v1093 = vadd.f32 0.0, %v1092
        %v1094 = vpop.f32.mrb[0].mxu0
        %1095 = vmatprep.mubr.bf16.mxu0 0
        %1096 = vmatmul.mubr.bf16.gmra.mrb[0].mxu0 %v826
        %v1097 = vpop.f32.mrb[0].mxu0
        %v1098 = vadd.f32 0.0, %v1097
        %v1099 = vpop.f32.mrb[0].mxu0
        %v1100 = vpop.f32.mrb[0].mxu0
        %v1101 = vadd.f32 0.0, %v1100
        %v1102 = vpop.f32.mrb[0].mxu0
        %1103 = vmatprep.mubr.bf16.mxu0 0
        %1104 = vmatmul.mubr.bf16.gmra.mrb[0].mxu0 %v829
        %v1105 = vpop.f32.mrb[0].mxu0
        %v1106 = vadd.f32 0.0, %v1105
        %v1107 = vpop.f32.mrb[0].mxu0
        %v1108 = vpop.f32.mrb[0].mxu0
        %v1109 = vadd.f32 0.0, %v1108
        %v1110 = vpop.f32.mrb[0].mxu0
        %1111 = vmatprep.mubr.bf16.mxu0 0
        %1112 = vmatmul.mubr.bf16.gmra.mrb[0].mxu0 %v832
        %v1113 = vpop.f32.mrb[0].mxu0
        %v1114 = vadd.f32 0.0, %v1113
        %v1115 = vpop.f32.mrb[0].mxu0
        %v1116 = vpop.f32.mrb[0].mxu0
        %v1117 = vadd.f32 0.0, %v1116
        %v1118 = vpop.f32.mrb[0].mxu0
        %1119 = vmatprep.mubr.bf16.mxu0 0
        %1120 = vmatmul.mubr.bf16.gmra.mrb[0].mxu0 %v835
        %v1121 = vpop.f32.mrb[0].mxu0
        %v1122 = vadd.f32 0.0, %v1121
        %v1123 = vpop.f32.mrb[0].mxu0
        %v1124 = vpop.f32.mrb[0].mxu0
        %v1125 = vadd.f32 0.0, %v1124
        %v1126 = vpop.f32.mrb[0].mxu0
        %1127 = vmatprep.mubr.bf16.mxu0 0
        %1128 = vmatmul.mubr.bf16.gmra.mrb[0].mxu0 %v838
        %v1129 = vpop.f32.mrb[0].mxu0
        %v1130 = vadd.f32 0.0, %v1129
        %v1131 = vpop.f32.mrb[0].mxu0
        %v1132 = vpop.f32.mrb[0].mxu0
        %v1133 = vadd.f32 0.0, %v1132
        %v1134 = vpop.f32.mrb[0].mxu0
        %1135 = vmatprep.mubr.bf16.mxu0 0
        %1136 = vmatmul.mubr.bf16.gmra.mrb[0].mxu0 %v841
        %v1137 = vpop.f32.mrb[0].mxu0
        %v1138 = vadd.f32 0.0, %v1137
        %v1139 = vpop.f32.mrb[0].mxu0
        %v1140 = vpop.f32.mrb[0].mxu0
        %v1141 = vadd.f32 0.0, %v1140
        %v1142 = vpop.f32.mrb[0].mxu0
        %1143 = vmatprep.mubr.bf16.mxu0 0
        %1144 = vmatmul.mubr.bf16.gmra.mrb[0].mxu0 %v844
        %v1145 = vpop.f32.mrb[0].mxu0
        %v1146 = vadd.f32 0.0, %v1145
        %v1147 = vpop.f32.mrb[0].mxu0
        %v1148 = vpop.f32.mrb[0].mxu0
        %v1149 = vadd.f32 0.0, %v1148
        %v1150 = vpop.f32.mrb[0].mxu0
        %1151 = vmatprep.mubr.bf16.mxu0 0
        %1152 = vmatmul.mubr.bf16.gmra.mrb[0].mxu0 %v847
        %v1153 = vpop.f32.mrb[0].mxu0
        %v1154 = vadd.f32 0.0, %v1153
        %v1155 = vpop.f32.mrb[0].mxu0
        %v1156 = vpop.f32.mrb[0].mxu0
        %v1157 = vadd.f32 0.0, %v1156
        %v1158 = vpop.f32.mrb[0].mxu0
        %1159 = vmatprep.mubr.bf16.mxu0 0
        %1160 = vmatmul.mubr.bf16.gmra.mrb[0].mxu0 %v850
        %v1161 = vpop.f32.mrb[0].mxu0
        %v1162 = vadd.f32 0.0, %v1161
        %v1163 = vpop.f32.mrb[0].mxu0
        %v1164 = vpop.f32.mrb[0].mxu0
        %v1165 = vadd.f32 0.0, %v1164
        %v1166 = vpop.f32.mrb[0].mxu0
        %1167 = vmatprep.mubr.bf16.mxu0 0
        %1168 = vmatmul.mubr.bf16.gmra.mrb[0].mxu0 %v853
        %v1169 = vpop.f32.mrb[0].mxu0
        %v1170 = vadd.f32 0.0, %v1169
        %v1171 = vpop.f32.mrb[0].mxu0
        %v1172 = vpop.f32.mrb[0].mxu0
        %v1173 = vadd.f32 0.0, %v1172
        %v1174 = vpop.f32.mrb[0].mxu0
        %1175 = vmatprep.mubr.bf16.mxu0 0
        %1176 = vmatmul.mubr.bf16.gmra.mrb[0].mxu0 %v856
        %v1177 = vpop.f32.mrb[0].mxu0
        %v1178 = vadd.f32 0.0, %v1177
        %v1179 = vpop.f32.mrb[0].mxu0
        %v1180 = vpop.f32.mrb[0].mxu0
        %v1181 = vadd.f32 0.0, %v1180
        %v1182 = vpop.f32.mrb[0].mxu0
        %1183 = vmatprep.mubr.bf16.mxu0 0
        %1184 = vmatmul.mubr.bf16.gmra.mrb[0].mxu0 %v859
        %v1185 = vpop.f32.mrb[0].mxu0
        %v1186 = vadd.f32 0.0, %v1185
        %v1187 = vpop.f32.mrb[0].mxu0
        %v1188 = vpop.f32.mrb[0].mxu0
        %v1189 = vadd.f32 0.0, %v1188
        %v1190 = vpop.f32.mrb[0].mxu0
        %1191 = vmatprep.mubr.bf16.mxu0 0
        %1192 = vmatmul.mubr.bf16.gmra.mrb[0].mxu0 %v862
        %v1193 = vpop.f32.mrb[0].mxu0
        %v1194 = vadd.f32 0.0, %v1193
        %v1195 = vpop.f32.mrb[0].mxu0
        %v1196 = vpop.f32.mrb[0].mxu0
        %v1197 = vadd.f32 0.0, %v1196
        %v1198 = vpop.f32.mrb[0].mxu0
        %1199 = vmatprep.mubr.bf16.mxu0 0
        %1200 = vmatmul.mubr.bf16.gmra.mrb[0].mxu0 %v865
        %v1201 = vpop.f32.mrb[0].mxu0
        %v1202 = vadd.f32 0.0, %v1201
        %v1203 = vpop.f32.mrb[0].mxu0
        %v1204 = vpop.f32.mrb[0].mxu0
        %v1205 = vadd.f32 0.0, %v1204
        %v1206 = vpop.f32.mrb[0].mxu0
        %1207 = vmatprep.mubr.bf16.mxu0 0
        %1208 = vmatmul.mubr.bf16.gmra.mrb[0].mxu0 %v868
        %v1209 = vpop.f32.mrb[0].mxu0
        %v1210 = vadd.f32 0.0, %v1209
        %v1211 = vpop.f32.mrb[0].mxu0
        %v1212 = vpop.f32.mrb[0].mxu0
        %v1213 = vadd.f32 0.0, %v1212
        %v1214 = vpop.f32.mrb[0].mxu0
        %1215 = vmatprep.mubr.bf16.mxu0 0
        %1216 = vmatmul.mubr.bf16.gmra.mrb[0].mxu0 %v871
        %v1217 = vpop.f32.mrb[0].mxu0
        %v1218 = vadd.f32 0.0, %v1217
        %v1219 = vpop.f32.mrb[0].mxu0
        %v1220 = vpop.f32.mrb[0].mxu0
        %v1221 = vadd.f32 0.0, %v1220
        %v1222 = vpop.f32.mrb[0].mxu0
        %1223 = vmatprep.mubr.bf16.mxu0 0
        %1224 = vmatmul.mubr.bf16.gmra.mrb[0].mxu0 %v874
        %v1225 = vpop.f32.mrb[0].mxu0
        %v1226 = vadd.f32 0.0, %v1225
        %v1227 = vpop.f32.mrb[0].mxu0
        %v1228 = vpop.f32.mrb[0].mxu0
        %v1229 = vadd.f32 0.0, %v1228
        %v1230 = vpop.f32.mrb[0].mxu0
        %1231 = vmatprep.mubr.bf16.mxu0 0
        %1232 = vmatmul.mubr.bf16.gmra.mrb[0].mxu0 %v877
        %v1233 = vpop.f32.mrb[0].mxu0
        %v1234 = vadd.f32 0.0, %v1233
        %v1235 = vpop.f32.mrb[0].mxu0
        %v1236 = vpop.f32.mrb[0].mxu0
        %v1237 = vadd.f32 0.0, %v1236
        %v1238 = vpop.f32.mrb[0].mxu0
        %1239 = vmatprep.mubr.bf16.mxu0 0
        %1240 = vmatmul.mubr.bf16.gmra.mrb[0].mxu0 %v880
        %v1241 = vpop.f32.mrb[0].mxu0
        %v1242 = vadd.f32 0.0, %v1241
        %v1243 = vpop.f32.mrb[0].mxu0
        %v1244 = vpop.f32.mrb[0].mxu0
        %v1245 = vadd.f32 0.0, %v1244
        %v1246 = vpop.f32.mrb[0].mxu0
        %1247 = vmatprep.mubr.bf16.mxu0 0
        %1248 = vmatmul.mubr.bf16.gmra.mrb[0].mxu0 %v883
        %v1249 = vpop.f32.mrb[0].mxu0
        %v1250 = vadd.f32 0.0, %v1249
        %v1251 = vpop.f32.mrb[0].mxu0
        %v1252 = vpop.f32.mrb[0].mxu0
        %v1253 = vadd.f32 0.0, %v1252
        %v1254 = vpop.f32.mrb[0].mxu0
        %1255 = vmatprep.mubr.bf16.mxu0 0
        %1256 = vmatmul.mubr.bf16.gmra.mrb[0].mxu0 %v886
        %v1257 = vpop.f32.mrb[0].mxu0
        %v1258 = vadd.f32 0.0, %v1257
        %v1259 = vpop.f32.mrb[0].mxu0
        %v1260 = vpop.f32.mrb[0].mxu0
        %v1261 = vadd.f32 0.0, %v1260
        %v1262 = vpop.f32.mrb[0].mxu0
        %1263 = vmatprep.mubr.bf16.mxu0 0
        %1264 = vmatmul.mubr.bf16.gmra.mrb[0].mxu0 %v889
        %v1265 = vpop.f32.mrb[0].mxu0
        %v1266 = vadd.f32 0.0, %v1265
        %v1267 = vpop.f32.mrb[0].mxu0
        %v1268 = vpop.f32.mrb[0].mxu0
        %v1269 = vadd.f32 0.0, %v1268
        %v1270 = vpop.f32.mrb[0].mxu0
        %1271 = vmatprep.mubr.bf16.mxu0 0
        %1272 = vmatmul.mubr.bf16.gmra.mrb[0].mxu0 %v892
        %v1273 = vpop.f32.mrb[0].mxu0
        %v1274 = vadd.f32 0.0, %v1273
        %v1275 = vpop.f32.mrb[0].mxu0
        %v1276 = vpop.f32.mrb[0].mxu0
        %v1277 = vadd.f32 0.0, %v1276
        %v1278 = vpop.f32.mrb[0].mxu0
        %1279 = vmatprep.mubr.bf16.mxu0 0
        %1280 = vmatmul.mubr.bf16.gmra.mrb[0].mxu0 %v895
        %v1281 = vpop.f32.mrb[0].mxu0
        %v1282 = vadd.f32 0.0, %v1281
        %v1283 = vpop.f32.mrb[0].mxu0
        %v1284 = vpop.f32.mrb[0].mxu0
        %v1285 = vadd.f32 0.0, %v1284
        %v1286 = vpop.f32.mrb[0].mxu0
        %1287 = vmatprep.mubr.bf16.mxu0 0
        %1288 = vmatmul.mubr.bf16.gmra.mrb[0].mxu0 %v898
        %v1289 = vpop.f32.mrb[0].mxu0
        %v1290 = vadd.f32 0.0, %v1289
        %v1291 = vpop.f32.mrb[0].mxu0
        %v1292 = vpop.f32.mrb[0].mxu0
        %v1293 = vadd.f32 0.0, %v1292
        %v1294 = vpop.f32.mrb[0].mxu0
        %1295 = vmatprep.mubr.bf16.mxu0 0
        %1296 = vmatmul.mubr.bf16.gmra.mrb[0].mxu0 %v901
        %v1297 = vpop.f32.mrb[0].mxu0
        %v1298 = vadd.f32 0.0, %v1297
        %v1299 = vpop.f32.mrb[0].mxu0
        %v1300 = vpop.f32.mrb[0].mxu0
        %v1301 = vadd.f32 0.0, %v1300
        %v1302 = vpop.f32.mrb[0].mxu0
        %1303 = vmatprep.mubr.bf16.mxu0 0
        %1304 = vmatmul.mubr.bf16.gmra.mrb[0].mxu0 %v904
        %v1305 = vpop.f32.mrb[0].mxu0
        %v1306 = vadd.f32 0.0, %v1305
        %v1307 = vpop.f32.mrb[0].mxu0
        %v1308 = vpop.f32.mrb[0].mxu0
        %v1309 = vadd.f32 0.0, %v1308
        %v1310 = vpop.f32.mrb[0].mxu0
        %1311 = vmatprep.mubr.bf16.mxu0 0
        %1312 = vmatmul.mubr.bf16.gmra.mrb[0].mxu0 %v907
        %v1313 = vpop.f32.mrb[0].mxu0
        %v1314 = vadd.f32 0.0, %v1313
        %v1315 = vpop.f32.mrb[0].mxu0
        %v1316 = vpop.f32.mrb[0].mxu0
        %v1317 = vadd.f32 0.0, %v1316
        %v1318 = vpop.f32.mrb[0].mxu0
        %1319 = vmatprep.mubr.bf16.mxu0 0
        %1320 = vmatmul.mubr.bf16.gmra.mrb[0].mxu0 %v910
        %v1321 = vpop.f32.mrb[0].mxu0
        %v1322 = vadd.f32 0.0, %v1321
        %v1323 = vpop.f32.mrb[0].mxu0
        %v1324 = vpop.f32.mrb[0].mxu0
        %v1325 = vadd.f32 0.0, %v1324
        %v1326 = vpop.f32.mrb[0].mxu0
        %1327 = vmatprep.mubr.bf16.mxu0 0
        %1328 = vmatmul.mubr.bf16.gmra.mrb[0].mxu0 %v913
        %v1329 = vpop.f32.mrb[0].mxu0
        %v1330 = vadd.f32 0.0, %v1329
        %v1331 = vpop.f32.mrb[0].mxu0
        %v1332 = vpop.f32.mrb[0].mxu0
        %v1333 = vadd.f32 0.0, %v1332
        %v1334 = vpop.f32.mrb[0].mxu0
        %1335 = vmatprep.mubr.bf16.mxu0 0
        %1336 = vmatmul.mubr.bf16.gmra.mrb[0].mxu0 %v916
        %v1337 = vpop.f32.mrb[0].mxu0
        %v1338 = vadd.f32 0.0, %v1337
        %v1339 = vpop.f32.mrb[0].mxu0
        %v1340 = vpop.f32.mrb[0].mxu0
        %v1341 = vadd.f32 0.0, %v1340
        %v1342 = vpop.f32.mrb[0].mxu0
        %1343 = vmatprep.mubr.bf16.mxu0 0
        %1344 = vmatmul.mubr.bf16.gmra.mrb[0].mxu0 %v919
        %v1345 = vpop.f32.mrb[0].mxu0
        %v1346 = vadd.f32 0.0, %v1345
        %v1347 = vpop.f32.mrb[0].mxu0
        %v1348 = vpop.f32.mrb[0].mxu0
        %v1349 = vadd.f32 0.0, %v1348
        %v1350 = vpop.f32.mrb[0].mxu0
        %1351 = vmatprep.mubr.bf16.mxu0 0
        %1352 = vmatmul.mubr.bf16.gmra.mrb[0].mxu0 %v922
        %v1353 = vpop.f32.mrb[0].mxu0
        %v1354 = vadd.f32 0.0, %v1353
        %v1355 = vpop.f32.mrb[0].mxu0
        %v1356 = vpop.f32.mrb[0].mxu0
        %v1357 = vadd.f32 0.0, %v1356
        %v1358 = vpop.f32.mrb[0].mxu0
        %1359 = vmatprep.mubr.bf16.mxu0 0
        %1360 = vmatmul.mubr.bf16.gmra.mrb[0].mxu0 %v925
        %v1361 = vpop.f32.mrb[0].mxu0
        %v1362 = vadd.f32 0.0, %v1361
        %v1363 = vpop.f32.mrb[0].mxu0
        %v1364 = vpop.f32.mrb[0].mxu0
        %v1365 = vadd.f32 0.0, %v1364
        %v1366 = vpop.f32.mrb[0].mxu0
        %1367 = vmatprep.mubr.bf16.mxu0 0
        %1368 = vmatmul.mubr.bf16.gmra.mrb[0].mxu0 %v928
        %v1369 = vpop.f32.mrb[0].mxu0
        %v1370 = vadd.f32 0.0, %v1369
        %v1371 = vpop.f32.mrb[0].mxu0
        %v1372 = vpop.f32.mrb[0].mxu0
        %v1373 = vadd.f32 0.0, %v1372
        %v1374 = vpop.f32.mrb[0].mxu0
        %1375 = vmatprep.mubr.bf16.mxu0 0
        %1376 = vmatmul.mubr.bf16.gmra.mrb[0].mxu0 %v931
        %v1377 = vpop.f32.mrb[0].mxu0
        %v1378 = vadd.f32 0.0, %v1377
        %v1379 = vpop.f32.mrb[0].mxu0
        %v1380 = vpop.f32.mrb[0].mxu0
        %v1381 = vadd.f32 0.0, %v1380
        %v1382 = vpop.f32.mrb[0].mxu0
        %1383 = vmatprep.mubr.bf16.mxu0 0
        %1384 = vmatmul.mubr.bf16.gmra.mrb[0].mxu0 %v934
        %v1385 = vpop.f32.mrb[0].mxu0
        %v1386 = vadd.f32 0.0, %v1385
        %v1387 = vpop.f32.mrb[0].mxu0
        %v1388 = vpop.f32.mrb[0].mxu0
        %v1389 = vadd.f32 0.0, %v1388
        %v1390 = vpop.f32.mrb[0].mxu0
        %1391 = vmatprep.mubr.bf16.mxu0 0
        %1392 = vmatmul.mubr.bf16.gmra.mrb[0].mxu0 %v937
        %v1393 = vpop.f32.mrb[0].mxu0
        %v1394 = vadd.f32 0.0, %v1393
        %v1395 = vpop.f32.mrb[0].mxu0
        %v1396 = vpop.f32.mrb[0].mxu0
        %v1397 = vadd.f32 0.0, %v1396
        %v1398 = vpop.f32.mrb[0].mxu0
        %1399 = vmatprep.mubr.bf16.mxu0 0
        %1400 = vmatmul.mubr.bf16.gmra.mrb[0].mxu0 %v940
        %v1401 = vpop.f32.mrb[0].mxu0
        %v1402 = vadd.f32 0.0, %v1401
        %v1403 = vpop.f32.mrb[0].mxu0
        %v1404 = vpop.f32.mrb[0].mxu0
        %v1405 = vadd.f32 0.0, %v1404
        %v1406 = vpop.f32.mrb[0].mxu0
        %1407 = vmatprep.mubr.bf16.mxu0 0
        %1408 = vmatmul.mubr.bf16.gmra.mrb[0].mxu0 %v943
        %v1409 = vpop.f32.mrb[0].mxu0
        %v1410 = vadd.f32 0.0, %v1409
        %v1411 = vpop.f32.mrb[0].mxu0
        %v1412 = vpop.f32.mrb[0].mxu0
        %v1413 = vadd.f32 0.0, %v1412
        %v1414 = vpop.f32.mrb[0].mxu0
        %1415 = vmatprep.mubr.bf16.mxu0 0
        %1416 = vmatmul.mubr.bf16.gmra.mrb[0].mxu0 %v946
        %v1417 = vpop.f32.mrb[0].mxu0
        %v1418 = vadd.f32 0.0, %v1417
        %v1419 = vpop.f32.mrb[0].mxu0
        %v1420 = vpop.f32.mrb[0].mxu0
        %v1421 = vadd.f32 0.0, %v1420
        %v1422 = vpop.f32.mrb[0].mxu0
        %1423 = vmatprep.mubr.bf16.mxu0 0
        %1424 = vmatmul.mubr.bf16.gmra.mrb[0].mxu0 %v949
        %v1425 = vpop.f32.mrb[0].mxu0
        %v1426 = vadd.f32 0.0, %v1425
        %v1427 = vpop.f32.mrb[0].mxu0
        %v1428 = vpop.f32.mrb[0].mxu0
        %v1429 = vadd.f32 0.0, %v1428
        %v1430 = vpop.f32.mrb[0].mxu0
        %1431 = vmatprep.mubr.bf16.mxu0 0
        %1432 = vmatmul.mubr.bf16.gmra.mrb[0].mxu0 %v952
        %v1433 = vpop.f32.mrb[0].mxu0
        %v1434 = vadd.f32 0.0, %v1433
        %v1435 = vpop.f32.mrb[0].mxu0
        %v1436 = vpop.f32.mrb[0].mxu0
        %v1437 = vadd.f32 0.0, %v1436
        %v1438 = vpop.f32.mrb[0].mxu0
        %1439 = vmatprep.mubr.bf16.mxu0 0
        %1440 = vmatmul.mubr.bf16.gmra.mrb[0].mxu0 %v955
        %v1441 = vpop.f32.mrb[0].mxu0
        %v1442 = vadd.f32 0.0, %v1441
        %v1443 = vpop.f32.mrb[0].mxu0
        %v1444 = vpop.f32.mrb[0].mxu0
        %v1445 = vadd.f32 0.0, %v1444
        %v1446 = vpop.f32.mrb[0].mxu0
        %1447 = vmatprep.mubr.bf16.mxu0 0
        %1448 = vmatmul.mubr.bf16.gmra.mrb[0].mxu0 %v958
        %v1449 = vpop.f32.mrb[0].mxu0
        %v1450 = vadd.f32 0.0, %v1449
        %v1451 = vpop.f32.mrb[0].mxu0
        %v1452 = vpop.f32.mrb[0].mxu0
        %v1453 = vpop.f32.mrb[0].mxu0
        %1454 = vdwg.mxu0
        %vm1484 = vcmask 1046528
        %v1485 = vrot.slane %v1114, 1
        %v1486 = vrot.slane %v1117, 1
        %v1487 = vsel %vm1484, %v1485, %v1486
        %v1488 = vrot.slane %v1122, 1
        %v1489 = vsel %vm1484, %v1486, %v1488
        %v1490 = vrot.slane %v1125, 1
        %v1491 = vsel %vm1484, %v1488, %v1490
        %v1492 = vrot.slane %v1130, 1
        %v1493 = vsel %vm1484, %v1490, %v1492
        %v1494 = vrot.slane %v1133, 1
        %v1495 = vsel %vm1484, %v1492, %v1494
        %v1496 = vrot.slane %v1138, 1
        %v1497 = vsel %vm1484, %v1494, %v1496
        %v1498 = vrot.slane %v1141, 1
        %v1499 = vsel %vm1484, %v1496, %v1498
        %v1500 = vrot.slane %v1146, 1
        %v1501 = vsel %vm1484, %v1498, %v1500
        %v1502 = vrot.slane %v1149, 1
        %v1503 = vsel %vm1484, %v1500, %v1502
        %v1504 = vrot.slane %v1154, 1
        %v1505 = vsel %vm1484, %v1502, %v1504
        %v1506 = vrot.slane %v1157, 1
        %v1507 = vsel %vm1484, %v1504, %v1506
        %v1508 = vrot.slane %v1162, 1
        %v1509 = vsel %vm1484, %v1506, %v1508
        %v1510 = vrot.slane %v1165, 1
        %v1511 = vsel %vm1484, %v1508, %v1510
        %v1512 = vrot.slane %v1170, 1
        %v1513 = vsel %vm1484, %v1510, %v1512
        %v1514 = vrot.slane %v1173, 1
        %v1515 = vsel %vm1484, %v1512, %v1514
        %v1516 = vrot.slane %v1178, 1
        %v1517 = vsel %vm1484, %v1514, %v1516
        %v1518 = vrot.slane %v1181, 1
        %v1519 = vsel %vm1484, %v1516, %v1518
        %v1520 = vrot.slane %v1186, 1
        %v1521 = vsel %vm1484, %v1518, %v1520
        %v1522 = vrot.slane %v1189, 1
        %v1523 = vsel %vm1484, %v1520, %v1522
        %v1524 = vrot.slane %v1194, 1
        %v1525 = vsel %vm1484, %v1522, %v1524
        %v1526 = vrot.slane %v1197, 1
        %v1527 = vsel %vm1484, %v1524, %v1526
        %v1528 = vrot.slane %v1202, 1
        %v1529 = vsel %vm1484, %v1526, %v1528
        %v1530 = vrot.slane %v1205, 1
        %v1531 = vsel %vm1484, %v1528, %v1530
        %v1532 = vrot.slane %v1210, 1
        %v1533 = vsel %vm1484, %v1530, %v1532
        %v1534 = vrot.slane %v1213, 1
        %v1535 = vsel %vm1484, %v1532, %v1534
        %v1536 = vrot.slane %v1218, 1
        %v1537 = vsel %vm1484, %v1534, %v1536
        %v1538 = vrot.slane %v1221, 1
        %v1539 = vsel %vm1484, %v1536, %v1538
        %v1540 = vrot.slane %v1226, 1
        %v1541 = vsel %vm1484, %v1538, %v1540
        %v1571 = vmax.f32 %v1002, %v1487
        %v1572 = vmax.f32 %v1005, %v1489
        %v1573 = vmax.f32 %v1010, %v1491
        %v1574 = vmax.f32 %v1013, %v1493
        %v1575 = vmax.f32 %v1018, %v1495
        %v1576 = vmax.f32 %v1021, %v1497
        %v1577 = vmax.f32 %v1026, %v1499
        %v1578 = vmax.f32 %v1029, %v1501
        %v1579 = vmax.f32 %v1034, %v1503
        %v1580 = vmax.f32 %v1037, %v1505
        %v1581 = vmax.f32 %v1042, %v1507
        %v1582 = vmax.f32 %v1045, %v1509
        %v1583 = vmax.f32 %v1050, %v1511
        %v1584 = vmax.f32 %v1053, %v1513
        %v1585 = vmax.f32 %v1058, %v1515
        %v1586 = vmax.f32 %v1061, %v1517
        %v1587 = vmax.f32 %v1066, %v1519
        %v1588 = vmax.f32 %v1069, %v1521
        %v1589 = vmax.f32 %v1074, %v1523
        %v1590 = vmax.f32 %v1077, %v1525
        %v1591 = vmax.f32 %v1082, %v1527
        %v1592 = vmax.f32 %v1085, %v1529
        %v1593 = vmax.f32 %v1090, %v1531
        %v1594 = vmax.f32 %v1093, %v1533
        %v1595 = vmax.f32 %v1098, %v1535
        %v1596 = vmax.f32 %v1101, %v1537
        %v1597 = vmax.f32 %v1106, %v1539
        %v1598 = vmax.f32 %v1109, %v1541
        %v1599 = vmax.f32 %v1114, %v1540
        %v1629 = vrot.slane %v1338, 1
        %v1630 = vrot.slane %v1341, 1
        %v1631 = vsel %vm1484, %v1629, %v1630
        %v1632 = vrot.slane %v1346, 1
        %v1633 = vsel %vm1484, %v1630, %v1632
        %v1634 = vrot.slane %v1349, 1
        %v1635 = vsel %vm1484, %v1632, %v1634
        %v1636 = vrot.slane %v1354, 1
        %v1637 = vsel %vm1484, %v1634, %v1636
        %v1638 = vrot.slane %v1357, 1
        %v1639 = vsel %vm1484, %v1636, %v1638
        %v1640 = vrot.slane %v1362, 1
        %v1641 = vsel %vm1484, %v1638, %v1640
        %v1642 = vrot.slane %v1365, 1
        %v1643 = vsel %vm1484, %v1640, %v1642
        %v1644 = vrot.slane %v1370, 1
        %v1645 = vsel %vm1484, %v1642, %v1644
        %v1646 = vrot.slane %v1373, 1
        %v1647 = vsel %vm1484, %v1644, %v1646
        %v1648 = vrot.slane %v1378, 1
        %v1649 = vsel %vm1484, %v1646, %v1648
        %v1650 = vrot.slane %v1381, 1
        %v1651 = vsel %vm1484, %v1648, %v1650
        %v1652 = vrot.slane %v1386, 1
        %v1653 = vsel %vm1484, %v1650, %v1652
        %v1654 = vrot.slane %v1389, 1
        %v1655 = vsel %vm1484, %v1652, %v1654
        %v1656 = vrot.slane %v1394, 1
        %v1657 = vsel %vm1484, %v1654, %v1656
        %v1658 = vrot.slane %v1397, 1
        %v1659 = vsel %vm1484, %v1656, %v1658
        %v1660 = vrot.slane %v1402, 1
        %v1661 = vsel %vm1484, %v1658, %v1660
        %v1662 = vrot.slane %v1405, 1
        %v1663 = vsel %vm1484, %v1660, %v1662
        %v1664 = vrot.slane %v1410, 1
        %v1665 = vsel %vm1484, %v1662, %v1664
        %v1666 = vrot.slane %v1413, 1
        %v1667 = vsel %vm1484, %v1664, %v1666
        %v1668 = vrot.slane %v1418, 1
        %v1669 = vsel %vm1484, %v1666, %v1668
        %v1670 = vrot.slane %v1421, 1
        %v1671 = vsel %vm1484, %v1668, %v1670
        %v1672 = vrot.slane %v1426, 1
        %v1673 = vsel %vm1484, %v1670, %v1672
        %v1674 = vrot.slane %v1429, 1
        %v1675 = vsel %vm1484, %v1672, %v1674
        %v1676 = vrot.slane %v1434, 1
        %v1677 = vsel %vm1484, %v1674, %v1676
        %v1678 = vrot.slane %v1437, 1
        %v1679 = vsel %vm1484, %v1676, %v1678
        %v1680 = vrot.slane %v1442, 1
        %v1681 = vsel %vm1484, %v1678, %v1680
        %v1682 = vrot.slane %v1445, 1
        %v1683 = vsel %vm1484, %v1680, %v1682
        %v1684 = vrot.slane %v1450, 1
        %v1685 = vsel %vm1484, %v1682, %v1684
        %v1715 = vmax.f32 %v1226, %v1631
        %v1716 = vmax.f32 %v1229, %v1633
        %v1717 = vmax.f32 %v1234, %v1635
        %v1718 = vmax.f32 %v1237, %v1637
        %v1719 = vmax.f32 %v1242, %v1639
        %v1720 = vmax.f32 %v1245, %v1641
        %v1721 = vmax.f32 %v1250, %v1643
        %v1722 = vmax.f32 %v1253, %v1645
        %v1723 = vmax.f32 %v1258, %v1647
        %v1724 = vmax.f32 %v1261, %v1649
        %v1725 = vmax.f32 %v1266, %v1651
        %v1726 = vmax.f32 %v1269, %v1653
        %v1727 = vmax.f32 %v1274, %v1655
        %v1728 = vmax.f32 %v1277, %v1657
        %v1729 = vmax.f32 %v1282, %v1659
        %v1730 = vmax.f32 %v1285, %v1661
        %v1731 = vmax.f32 %v1290, %v1663
        %v1732 = vmax.f32 %v1293, %v1665
        %v1733 = vmax.f32 %v1298, %v1667
        %v1734 = vmax.f32 %v1301, %v1669
        %v1735 = vmax.f32 %v1306, %v1671
        %v1736 = vmax.f32 %v1309, %v1673
        %v1737 = vmax.f32 %v1314, %v1675
        %v1738 = vmax.f32 %v1317, %v1677
        %v1739 = vmax.f32 %v1322, %v1679
        %v1740 = vmax.f32 %v1325, %v1681
        %v1741 = vmax.f32 %v1330, %v1683
        %v1742 = vmax.f32 %v1333, %v1685
        %v1743 = vmax.f32 %v1338, %v1684
        %vm1773 = vcmask 1045504
        %v1774 = vrot.slane %v1715, 2
        %v1775 = vrot.slane %v1716, 2
        %v1776 = vsel %vm1773, %v1774, %v1775
        %v1777 = vrot.slane %v1717, 2
        %v1778 = vsel %vm1773, %v1775, %v1777
        %v1779 = vrot.slane %v1718, 2
        %v1780 = vsel %vm1773, %v1777, %v1779
        %v1781 = vrot.slane %v1719, 2
        %v1782 = vsel %vm1773, %v1779, %v1781
        %v1783 = vrot.slane %v1720, 2
        %v1784 = vsel %vm1773, %v1781, %v1783
        %v1785 = vrot.slane %v1721, 2
        %v1786 = vsel %vm1773, %v1783, %v1785
        %v1787 = vrot.slane %v1722, 2
        %v1788 = vsel %vm1773, %v1785, %v1787
        %v1789 = vrot.slane %v1723, 2
        %v1790 = vsel %vm1773, %v1787, %v1789
        %v1791 = vrot.slane %v1724, 2
        %v1792 = vsel %vm1773, %v1789, %v1791
        %v1793 = vrot.slane %v1725, 2
        %v1794 = vsel %vm1773, %v1791, %v1793
        %v1795 = vrot.slane %v1726, 2
        %v1796 = vsel %vm1773, %v1793, %v1795
        %v1797 = vrot.slane %v1727, 2
        %v1798 = vsel %vm1773, %v1795, %v1797
        %v1799 = vrot.slane %v1728, 2
        %v1800 = vsel %vm1773, %v1797, %v1799
        %v1801 = vrot.slane %v1729, 2
        %v1802 = vsel %vm1773, %v1799, %v1801
        %v1803 = vrot.slane %v1730, 2
        %v1804 = vsel %vm1773, %v1801, %v1803
        %v1805 = vrot.slane %v1731, 2
        %v1806 = vsel %vm1773, %v1803, %v1805
        %v1807 = vrot.slane %v1732, 2
        %v1808 = vsel %vm1773, %v1805, %v1807
        %v1809 = vrot.slane %v1733, 2
        %v1810 = vsel %vm1773, %v1807, %v1809
        %v1811 = vrot.slane %v1734, 2
        %v1812 = vsel %vm1773, %v1809, %v1811
        %v1813 = vrot.slane %v1735, 2
        %v1814 = vsel %vm1773, %v1811, %v1813
        %v1815 = vrot.slane %v1736, 2
        %v1816 = vsel %vm1773, %v1813, %v1815
        %v1817 = vrot.slane %v1737, 2
        %v1818 = vsel %vm1773, %v1815, %v1817
        %v1819 = vrot.slane %v1738, 2
        %v1820 = vsel %vm1773, %v1817, %v1819
        %v1821 = vrot.slane %v1739, 2
        %v1822 = vsel %vm1773, %v1819, %v1821
        %v1823 = vrot.slane %v1740, 2
        %v1824 = vsel %vm1773, %v1821, %v1823
        %v1825 = vrot.slane %v1741, 2
        %v1826 = vsel %vm1773, %v1823, %v1825
        %v1827 = vrot.slane %v1742, 2
        %v1828 = vsel %vm1773, %v1825, %v1827
        %v1829 = vrot.slane %v1743, 2
        %v1830 = vsel %vm1773, %v1827, %v1829
        %v1860 = vmax.f32 %v1571, %v1776
        %v1861 = vmax.f32 %v1572, %v1778
        %v1862 = vmax.f32 %v1573, %v1780
        %v1863 = vmax.f32 %v1574, %v1782
        %v1864 = vmax.f32 %v1575, %v1784
        %v1865 = vmax.f32 %v1576, %v1786
        %v1866 = vmax.f32 %v1577, %v1788
        %v1867 = vmax.f32 %v1578, %v1790
        %v1868 = vmax.f32 %v1579, %v1792
        %v1869 = vmax.f32 %v1580, %v1794
        %v1870 = vmax.f32 %v1581, %v1796
        %v1871 = vmax.f32 %v1582, %v1798
        %v1872 = vmax.f32 %v1583, %v1800
        %v1873 = vmax.f32 %v1584, %v1802
        %v1874 = vmax.f32 %v1585, %v1804
        %v1875 = vmax.f32 %v1586, %v1806
        %v1876 = vmax.f32 %v1587, %v1808
        %v1877 = vmax.f32 %v1588, %v1810
        %v1878 = vmax.f32 %v1589, %v1812
        %v1879 = vmax.f32 %v1590, %v1814
        %v1880 = vmax.f32 %v1591, %v1816
        %v1881 = vmax.f32 %v1592, %v1818
        %v1882 = vmax.f32 %v1593, %v1820
        %v1883 = vmax.f32 %v1594, %v1822
        %v1884 = vmax.f32 %v1595, %v1824
        %v1885 = vmax.f32 %v1596, %v1826
        %v1886 = vmax.f32 %v1597, %v1828
        %v1887 = vmax.f32 %v1598, %v1830
        %v1888 = vmax.f32 %v1599, %v1829
        %v1889 = vld [vmem:[%s2] sm:$0x1]
        %v1891 = vlaneseq
        %v1892 = vshrl.u32 %v1891, 7
        %v1893 = vsub.s32 0, %v1892
        %v1894 = vrot.slane %v1889, %v1893
        %v1896 = vadd.f32 %v1860, %v1894
        %v1897 = vadd.f32 %v1861, %v1894
        %v1898 = vadd.f32 %v1862, %v1894
        %v1899 = vadd.f32 %v1863, %v1894
        %v1900 = vadd.f32 %v1864, %v1894
        %v1901 = vadd.f32 %v1865, %v1894
        %v1902 = vadd.f32 %v1866, %v1894
        %v1903 = vadd.f32 %v1867, %v1894
        %v1904 = vadd.f32 %v1868, %v1894
        %v1905 = vadd.f32 %v1869, %v1894
        %v1906 = vadd.f32 %v1870, %v1894
        %v1907 = vadd.f32 %v1871, %v1894
        %v1908 = vadd.f32 %v1872, %v1894
        %v1909 = vadd.f32 %v1873, %v1894
        %v1910 = vadd.f32 %v1874, %v1894
        %v1911 = vadd.f32 %v1875, %v1894
        %v1912 = vadd.f32 %v1876, %v1894
        %v1913 = vadd.f32 %v1877, %v1894
        %v1914 = vadd.f32 %v1878, %v1894
        %v1915 = vadd.f32 %v1879, %v1894
        %v1916 = vadd.f32 %v1880, %v1894
        %v1917 = vadd.f32 %v1881, %v1894
        %v1918 = vadd.f32 %v1882, %v1894
        %v1919 = vadd.f32 %v1883, %v1894
        %v1920 = vadd.f32 %v1884, %v1894
        %v1921 = vadd.f32 %v1885, %v1894
        %v1922 = vadd.f32 %v1886, %v1894
        %v1923 = vadd.f32 %v1887, %v1894
        %v1924 = vadd.f32 %v1888, %v1894
        %v1925 = vmax.f32 %v1896, 0.0
        %v1926 = vmax.f32 %v1897, 0.0
        %v1927 = vmax.f32 %v1898, 0.0
        %v1928 = vmax.f32 %v1899, 0.0
        %v1929 = vmax.f32 %v1900, 0.0
        %v1930 = vmax.f32 %v1901, 0.0
        %v1931 = vmax.f32 %v1902, 0.0
        %v1932 = vmax.f32 %v1903, 0.0
        %v1933 = vmax.f32 %v1904, 0.0
        %v1934 = vmax.f32 %v1905, 0.0
        %v1935 = vmax.f32 %v1906, 0.0
        %v1936 = vmax.f32 %v1907, 0.0
        %v1937 = vmax.f32 %v1908, 0.0
        %v1938 = vmax.f32 %v1909, 0.0
        %v1939 = vmax.f32 %v1910, 0.0
        %v1940 = vmax.f32 %v1911, 0.0
        %v1941 = vmax.f32 %v1912, 0.0
        %v1942 = vmax.f32 %v1913, 0.0
        %v1943 = vmax.f32 %v1914, 0.0
        %v1944 = vmax.f32 %v1915, 0.0
        %v1945 = vmax.f32 %v1916, 0.0
        %v1946 = vmax.f32 %v1917, 0.0
        %v1947 = vmax.f32 %v1918, 0.0
        %v1948 = vmax.f32 %v1919, 0.0
        %v1949 = vmax.f32 %v1920, 0.0
        %v1950 = vmax.f32 %v1921, 0.0
        %v1951 = vmax.f32 %v1922, 0.0
        %v1952 = vmax.f32 %v1923, 0.0
        %v1953 = vmax.f32 %v1924, 0.0
        %vm1954 = vcmask 441344
        %1955 = vst.msk [vmem:[#allocation2] sm:$0xff] %vm1954, 0.0
        %1956 = vst.msk [vmem:[#allocation2 + $0x8] sm:$0xff] %vm1954, 0.0
        %1957 = vst.msk [vmem:[#allocation2 + $0x10] sm:$0xff] %vm1954, 0.0
        %1958 = vst.msk [vmem:[#allocation2 + $0x18] sm:$0xff] %vm1954, 0.0
        %1959 = vst.msk [vmem:[#allocation2 + $0x20] sm:$0xff] %vm1954, 0.0
        %1960 = vst.msk [vmem:[#allocation2 + $0x28] sm:$0xff] %vm1954, 0.0
        %1961 = vst.msk [vmem:[#allocation2 + $0x30] sm:$0xff] %vm1954, 0.0
        %1962 = vst.msk [vmem:[#allocation2 + $0x38] sm:$0xff] %vm1954, 0.0
        %1963 = vst.msk [vmem:[#allocation2 + $0x40] sm:$0xff] %vm1954, 0.0
        %1964 = vst.msk [vmem:[#allocation2 + $0x48] sm:$0xff] %vm1954, 0.0
        %1965 = vst.msk [vmem:[#allocation2 + $0x50] sm:$0xff] %vm1954, 0.0
        %1966 = vst.msk [vmem:[#allocation2 + $0x58] sm:$0xff] %vm1954, 0.0
        %1967 = vst.msk [vmem:[#allocation2 + $0x60] sm:$0xff] %vm1954, 0.0
        %1968 = vst.msk [vmem:[#allocation2 + $0x68] sm:$0xff] %vm1954, 0.0
        %1969 = vst.msk [vmem:[#allocation2 + $0x70] sm:$0xff] %vm1954, 0.0
        %1970 = vst.msk [vmem:[#allocation2 + $0x78] sm:$0xff] %vm1954, 0.0
        %1971 = vst.msk [vmem:[#allocation2 + $0x80] sm:$0xff] %vm1954, 0.0
        %1972 = vst.msk [vmem:[#allocation2 + $0x88] sm:$0xff] %vm1954, 0.0
        %1973 = vst.msk [vmem:[#allocation2 + $0x90] sm:$0xff] %vm1954, 0.0
        %1974 = vst.msk [vmem:[#allocation2 + $0x98] sm:$0xff] %vm1954, 0.0
        %1975 = vst.msk [vmem:[#allocation2 + $0xa0] sm:$0xff] %vm1954, 0.0
        %1976 = vst.msk [vmem:[#allocation2 + $0xa8] sm:$0xff] %vm1954, 0.0
        %1977 = vst.msk [vmem:[#allocation2 + $0xb0] sm:$0xff] %vm1954, 0.0
        %1978 = vst.msk [vmem:[#allocation2 + $0xb8] sm:$0xff] %vm1954, 0.0
        %1979 = vst.msk [vmem:[#allocation2 + $0xc0] sm:$0xff] %vm1954, 0.0
        %1980 = vst.msk [vmem:[#allocation2 + $0xc8] sm:$0xff] %vm1954, 0.0
        %1981 = vst.msk [vmem:[#allocation2 + $0xd0] sm:$0xff] %vm1954, 0.0
        %1982 = vst.msk [vmem:[#allocation2 + $0xd8] sm:$0xff] %vm1954, 0.0
        %vm1983 = vcmask 434176
        %1984 = vst.msk [vmem:[#allocation2 + $0xe0] sm:$0x1] %vm1983, 0.0
        %vm1985 = vcmask 48128
        %1986 = vst.msk [vmem:[#allocation2] sm:$0xff] %vm1985, %v1925
        %1987 = vst.msk [vmem:[#allocation2 + $0x8] sm:$0xff] %vm1985, %v1926
        %1988 = vst.msk [vmem:[#allocation2 + $0x10] sm:$0xff] %vm1985, %v1927
        %1989 = vst.msk [vmem:[#allocation2 + $0x18] sm:$0xff] %vm1985, %v1928
        %1990 = vst.msk [vmem:[#allocation2 + $0x20] sm:$0xff] %vm1985, %v1929
        %1991 = vst.msk [vmem:[#allocation2 + $0x28] sm:$0xff] %vm1985, %v1930
        %1992 = vst.msk [vmem:[#allocation2 + $0x30] sm:$0xff] %vm1985, %v1931
        %1993 = vst.msk [vmem:[#allocation2 + $0x38] sm:$0xff] %vm1985, %v1932
        %1994 = vst.msk [vmem:[#allocation2 + $0x40] sm:$0xff] %vm1985, %v1933
        %1995 = vst.msk [vmem:[#allocation2 + $0x48] sm:$0xff] %vm1985, %v1934
        %1996 = vst.msk [vmem:[#allocation2 + $0x50] sm:$0xff] %vm1985, %v1935
        %1997 = vst.msk [vmem:[#allocation2 + $0x58] sm:$0xff] %vm1985, %v1936
        %1998 = vst.msk [vmem:[#allocation2 + $0x60] sm:$0xff] %vm1985, %v1937
        %1999 = vst.msk [vmem:[#allocation2 + $0x68] sm:$0xff] %vm1985, %v1938
        %2000 = vst.msk [vmem:[#allocation2 + $0x70] sm:$0xff] %vm1985, %v1939
        %2001 = vst.msk [vmem:[#allocation2 + $0x78] sm:$0xff] %vm1985, %v1940
        %2002 = vst.msk [vmem:[#allocation2 + $0x80] sm:$0xff] %vm1985, %v1941
        %2003 = vst.msk [vmem:[#allocation2 + $0x88] sm:$0xff] %vm1985, %v1942
        %2004 = vst.msk [vmem:[#allocation2 + $0x90] sm:$0xff] %vm1985, %v1943
        %2005 = vst.msk [vmem:[#allocation2 + $0x98] sm:$0xff] %vm1985, %v1944
        %2006 = vst.msk [vmem:[#allocation2 + $0xa0] sm:$0xff] %vm1985, %v1945
        %2007 = vst.msk [vmem:[#allocation2 + $0xa8] sm:$0xff] %vm1985, %v1946
        %2008 = vst.msk [vmem:[#allocation2 + $0xb0] sm:$0xff] %vm1985, %v1947
        %2009 = vst.msk [vmem:[#allocation2 + $0xb8] sm:$0xff] %vm1985, %v1948
        %2010 = vst.msk [vmem:[#allocation2 + $0xc0] sm:$0xff] %vm1985, %v1949
        %2011 = vst.msk [vmem:[#allocation2 + $0xc8] sm:$0xff] %vm1985, %v1950
        %2012 = vst.msk [vmem:[#allocation2 + $0xd0] sm:$0xff] %vm1985, %v1951
        %2013 = vst.msk [vmem:[#allocation2 + $0xd8] sm:$0xff] %vm1985, %v1952
        %vm2014 = vcmask 40960
        %2015 = vst.msk [vmem:[#allocation2 + $0xe0] sm:$0x1] %vm2014, %v1953
        %2045 = vrot.lane.b32.xlu0 %v1925, 6
        %v2046 = vpop.permute.xlu0 %2045
        %2047 = vrot.lane.b32.xlu0 %v1926, 6
        %v2048 = vpop.permute.xlu0 %2047
        %2049 = vrot.lane.b32.xlu0 %v1927, 6
        %v2050 = vpop.permute.xlu0 %2049
        %2051 = vrot.lane.b32.xlu0 %v1928, 6
        %v2052 = vpop.permute.xlu0 %2051
        %2053 = vrot.lane.b32.xlu0 %v1929, 6
        %v2054 = vpop.permute.xlu0 %2053
        %2055 = vrot.lane.b32.xlu0 %v1930, 6
        %v2056 = vpop.permute.xlu0 %2055
        %2057 = vrot.lane.b32.xlu0 %v1931, 6
        %v2058 = vpop.permute.xlu0 %2057
        %2059 = vrot.lane.b32.xlu0 %v1932, 6
        %v2060 = vpop.permute.xlu0 %2059
        %2061 = vrot.lane.b32.xlu0 %v1933, 6
        %v2062 = vpop.permute.xlu0 %2061
        %2063 = vrot.lane.b32.xlu0 %v1934, 6
        %v2064 = vpop.permute.xlu0 %2063
        %2065 = vrot.lane.b32.xlu0 %v1935, 6
        %v2066 = vpop.permute.xlu0 %2065
        %2067 = vrot.lane.b32.xlu0 %v1936, 6
        %v2068 = vpop.permute.xlu0 %2067
        %2069 = vrot.lane.b32.xlu0 %v1937, 6
        %v2070 = vpop.permute.xlu0 %2069
        %2071 = vrot.lane.b32.xlu0 %v1938, 6
        %v2072 = vpop.permute.xlu0 %2071
        %2073 = vrot.lane.b32.xlu0 %v1939, 6
        %v2074 = vpop.permute.xlu0 %2073
        %2075 = vrot.lane.b32.xlu0 %v1940, 6
        %v2076 = vpop.permute.xlu0 %2075
        %2077 = vrot.lane.b32.xlu0 %v1941, 6
        %v2078 = vpop.permute.xlu0 %2077
        %2079 = vrot.lane.b32.xlu0 %v1942, 6
        %v2080 = vpop.permute.xlu0 %2079
        %2081 = vrot.lane.b32.xlu0 %v1943, 6
        %v2082 = vpop.permute.xlu0 %2081
        %2083 = vrot.lane.b32.xlu0 %v1944, 6
        %v2084 = vpop.permute.xlu0 %2083
        %2085 = vrot.lane.b32.xlu0 %v1945, 6
        %v2086 = vpop.permute.xlu0 %2085
        %2087 = vrot.lane.b32.xlu0 %v1946, 6
        %v2088 = vpop.permute.xlu0 %2087
        %2089 = vrot.lane.b32.xlu0 %v1947, 6
        %v2090 = vpop.permute.xlu0 %2089
        %2091 = vrot.lane.b32.xlu0 %v1948, 6
        %v2092 = vpop.permute.xlu0 %2091
        %2093 = vrot.lane.b32.xlu0 %v1949, 6
        %v2094 = vpop.permute.xlu0 %2093
        %2095 = vrot.lane.b32.xlu0 %v1950, 6
        %v2096 = vpop.permute.xlu0 %2095
        %2097 = vrot.lane.b32.xlu0 %v1951, 6
        %v2098 = vpop.permute.xlu0 %2097
        %2099 = vrot.lane.b32.xlu0 %v1952, 6
        %v2100 = vpop.permute.xlu0 %2099
        %2101 = vrot.lane.b32.xlu0 %v1953, 6
        %v2102 = vpop.permute.xlu0 %2101
        %vm2132 = vcmask 97329
        %2133 = vst.msk [vmem:[#allocation2 - $0x1] sm:$0xfe] %vm2132, %v2046
        %vm2134 = vcmask 97328
        %2135 = vst.msk [vmem:[#allocation2 + $0x7] sm:$0xff] %vm2134, %v2048
        %2136 = vst.msk [vmem:[#allocation2 + $0xf] sm:$0xff] %vm2134, %v2050
        %2137 = vst.msk [vmem:[#allocation2 + $0x17] sm:$0xff] %vm2134, %v2052
        %2138 = vst.msk [vmem:[#allocation2 + $0x1f] sm:$0xff] %vm2134, %v2054
        %2139 = vst.msk [vmem:[#allocation2 + $0x27] sm:$0xff] %vm2134, %v2056
        %2140 = vst.msk [vmem:[#allocation2 + $0x2f] sm:$0xff] %vm2134, %v2058
        %2141 = vst.msk [vmem:[#allocation2 + $0x37] sm:$0xff] %vm2134, %v2060
        %2142 = vst.msk [vmem:[#allocation2 + $0x3f] sm:$0xff] %vm2134, %v2062
        %2143 = vst.msk [vmem:[#allocation2 + $0x47] sm:$0xff] %vm2134, %v2064
        %2144 = vst.msk [vmem:[#allocation2 + $0x4f] sm:$0xff] %vm2134, %v2066
        %2145 = vst.msk [vmem:[#allocation2 + $0x57] sm:$0xff] %vm2134, %v2068
        %2146 = vst.msk [vmem:[#allocation2 + $0x5f] sm:$0xff] %vm2134, %v2070
        %2147 = vst.msk [vmem:[#allocation2 + $0x67] sm:$0xff] %vm2134, %v2072
        %2148 = vst.msk [vmem:[#allocation2 + $0x6f] sm:$0xff] %vm2134, %v2074
        %2149 = vst.msk [vmem:[#allocation2 + $0x77] sm:$0xff] %vm2134, %v2076
        %2150 = vst.msk [vmem:[#allocation2 + $0x7f] sm:$0xff] %vm2134, %v2078
        %2151 = vst.msk [vmem:[#allocation2 + $0x87] sm:$0xff] %vm2134, %v2080
        %2152 = vst.msk [vmem:[#allocation2 + $0x8f] sm:$0xff] %vm2134, %v2082
        %2153 = vst.msk [vmem:[#allocation2 + $0x97] sm:$0xff] %vm2134, %v2084
        %2154 = vst.msk [vmem:[#allocation2 + $0x9f] sm:$0xff] %vm2134, %v2086
        %2155 = vst.msk [vmem:[#allocation2 + $0xa7] sm:$0xff] %vm2134, %v2088
        %2156 = vst.msk [vmem:[#allocation2 + $0xaf] sm:$0xff] %vm2134, %v2090
        %2157 = vst.msk [vmem:[#allocation2 + $0xb7] sm:$0xff] %vm2134, %v2092
        %2158 = vst.msk [vmem:[#allocation2 + $0xbf] sm:$0xff] %vm2134, %v2094
        %2159 = vst.msk [vmem:[#allocation2 + $0xc7] sm:$0xff] %vm2134, %v2096
        %2160 = vst.msk [vmem:[#allocation2 + $0xcf] sm:$0xff] %vm2134, %v2098
        %2161 = vst.msk [vmem:[#allocation2 + $0xd7] sm:$0xff] %vm2134, %v2100
        %vm2162 = vcmask 90160
        %2163 = vst.msk [vmem:[#allocation2 + $0xdf] sm:$0x1] %vm2162, %v2102
        %2164 = vrot.lane.b32.xlu0 %v1925, 12
        %v2165 = vpop.permute.xlu0 %2164
        %2166 = vrot.lane.b32.xlu0 %v1926, 12
        %v2167 = vpop.permute.xlu0 %2166
        %2168 = vrot.lane.b32.xlu0 %v1927, 12
        %v2169 = vpop.permute.xlu0 %2168
        %2170 = vrot.lane.b32.xlu0 %v1928, 12
        %v2171 = vpop.permute.xlu0 %2170
        %2172 = vrot.lane.b32.xlu0 %v1929, 12
        %v2173 = vpop.permute.xlu0 %2172
        %2174 = vrot.lane.b32.xlu0 %v1930, 12
        %v2175 = vpop.permute.xlu0 %2174
        %2176 = vrot.lane.b32.xlu0 %v1931, 12
        %v2177 = vpop.permute.xlu0 %2176
        %2178 = vrot.lane.b32.xlu0 %v1932, 12
        %v2179 = vpop.permute.xlu0 %2178
        %2180 = vrot.lane.b32.xlu0 %v1933, 12
        %v2181 = vpop.permute.xlu0 %2180
        %2182 = vrot.lane.b32.xlu0 %v1934, 12
        %v2183 = vpop.permute.xlu0 %2182
        %2184 = vrot.lane.b32.xlu0 %v1935, 12
        %v2185 = vpop.permute.xlu0 %2184
        %2186 = vrot.lane.b32.xlu0 %v1936, 12
        %v2187 = vpop.permute.xlu0 %2186
        %2188 = vrot.lane.b32.xlu0 %v1937, 12
        %v2189 = vpop.permute.xlu0 %2188
        %2190 = vrot.lane.b32.xlu0 %v1938, 12
        %v2191 = vpop.permute.xlu0 %2190
        %2192 = vrot.lane.b32.xlu0 %v1939, 12
        %v2193 = vpop.permute.xlu0 %2192
        %2194 = vrot.lane.b32.xlu0 %v1940, 12
        %v2195 = vpop.permute.xlu0 %2194
        %2196 = vrot.lane.b32.xlu0 %v1941, 12
        %v2197 = vpop.permute.xlu0 %2196
        %2198 = vrot.lane.b32.xlu0 %v1942, 12
        %v2199 = vpop.permute.xlu0 %2198
        %2200 = vrot.lane.b32.xlu0 %v1943, 12
        %v2201 = vpop.permute.xlu0 %2200
        %2202 = vrot.lane.b32.xlu0 %v1944, 12
        %v2203 = vpop.permute.xlu0 %2202
        %2204 = vrot.lane.b32.xlu0 %v1945, 12
        %v2205 = vpop.permute.xlu0 %2204
        %2206 = vrot.lane.b32.xlu0 %v1946, 12
        %v2207 = vpop.permute.xlu0 %2206
        %2208 = vrot.lane.b32.xlu0 %v1947, 12
        %v2209 = vpop.permute.xlu0 %2208
        %2210 = vrot.lane.b32.xlu0 %v1948, 12
        %v2211 = vpop.permute.xlu0 %2210
        %2212 = vrot.lane.b32.xlu0 %v1949, 12
        %v2213 = vpop.permute.xlu0 %2212
        %2214 = vrot.lane.b32.xlu0 %v1950, 12
        %v2215 = vpop.permute.xlu0 %2214
        %2216 = vrot.lane.b32.xlu0 %v1951, 12
        %v2217 = vpop.permute.xlu0 %2216
        %2218 = vrot.lane.b32.xlu0 %v1952, 12
        %v2219 = vpop.permute.xlu0 %2218
        %2220 = vrot.lane.b32.xlu0 %v1953, 12
        %v2221 = vpop.permute.xlu0 %2220
        %vm2251 = vcmask 146530
        %2252 = vst.msk [vmem:[#allocation2 - $0x2] sm:$0xfc] %vm2251, %v2165
        %vm2253 = vcmask 146528
        %2254 = vst.msk [vmem:[#allocation2 + $0x6] sm:$0xff] %vm2253, %v2167
        %2255 = vst.msk [vmem:[#allocation2 + $0xe] sm:$0xff] %vm2253, %v2169
        %2256 = vst.msk [vmem:[#allocation2 + $0x16] sm:$0xff] %vm2253, %v2171
        %2257 = vst.msk [vmem:[#allocation2 + $0x1e] sm:$0xff] %vm2253, %v2173
        %2258 = vst.msk [vmem:[#allocation2 + $0x26] sm:$0xff] %vm2253, %v2175
        %2259 = vst.msk [vmem:[#allocation2 + $0x2e] sm:$0xff] %vm2253, %v2177
        %2260 = vst.msk [vmem:[#allocation2 + $0x36] sm:$0xff] %vm2253, %v2179
        %2261 = vst.msk [vmem:[#allocation2 + $0x3e] sm:$0xff] %vm2253, %v2181
        %2262 = vst.msk [vmem:[#allocation2 + $0x46] sm:$0xff] %vm2253, %v2183
        %2263 = vst.msk [vmem:[#allocation2 + $0x4e] sm:$0xff] %vm2253, %v2185
        %2264 = vst.msk [vmem:[#allocation2 + $0x56] sm:$0xff] %vm2253, %v2187
        %2265 = vst.msk [vmem:[#allocation2 + $0x5e] sm:$0xff] %vm2253, %v2189
        %2266 = vst.msk [vmem:[#allocation2 + $0x66] sm:$0xff] %vm2253, %v2191
        %2267 = vst.msk [vmem:[#allocation2 + $0x6e] sm:$0xff] %vm2253, %v2193
        %2268 = vst.msk [vmem:[#allocation2 + $0x76] sm:$0xff] %vm2253, %v2195
        %2269 = vst.msk [vmem:[#allocation2 + $0x7e] sm:$0xff] %vm2253, %v2197
        %2270 = vst.msk [vmem:[#allocation2 + $0x86] sm:$0xff] %vm2253, %v2199
        %2271 = vst.msk [vmem:[#allocation2 + $0x8e] sm:$0xff] %vm2253, %v2201
        %2272 = vst.msk [vmem:[#allocation2 + $0x96] sm:$0xff] %vm2253, %v2203
        %2273 = vst.msk [vmem:[#allocation2 + $0x9e] sm:$0xff] %vm2253, %v2205
        %2274 = vst.msk [vmem:[#allocation2 + $0xa6] sm:$0xff] %vm2253, %v2207
        %2275 = vst.msk [vmem:[#allocation2 + $0xae] sm:$0xff] %vm2253, %v2209
        %2276 = vst.msk [vmem:[#allocation2 + $0xb6] sm:$0xff] %vm2253, %v2211
        %2277 = vst.msk [vmem:[#allocation2 + $0xbe] sm:$0xff] %vm2253, %v2213
        %2278 = vst.msk [vmem:[#allocation2 + $0xc6] sm:$0xff] %vm2253, %v2215
        %2279 = vst.msk [vmem:[#allocation2 + $0xce] sm:$0xff] %vm2253, %v2217
        %2280 = vst.msk [vmem:[#allocation2 + $0xd6] sm:$0xff] %vm2253, %v2219
        %vm2281 = vcmask 139360
        %2282 = vst.msk [vmem:[#allocation2 + $0xde] sm:$0x1] %vm2281, %v2221
        %2283 = vrot.lane.b32.xlu0 %v1926, 18
        %v2284 = vpop.permute.xlu0 %2283
        %2285 = vrot.lane.b32.xlu0 %v1927, 18
        %v2286 = vpop.permute.xlu0 %2285
        %2287 = vrot.lane.b32.xlu0 %v1928, 18
        %v2288 = vpop.permute.xlu0 %2287
        %2289 = vrot.lane.b32.xlu0 %v1929, 18
        %v2290 = vpop.permute.xlu0 %2289
        %2291 = vrot.lane.b32.xlu0 %v1930, 18
        %v2292 = vpop.permute.xlu0 %2291
        %2293 = vrot.lane.b32.xlu0 %v1931, 18
        %v2294 = vpop.permute.xlu0 %2293
        %2295 = vrot.lane.b32.xlu0 %v1932, 18
        %v2296 = vpop.permute.xlu0 %2295
        %2297 = vrot.lane.b32.xlu0 %v1933, 18
        %v2298 = vpop.permute.xlu0 %2297
        %2299 = vrot.lane.b32.xlu0 %v1934, 18
        %v2300 = vpop.permute.xlu0 %2299
        %2301 = vrot.lane.b32.xlu0 %v1935, 18
        %v2302 = vpop.permute.xlu0 %2301
        %2303 = vrot.lane.b32.xlu0 %v1936, 18
        %v2304 = vpop.permute.xlu0 %2303
        %2305 = vrot.lane.b32.xlu0 %v1937, 18
        %v2306 = vpop.permute.xlu0 %2305
        %2307 = vrot.lane.b32.xlu0 %v1938, 18
        %v2308 = vpop.permute.xlu0 %2307
        %2309 = vrot.lane.b32.xlu0 %v1939, 18
        %v2310 = vpop.permute.xlu0 %2309
        %2311 = vrot.lane.b32.xlu0 %v1940, 18
        %v2312 = vpop.permute.xlu0 %2311
        %2313 = vrot.lane.b32.xlu0 %v1941, 18
        %v2314 = vpop.permute.xlu0 %2313
        %2315 = vrot.lane.b32.xlu0 %v1942, 18
        %v2316 = vpop.permute.xlu0 %2315
        %2317 = vrot.lane.b32.xlu0 %v1943, 18
        %v2318 = vpop.permute.xlu0 %2317
        %2319 = vrot.lane.b32.xlu0 %v1944, 18
        %v2320 = vpop.permute.xlu0 %2319
        %2321 = vrot.lane.b32.xlu0 %v1945, 18
        %v2322 = vpop.permute.xlu0 %2321
        %2323 = vrot.lane.b32.xlu0 %v1946, 18
        %v2324 = vpop.permute.xlu0 %2323
        %2325 = vrot.lane.b32.xlu0 %v1947, 18
        %v2326 = vpop.permute.xlu0 %2325
        %2327 = vrot.lane.b32.xlu0 %v1948, 18
        %v2328 = vpop.permute.xlu0 %2327
        %2329 = vrot.lane.b32.xlu0 %v1949, 18
        %v2330 = vpop.permute.xlu0 %2329
        %2331 = vrot.lane.b32.xlu0 %v1950, 18
        %v2332 = vpop.permute.xlu0 %2331
        %2333 = vrot.lane.b32.xlu0 %v1951, 18
        %v2334 = vpop.permute.xlu0 %2333
        %2335 = vrot.lane.b32.xlu0 %v1952, 18
        %v2336 = vpop.permute.xlu0 %2335
        %2337 = vrot.lane.b32.xlu0 %v1953, 18
        %v2338 = vpop.permute.xlu0 %2337
        %vm2367 = vcmask 195735
        %2368 = vst.msk [vmem:[#allocation2 - $0x7] sm:$0x80] %vm2367, %v2284
        %vm2369 = vcmask 195728
        %2370 = vst.msk [vmem:[#allocation2 + $0x1] sm:$0xff] %vm2369, %v2286
        %2371 = vst.msk [vmem:[#allocation2 + $0x9] sm:$0xff] %vm2369, %v2288
        %2372 = vst.msk [vmem:[#allocation2 + $0x11] sm:$0xff] %vm2369, %v2290
        %2373 = vst.msk [vmem:[#allocation2 + $0x19] sm:$0xff] %vm2369, %v2292
        %2374 = vst.msk [vmem:[#allocation2 + $0x21] sm:$0xff] %vm2369, %v2294
        %2375 = vst.msk [vmem:[#allocation2 + $0x29] sm:$0xff] %vm2369, %v2296
        %2376 = vst.msk [vmem:[#allocation2 + $0x31] sm:$0xff] %vm2369, %v2298
        %2377 = vst.msk [vmem:[#allocation2 + $0x39] sm:$0xff] %vm2369, %v2300
        %2378 = vst.msk [vmem:[#allocation2 + $0x41] sm:$0xff] %vm2369, %v2302
        %2379 = vst.msk [vmem:[#allocation2 + $0x49] sm:$0xff] %vm2369, %v2304
        %2380 = vst.msk [vmem:[#allocation2 + $0x51] sm:$0xff] %vm2369, %v2306
        %2381 = vst.msk [vmem:[#allocation2 + $0x59] sm:$0xff] %vm2369, %v2308
        %2382 = vst.msk [vmem:[#allocation2 + $0x61] sm:$0xff] %vm2369, %v2310
        %2383 = vst.msk [vmem:[#allocation2 + $0x69] sm:$0xff] %vm2369, %v2312
        %2384 = vst.msk [vmem:[#allocation2 + $0x71] sm:$0xff] %vm2369, %v2314
        %2385 = vst.msk [vmem:[#allocation2 + $0x79] sm:$0xff] %vm2369, %v2316
        %2386 = vst.msk [vmem:[#allocation2 + $0x81] sm:$0xff] %vm2369, %v2318
        %2387 = vst.msk [vmem:[#allocation2 + $0x89] sm:$0xff] %vm2369, %v2320
        %2388 = vst.msk [vmem:[#allocation2 + $0x91] sm:$0xff] %vm2369, %v2322
        %2389 = vst.msk [vmem:[#allocation2 + $0x99] sm:$0xff] %vm2369, %v2324
        %2390 = vst.msk [vmem:[#allocation2 + $0xa1] sm:$0xff] %vm2369, %v2326
        %2391 = vst.msk [vmem:[#allocation2 + $0xa9] sm:$0xff] %vm2369, %v2328
        %2392 = vst.msk [vmem:[#allocation2 + $0xb1] sm:$0xff] %vm2369, %v2330
        %2393 = vst.msk [vmem:[#allocation2 + $0xb9] sm:$0xff] %vm2369, %v2332
        %2394 = vst.msk [vmem:[#allocation2 + $0xc1] sm:$0xff] %vm2369, %v2334
        %2395 = vst.msk [vmem:[#allocation2 + $0xc9] sm:$0xff] %vm2369, %v2336
        %vm2396 = vcmask 188560
        %2397 = vst.msk [vmem:[#allocation2 + $0xd1] sm:$0x1] %vm2396, %v2338
        %2398 = vrot.lane.b32.xlu0 %v1927, 24
        %v2399 = vpop.permute.xlu0 %2398
        %2400 = vrot.lane.b32.xlu0 %v1928, 24
        %v2401 = vpop.permute.xlu0 %2400
        %2402 = vrot.lane.b32.xlu0 %v1929, 24
        %v2403 = vpop.permute.xlu0 %2402
        %2404 = vrot.lane.b32.xlu0 %v1930, 24
        %v2405 = vpop.permute.xlu0 %2404
        %2406 = vrot.lane.b32.xlu0 %v1931, 24
        %v2407 = vpop.permute.xlu0 %2406
        %2408 = vrot.lane.b32.xlu0 %v1932, 24
        %v2409 = vpop.permute.xlu0 %2408
        %2410 = vrot.lane.b32.xlu0 %v1933, 24
        %v2411 = vpop.permute.xlu0 %2410
        %2412 = vrot.lane.b32.xlu0 %v1934, 24
        %v2413 = vpop.permute.xlu0 %2412
        %2414 = vrot.lane.b32.xlu0 %v1935, 24
        %v2415 = vpop.permute.xlu0 %2414
        %2416 = vrot.lane.b32.xlu0 %v1936, 24
        %v2417 = vpop.permute.xlu0 %2416
        %2418 = vrot.lane.b32.xlu0 %v1937, 24
        %v2419 = vpop.permute.xlu0 %2418
        %2420 = vrot.lane.b32.xlu0 %v1938, 24
        %v2421 = vpop.permute.xlu0 %2420
        %2422 = vrot.lane.b32.xlu0 %v1939, 24
        %v2423 = vpop.permute.xlu0 %2422
        %2424 = vrot.lane.b32.xlu0 %v1940, 24
        %v2425 = vpop.permute.xlu0 %2424
        %2426 = vrot.lane.b32.xlu0 %v1941, 24
        %v2427 = vpop.permute.xlu0 %2426
        %2428 = vrot.lane.b32.xlu0 %v1942, 24
        %v2429 = vpop.permute.xlu0 %2428
        %2430 = vrot.lane.b32.xlu0 %v1943, 24
        %v2431 = vpop.permute.xlu0 %2430
        %2432 = vrot.lane.b32.xlu0 %v1944, 24
        %v2433 = vpop.permute.xlu0 %2432
        %2434 = vrot.lane.b32.xlu0 %v1945, 24
        %v2435 = vpop.permute.xlu0 %2434
        %2436 = vrot.lane.b32.xlu0 %v1946, 24
        %v2437 = vpop.permute.xlu0 %2436
        %2438 = vrot.lane.b32.xlu0 %v1947, 24
        %v2439 = vpop.permute.xlu0 %2438
        %2440 = vrot.lane.b32.xlu0 %v1948, 24
        %v2441 = vpop.permute.xlu0 %2440
        %2442 = vrot.lane.b32.xlu0 %v1949, 24
        %v2443 = vpop.permute.xlu0 %2442
        %2444 = vrot.lane.b32.xlu0 %v1950, 24
        %v2445 = vpop.permute.xlu0 %2444
        %2446 = vrot.lane.b32.xlu0 %v1951, 24
        %v2447 = vpop.permute.xlu0 %2446
        %2448 = vrot.lane.b32.xlu0 %v1952, 24
        %v2449 = vpop.permute.xlu0 %2448
        %2450 = vrot.lane.b32.xlu0 %v1953, 24
        %v2451 = vpop.permute.xlu0 %2450
        %vm2479 = vcmask 244928
        %2480 = vst.msk [vmem:[#allocation2] sm:$0xff] %vm2479, %v2399
        %2481 = vst.msk [vmem:[#allocation2 + $0x8] sm:$0xff] %vm2479, %v2401
        %2482 = vst.msk [vmem:[#allocation2 + $0x10] sm:$0xff] %vm2479, %v2403
        %2483 = vst.msk [vmem:[#allocation2 + $0x18] sm:$0xff] %vm2479, %v2405
        %2484 = vst.msk [vmem:[#allocation2 + $0x20] sm:$0xff] %vm2479, %v2407
        %2485 = vst.msk [vmem:[#allocation2 + $0x28] sm:$0xff] %vm2479, %v2409
        %2486 = vst.msk [vmem:[#allocation2 + $0x30] sm:$0xff] %vm2479, %v2411
        %2487 = vst.msk [vmem:[#allocation2 + $0x38] sm:$0xff] %vm2479, %v2413
        %2488 = vst.msk [vmem:[#allocation2 + $0x40] sm:$0xff] %vm2479, %v2415
        %2489 = vst.msk [vmem:[#allocation2 + $0x48] sm:$0xff] %vm2479, %v2417
        %2490 = vst.msk [vmem:[#allocation2 + $0x50] sm:$0xff] %vm2479, %v2419
        %2491 = vst.msk [vmem:[#allocation2 + $0x58] sm:$0xff] %vm2479, %v2421
        %2492 = vst.msk [vmem:[#allocation2 + $0x60] sm:$0xff] %vm2479, %v2423
        %2493 = vst.msk [vmem:[#allocation2 + $0x68] sm:$0xff] %vm2479, %v2425
        %2494 = vst.msk [vmem:[#allocation2 + $0x70] sm:$0xff] %vm2479, %v2427
        %2495 = vst.msk [vmem:[#allocation2 + $0x78] sm:$0xff] %vm2479, %v2429
        %2496 = vst.msk [vmem:[#allocation2 + $0x80] sm:$0xff] %vm2479, %v2431
        %2497 = vst.msk [vmem:[#allocation2 + $0x88] sm:$0xff] %vm2479, %v2433
        %2498 = vst.msk [vmem:[#allocation2 + $0x90] sm:$0xff] %vm2479, %v2435
        %2499 = vst.msk [vmem:[#allocation2 + $0x98] sm:$0xff] %vm2479, %v2437
        %2500 = vst.msk [vmem:[#allocation2 + $0xa0] sm:$0xff] %vm2479, %v2439
        %2501 = vst.msk [vmem:[#allocation2 + $0xa8] sm:$0xff] %vm2479, %v2441
        %2502 = vst.msk [vmem:[#allocation2 + $0xb0] sm:$0xff] %vm2479, %v2443
        %2503 = vst.msk [vmem:[#allocation2 + $0xb8] sm:$0xff] %vm2479, %v2445
        %2504 = vst.msk [vmem:[#allocation2 + $0xc0] sm:$0xff] %vm2479, %v2447
        %2505 = vst.msk [vmem:[#allocation2 + $0xc8] sm:$0xff] %vm2479, %v2449
        %vm2506 = vcmask 237760
        %2507 = vst.msk [vmem:[#allocation2 + $0xd0] sm:$0x1] %vm2506, %v2451
        %2508 = vrot.lane.b32.xlu0 %v1927, 30
        %v2509 = vpop.permute.xlu0 %2508
        %2510 = vrot.lane.b32.xlu0 %v1928, 30
        %v2511 = vpop.permute.xlu0 %2510
        %2512 = vrot.lane.b32.xlu0 %v1929, 30
        %v2513 = vpop.permute.xlu0 %2512
        %2514 = vrot.lane.b32.xlu0 %v1930, 30
        %v2515 = vpop.permute.xlu0 %2514
        %2516 = vrot.lane.b32.xlu0 %v1931, 30
        %v2517 = vpop.permute.xlu0 %2516
        %2518 = vrot.lane.b32.xlu0 %v1932, 30
        %v2519 = vpop.permute.xlu0 %2518
        %2520 = vrot.lane.b32.xlu0 %v1933, 30
        %v2521 = vpop.permute.xlu0 %2520
        %2522 = vrot.lane.b32.xlu0 %v1934, 30
        %v2523 = vpop.permute.xlu0 %2522
        %2524 = vrot.lane.b32.xlu0 %v1935, 30
        %v2525 = vpop.permute.xlu0 %2524
        %2526 = vrot.lane.b32.xlu0 %v1936, 30
        %v2527 = vpop.permute.xlu0 %2526
        %2528 = vrot.lane.b32.xlu0 %v1937, 30
        %v2529 = vpop.permute.xlu0 %2528
        %2530 = vrot.lane.b32.xlu0 %v1938, 30
        %v2531 = vpop.permute.xlu0 %2530
        %2532 = vrot.lane.b32.xlu0 %v1939, 30
        %v2533 = vpop.permute.xlu0 %2532
        %2534 = vrot.lane.b32.xlu0 %v1940, 30
        %v2535 = vpop.permute.xlu0 %2534
        %2536 = vrot.lane.b32.xlu0 %v1941, 30
        %v2537 = vpop.permute.xlu0 %2536
        %2538 = vrot.lane.b32.xlu0 %v1942, 30
        %v2539 = vpop.permute.xlu0 %2538
        %2540 = vrot.lane.b32.xlu0 %v1943, 30
        %v2541 = vpop.permute.xlu0 %2540
        %2542 = vrot.lane.b32.xlu0 %v1944, 30
        %v2543 = vpop.permute.xlu0 %2542
        %2544 = vrot.lane.b32.xlu0 %v1945, 30
        %v2545 = vpop.permute.xlu0 %2544
        %2546 = vrot.lane.b32.xlu0 %v1946, 30
        %v2547 = vpop.permute.xlu0 %2546
        %2548 = vrot.lane.b32.xlu0 %v1947, 30
        %v2549 = vpop.permute.xlu0 %2548
        %2550 = vrot.lane.b32.xlu0 %v1948, 30
        %v2551 = vpop.permute.xlu0 %2550
        %2552 = vrot.lane.b32.xlu0 %v1949, 30
        %v2553 = vpop.permute.xlu0 %2552
        %2554 = vrot.lane.b32.xlu0 %v1950, 30
        %v2555 = vpop.permute.xlu0 %2554
        %2556 = vrot.lane.b32.xlu0 %v1951, 30
        %v2557 = vpop.permute.xlu0 %2556
        %2558 = vrot.lane.b32.xlu0 %v1952, 30
        %v2559 = vpop.permute.xlu0 %2558
        %2560 = vrot.lane.b32.xlu0 %v1953, 30
        %v2561 = vpop.permute.xlu0 %2560
        %vm2589 = vcmask 294129
        %2590 = vst.msk [vmem:[#allocation2 - $0x1] sm:$0xfe] %vm2589, %v2509
        %vm2591 = vcmask 294128
        %2592 = vst.msk [vmem:[#allocation2 + $0x7] sm:$0xff] %vm2591, %v2511
        %2593 = vst.msk [vmem:[#allocation2 + $0xf] sm:$0xff] %vm2591, %v2513
        %2594 = vst.msk [vmem:[#allocation2 + $0x17] sm:$0xff] %vm2591, %v2515
        %2595 = vst.msk [vmem:[#allocation2 + $0x1f] sm:$0xff] %vm2591, %v2517
        %2596 = vst.msk [vmem:[#allocation2 + $0x27] sm:$0xff] %vm2591, %v2519
        %2597 = vst.msk [vmem:[#allocation2 + $0x2f] sm:$0xff] %vm2591, %v2521
        %2598 = vst.msk [vmem:[#allocation2 + $0x37] sm:$0xff] %vm2591, %v2523
        %2599 = vst.msk [vmem:[#allocation2 + $0x3f] sm:$0xff] %vm2591, %v2525
        %2600 = vst.msk [vmem:[#allocation2 + $0x47] sm:$0xff] %vm2591, %v2527
        %2601 = vst.msk [vmem:[#allocation2 + $0x4f] sm:$0xff] %vm2591, %v2529
        %2602 = vst.msk [vmem:[#allocation2 + $0x57] sm:$0xff] %vm2591, %v2531
        %2603 = vst.msk [vmem:[#allocation2 + $0x5f] sm:$0xff] %vm2591, %v2533
        %2604 = vst.msk [vmem:[#allocation2 + $0x67] sm:$0xff] %vm2591, %v2535
        %2605 = vst.msk [vmem:[#allocation2 + $0x6f] sm:$0xff] %vm2591, %v2537
        %2606 = vst.msk [vmem:[#allocation2 + $0x77] sm:$0xff] %vm2591, %v2539
        %2607 = vst.msk [vmem:[#allocation2 + $0x7f] sm:$0xff] %vm2591, %v2541
        %2608 = vst.msk [vmem:[#allocation2 + $0x87] sm:$0xff] %vm2591, %v2543
        %2609 = vst.msk [vmem:[#allocation2 + $0x8f] sm:$0xff] %vm2591, %v2545
        %2610 = vst.msk [vmem:[#allocation2 + $0x97] sm:$0xff] %vm2591, %v2547
        %2611 = vst.msk [vmem:[#allocation2 + $0x9f] sm:$0xff] %vm2591, %v2549
        %2612 = vst.msk [vmem:[#allocation2 + $0xa7] sm:$0xff] %vm2591, %v2551
        %2613 = vst.msk [vmem:[#allocation2 + $0xaf] sm:$0xff] %vm2591, %v2553
        %2614 = vst.msk [vmem:[#allocation2 + $0xb7] sm:$0xff] %vm2591, %v2555
        %2615 = vst.msk [vmem:[#allocation2 + $0xbf] sm:$0xff] %vm2591, %v2557
        %2616 = vst.msk [vmem:[#allocation2 + $0xc7] sm:$0xff] %vm2591, %v2559
        %vm2617 = vcmask 286960
        %2618 = vst.msk [vmem:[#allocation2 + $0xcf] sm:$0x1] %vm2617, %v2561
        %2619 = vrot.lane.b32.xlu0 %v1928, 36
        %v2620 = vpop.permute.xlu0 %2619
        %2621 = vrot.lane.b32.xlu0 %v1929, 36
        %v2622 = vpop.permute.xlu0 %2621
        %2623 = vrot.lane.b32.xlu0 %v1930, 36
        %v2624 = vpop.permute.xlu0 %2623
        %2625 = vrot.lane.b32.xlu0 %v1931, 36
        %v2626 = vpop.permute.xlu0 %2625
        %2627 = vrot.lane.b32.xlu0 %v1932, 36
        %v2628 = vpop.permute.xlu0 %2627
        %2629 = vrot.lane.b32.xlu0 %v1933, 36
        %v2630 = vpop.permute.xlu0 %2629
        %2631 = vrot.lane.b32.xlu0 %v1934, 36
        %v2632 = vpop.permute.xlu0 %2631
        %2633 = vrot.lane.b32.xlu0 %v1935, 36
        %v2634 = vpop.permute.xlu0 %2633
        %2635 = vrot.lane.b32.xlu0 %v1936, 36
        %v2636 = vpop.permute.xlu0 %2635
        %2637 = vrot.lane.b32.xlu0 %v1937, 36
        %v2638 = vpop.permute.xlu0 %2637
        %2639 = vrot.lane.b32.xlu0 %v1938, 36
        %v2640 = vpop.permute.xlu0 %2639
        %2641 = vrot.lane.b32.xlu0 %v1939, 36
        %v2642 = vpop.permute.xlu0 %2641
        %2643 = vrot.lane.b32.xlu0 %v1940, 36
        %v2644 = vpop.permute.xlu0 %2643
        %2645 = vrot.lane.b32.xlu0 %v1941, 36
        %v2646 = vpop.permute.xlu0 %2645
        %2647 = vrot.lane.b32.xlu0 %v1942, 36
        %v2648 = vpop.permute.xlu0 %2647
        %2649 = vrot.lane.b32.xlu0 %v1943, 36
        %v2650 = vpop.permute.xlu0 %2649
        %2651 = vrot.lane.b32.xlu0 %v1944, 36
        %v2652 = vpop.permute.xlu0 %2651
        %2653 = vrot.lane.b32.xlu0 %v1945, 36
        %v2654 = vpop.permute.xlu0 %2653
        %2655 = vrot.lane.b32.xlu0 %v1946, 36
        %v2656 = vpop.permute.xlu0 %2655
        %2657 = vrot.lane.b32.xlu0 %v1947, 36
        %v2658 = vpop.permute.xlu0 %2657
        %2659 = vrot.lane.b32.xlu0 %v1948, 36
        %v2660 = vpop.permute.xlu0 %2659
        %2661 = vrot.lane.b32.xlu0 %v1949, 36
        %v2662 = vpop.permute.xlu0 %2661
        %2663 = vrot.lane.b32.xlu0 %v1950, 36
        %v2664 = vpop.permute.xlu0 %2663
        %2665 = vrot.lane.b32.xlu0 %v1951, 36
        %v2666 = vpop.permute.xlu0 %2665
        %2667 = vrot.lane.b32.xlu0 %v1952, 36
        %v2668 = vpop.permute.xlu0 %2667
        %2669 = vrot.lane.b32.xlu0 %v1953, 36
        %v2670 = vpop.permute.xlu0 %2669
        %vm2697 = vcmask 343334
        %2698 = vst.msk [vmem:[#allocation2 - $0x6] sm:$0xc0] %vm2697, %v2620
        %vm2699 = vcmask 343328
        %2700 = vst.msk [vmem:[#allocation2 + $0x2] sm:$0xff] %vm2699, %v2622
        %2701 = vst.msk [vmem:[#allocation2 + $0xa] sm:$0xff] %vm2699, %v2624
        %2702 = vst.msk [vmem:[#allocation2 + $0x12] sm:$0xff] %vm2699, %v2626
        %2703 = vst.msk [vmem:[#allocation2 + $0x1a] sm:$0xff] %vm2699, %v2628
        %2704 = vst.msk [vmem:[#allocation2 + $0x22] sm:$0xff] %vm2699, %v2630
        %2705 = vst.msk [vmem:[#allocation2 + $0x2a] sm:$0xff] %vm2699, %v2632
        %2706 = vst.msk [vmem:[#allocation2 + $0x32] sm:$0xff] %vm2699, %v2634
        %2707 = vst.msk [vmem:[#allocation2 + $0x3a] sm:$0xff] %vm2699, %v2636
        %2708 = vst.msk [vmem:[#allocation2 + $0x42] sm:$0xff] %vm2699, %v2638
        %2709 = vst.msk [vmem:[#allocation2 + $0x4a] sm:$0xff] %vm2699, %v2640
        %2710 = vst.msk [vmem:[#allocation2 + $0x52] sm:$0xff] %vm2699, %v2642
        %2711 = vst.msk [vmem:[#allocation2 + $0x5a] sm:$0xff] %vm2699, %v2644
        %2712 = vst.msk [vmem:[#allocation2 + $0x62] sm:$0xff] %vm2699, %v2646
        %2713 = vst.msk [vmem:[#allocation2 + $0x6a] sm:$0xff] %vm2699, %v2648
        %2714 = vst.msk [vmem:[#allocation2 + $0x72] sm:$0xff] %vm2699, %v2650
        %2715 = vst.msk [vmem:[#allocation2 + $0x7a] sm:$0xff] %vm2699, %v2652
        %2716 = vst.msk [vmem:[#allocation2 + $0x82] sm:$0xff] %vm2699, %v2654
        %2717 = vst.msk [vmem:[#allocation2 + $0x8a] sm:$0xff] %vm2699, %v2656
        %2718 = vst.msk [vmem:[#allocation2 + $0x92] sm:$0xff] %vm2699, %v2658
        %2719 = vst.msk [vmem:[#allocation2 + $0x9a] sm:$0xff] %vm2699, %v2660
        %2720 = vst.msk [vmem:[#allocation2 + $0xa2] sm:$0xff] %vm2699, %v2662
        %2721 = vst.msk [vmem:[#allocation2 + $0xaa] sm:$0xff] %vm2699, %v2664
        %2722 = vst.msk [vmem:[#allocation2 + $0xb2] sm:$0xff] %vm2699, %v2666
        %2723 = vst.msk [vmem:[#allocation2 + $0xba] sm:$0xff] %vm2699, %v2668
        %vm2724 = vcmask 336160
        %2725 = vst.msk [vmem:[#allocation2 + $0xc2] sm:$0x1] %vm2724, %v2670
        %2726 = vrot.lane.b32.xlu0 %v1928, 42
        %v2727 = vpop.permute.xlu0 %2726
        %2728 = vrot.lane.b32.xlu0 %v1929, 42
        %v2729 = vpop.permute.xlu0 %2728
        %2730 = vrot.lane.b32.xlu0 %v1930, 42
        %v2731 = vpop.permute.xlu0 %2730
        %2732 = vrot.lane.b32.xlu0 %v1931, 42
        %v2733 = vpop.permute.xlu0 %2732
        %2734 = vrot.lane.b32.xlu0 %v1932, 42
        %v2735 = vpop.permute.xlu0 %2734
        %2736 = vrot.lane.b32.xlu0 %v1933, 42
        %v2737 = vpop.permute.xlu0 %2736
        %2738 = vrot.lane.b32.xlu0 %v1934, 42
        %v2739 = vpop.permute.xlu0 %2738
        %2740 = vrot.lane.b32.xlu0 %v1935, 42
        %v2741 = vpop.permute.xlu0 %2740
        %2742 = vrot.lane.b32.xlu0 %v1936, 42
        %v2743 = vpop.permute.xlu0 %2742
        %2744 = vrot.lane.b32.xlu0 %v1937, 42
        %v2745 = vpop.permute.xlu0 %2744
        %2746 = vrot.lane.b32.xlu0 %v1938, 42
        %v2747 = vpop.permute.xlu0 %2746
        %2748 = vrot.lane.b32.xlu0 %v1939, 42
        %v2749 = vpop.permute.xlu0 %2748
        %2750 = vrot.lane.b32.xlu0 %v1940, 42
        %v2751 = vpop.permute.xlu0 %2750
        %2752 = vrot.lane.b32.xlu0 %v1941, 42
        %v2753 = vpop.permute.xlu0 %2752
        %2754 = vrot.lane.b32.xlu0 %v1942, 42
        %v2755 = vpop.permute.xlu0 %2754
        %2756 = vrot.lane.b32.xlu0 %v1943, 42
        %v2757 = vpop.permute.xlu0 %2756
        %2758 = vrot.lane.b32.xlu0 %v1944, 42
        %v2759 = vpop.permute.xlu0 %2758
        %2760 = vrot.lane.b32.xlu0 %v1945, 42
        %v2761 = vpop.permute.xlu0 %2760
        %2762 = vrot.lane.b32.xlu0 %v1946, 42
        %v2763 = vpop.permute.xlu0 %2762
        %2764 = vrot.lane.b32.xlu0 %v1947, 42
        %v2765 = vpop.permute.xlu0 %2764
        %2766 = vrot.lane.b32.xlu0 %v1948, 42
        %v2767 = vpop.permute.xlu0 %2766
        %2768 = vrot.lane.b32.xlu0 %v1949, 42
        %v2769 = vpop.permute.xlu0 %2768
        %2770 = vrot.lane.b32.xlu0 %v1950, 42
        %v2771 = vpop.permute.xlu0 %2770
        %2772 = vrot.lane.b32.xlu0 %v1951, 42
        %v2773 = vpop.permute.xlu0 %2772
        %2774 = vrot.lane.b32.xlu0 %v1952, 42
        %v2775 = vpop.permute.xlu0 %2774
        %2776 = vrot.lane.b32.xlu0 %v1953, 42
        %v2777 = vpop.permute.xlu0 %2776
        %vm2804 = vcmask 392535
        %2805 = vst.msk [vmem:[#allocation2 - $0x7] sm:$0x80] %vm2804, %v2727
        %vm2806 = vcmask 392528
        %2807 = vst.msk [vmem:[#allocation2 + $0x1] sm:$0xff] %vm2806, %v2729
        %2808 = vst.msk [vmem:[#allocation2 + $0x9] sm:$0xff] %vm2806, %v2731
        %2809 = vst.msk [vmem:[#allocation2 + $0x11] sm:$0xff] %vm2806, %v2733
        %2810 = vst.msk [vmem:[#allocation2 + $0x19] sm:$0xff] %vm2806, %v2735
        %2811 = vst.msk [vmem:[#allocation2 + $0x21] sm:$0xff] %vm2806, %v2737
        %2812 = vst.msk [vmem:[#allocation2 + $0x29] sm:$0xff] %vm2806, %v2739
        %2813 = vst.msk [vmem:[#allocation2 + $0x31] sm:$0xff] %vm2806, %v2741
        %2814 = vst.msk [vmem:[#allocation2 + $0x39] sm:$0xff] %vm2806, %v2743
        %2815 = vst.msk [vmem:[#allocation2 + $0x41] sm:$0xff] %vm2806, %v2745
        %2816 = vst.msk [vmem:[#allocation2 + $0x49] sm:$0xff] %vm2806, %v2747
        %2817 = vst.msk [vmem:[#allocation2 + $0x51] sm:$0xff] %vm2806, %v2749
        %2818 = vst.msk [vmem:[#allocation2 + $0x59] sm:$0xff] %vm2806, %v2751
        %2819 = vst.msk [vmem:[#allocation2 + $0x61] sm:$0xff] %vm2806, %v2753
        %2820 = vst.msk [vmem:[#allocation2 + $0x69] sm:$0xff] %vm2806, %v2755
        %2821 = vst.msk [vmem:[#allocation2 + $0x71] sm:$0xff] %vm2806, %v2757
        %2822 = vst.msk [vmem:[#allocation2 + $0x79] sm:$0xff] %vm2806, %v2759
        %2823 = vst.msk [vmem:[#allocation2 + $0x81] sm:$0xff] %vm2806, %v2761
        %2824 = vst.msk [vmem:[#allocation2 + $0x89] sm:$0xff] %vm2806, %v2763
        %2825 = vst.msk [vmem:[#allocation2 + $0x91] sm:$0xff] %vm2806, %v2765
        %2826 = vst.msk [vmem:[#allocation2 + $0x99] sm:$0xff] %vm2806, %v2767
        %2827 = vst.msk [vmem:[#allocation2 + $0xa1] sm:$0xff] %vm2806, %v2769
        %2828 = vst.msk [vmem:[#allocation2 + $0xa9] sm:$0xff] %vm2806, %v2771
        %2829 = vst.msk [vmem:[#allocation2 + $0xb1] sm:$0xff] %vm2806, %v2773
        %2830 = vst.msk [vmem:[#allocation2 + $0xb9] sm:$0xff] %vm2806, %v2775
        %vm2831 = vcmask 385360
        %2832 = vst.msk [vmem:[#allocation2 + $0xc1] sm:$0x1] %vm2831, %v2777
        %2833 = vrot.lane.b32.xlu0 %v1929, 48
        %v2834 = vpop.permute.xlu0 %2833
        %2835 = vrot.lane.b32.xlu0 %v1930, 48
        %v2836 = vpop.permute.xlu0 %2835
        %2837 = vrot.lane.b32.xlu0 %v1931, 48
        %v2838 = vpop.permute.xlu0 %2837
        %2839 = vrot.lane.b32.xlu0 %v1932, 48
        %v2840 = vpop.permute.xlu0 %2839
        %2841 = vrot.lane.b32.xlu0 %v1933, 48
        %v2842 = vpop.permute.xlu0 %2841
        %2843 = vrot.lane.b32.xlu0 %v1934, 48
        %v2844 = vpop.permute.xlu0 %2843
        %2845 = vrot.lane.b32.xlu0 %v1935, 48
        %v2846 = vpop.permute.xlu0 %2845
        %2847 = vrot.lane.b32.xlu0 %v1936, 48
        %v2848 = vpop.permute.xlu0 %2847
        %2849 = vrot.lane.b32.xlu0 %v1937, 48
        %v2850 = vpop.permute.xlu0 %2849
        %2851 = vrot.lane.b32.xlu0 %v1938, 48
        %v2852 = vpop.permute.xlu0 %2851
        %2853 = vrot.lane.b32.xlu0 %v1939, 48
        %v2854 = vpop.permute.xlu0 %2853
        %2855 = vrot.lane.b32.xlu0 %v1940, 48
        %v2856 = vpop.permute.xlu0 %2855
        %2857 = vrot.lane.b32.xlu0 %v1941, 48
        %v2858 = vpop.permute.xlu0 %2857
        %2859 = vrot.lane.b32.xlu0 %v1942, 48
        %v2860 = vpop.permute.xlu0 %2859
        %2861 = vrot.lane.b32.xlu0 %v1943, 48
        %v2862 = vpop.permute.xlu0 %2861
        %2863 = vrot.lane.b32.xlu0 %v1944, 48
        %v2864 = vpop.permute.xlu0 %2863
        %2865 = vrot.lane.b32.xlu0 %v1945, 48
        %v2866 = vpop.permute.xlu0 %2865
        %2867 = vrot.lane.b32.xlu0 %v1946, 48
        %v2868 = vpop.permute.xlu0 %2867
        %2869 = vrot.lane.b32.xlu0 %v1947, 48
        %v2870 = vpop.permute.xlu0 %2869
        %2871 = vrot.lane.b32.xlu0 %v1948, 48
        %v2872 = vpop.permute.xlu0 %2871
        %2873 = vrot.lane.b32.xlu0 %v1949, 48
        %v2874 = vpop.permute.xlu0 %2873
        %2875 = vrot.lane.b32.xlu0 %v1950, 48
        %v2876 = vpop.permute.xlu0 %2875
        %2877 = vrot.lane.b32.xlu0 %v1951, 48
        %v2878 = vpop.permute.xlu0 %2877
        %2879 = vrot.lane.b32.xlu0 %v1952, 48
        %v2880 = vpop.permute.xlu0 %2879
        %2881 = vrot.lane.b32.xlu0 %v1953, 48
        %v2882 = vpop.permute.xlu0 %2881
        %vm2908 = vcmask 441728
        %2909 = vst.msk [vmem:[#allocation2] sm:$0xff] %vm2908, %v2834
        %2910 = vst.msk [vmem:[#allocation2 + $0x8] sm:$0xff] %vm2908, %v2836
        %2911 = vst.msk [vmem:[#allocation2 + $0x10] sm:$0xff] %vm2908, %v2838
        %2912 = vst.msk [vmem:[#allocation2 + $0x18] sm:$0xff] %vm2908, %v2840
        %2913 = vst.msk [vmem:[#allocation2 + $0x20] sm:$0xff] %vm2908, %v2842
        %2914 = vst.msk [vmem:[#allocation2 + $0x28] sm:$0xff] %vm2908, %v2844
        %2915 = vst.msk [vmem:[#allocation2 + $0x30] sm:$0xff] %vm2908, %v2846
        %2916 = vst.msk [vmem:[#allocation2 + $0x38] sm:$0xff] %vm2908, %v2848
        %2917 = vst.msk [vmem:[#allocation2 + $0x40] sm:$0xff] %vm2908, %v2850
        %2918 = vst.msk [vmem:[#allocation2 + $0x48] sm:$0xff] %vm2908, %v2852
        %2919 = vst.msk [vmem:[#allocation2 + $0x50] sm:$0xff] %vm2908, %v2854
        %2920 = vst.msk [vmem:[#allocation2 + $0x58] sm:$0xff] %vm2908, %v2856
        %2921 = vst.msk [vmem:[#allocation2 + $0x60] sm:$0xff] %vm2908, %v2858
        %2922 = vst.msk [vmem:[#allocation2 + $0x68] sm:$0xff] %vm2908, %v2860
        %2923 = vst.msk [vmem:[#allocation2 + $0x70] sm:$0xff] %vm2908, %v2862
        %2924 = vst.msk [vmem:[#allocation2 + $0x78] sm:$0xff] %vm2908, %v2864
        %2925 = vst.msk [vmem:[#allocation2 + $0x80] sm:$0xff] %vm2908, %v2866
        %2926 = vst.msk [vmem:[#allocation2 + $0x88] sm:$0xff] %vm2908, %v2868
        %2927 = vst.msk [vmem:[#allocation2 + $0x90] sm:$0xff] %vm2908, %v2870
        %2928 = vst.msk [vmem:[#allocation2 + $0x98] sm:$0xff] %vm2908, %v2872
        %2929 = vst.msk [vmem:[#allocation2 + $0xa0] sm:$0xff] %vm2908, %v2874
        %2930 = vst.msk [vmem:[#allocation2 + $0xa8] sm:$0xff] %vm2908, %v2876
        %2931 = vst.msk [vmem:[#allocation2 + $0xb0] sm:$0xff] %vm2908, %v2878
        %2932 = vst.msk [vmem:[#allocation2 + $0xb8] sm:$0xff] %vm2908, %v2880
        %vm2933 = vcmask 434560
        %2934 = vst.msk [vmem:[#allocation2 + $0xc0] sm:$0x1] %vm2933, %v2882
        %v2935 = vld [vmem:[#allocation2] sm:$0xff]
        %v2936 = vld [vmem:[#allocation2 + $0x8] sm:$0xff]
        %v2937 = vld [vmem:[#allocation2 + $0x10] sm:$0xff]
        %v2938 = vld [vmem:[#allocation2 + $0x18] sm:$0xff]
        %v2939 = vld [vmem:[#allocation2 + $0x20] sm:$0xff]
        %v2940 = vld [vmem:[#allocation2 + $0x28] sm:$0xff]
        %v2941 = vld [vmem:[#allocation2 + $0x30] sm:$0xff]
        %v2942 = vld [vmem:[#allocation2 + $0x38] sm:$0xff]
        %v2943 = vld [vmem:[#allocation2 + $0x40] sm:$0xff]
        %v2944 = vld [vmem:[#allocation2 + $0x48] sm:$0xff]
        %v2945 = vld [vmem:[#allocation2 + $0x50] sm:$0xff]
        %v2946 = vld [vmem:[#allocation2 + $0x58] sm:$0xff]
        %v2947 = vld [vmem:[#allocation2 + $0x60] sm:$0xff]
        %v2948 = vld [vmem:[#allocation2 + $0x68] sm:$0xff]
        %v2949 = vld [vmem:[#allocation2 + $0x70] sm:$0xff]
        %v2950 = vld [vmem:[#allocation2 + $0x78] sm:$0xff]
        %v2951 = vld [vmem:[#allocation2 + $0x80] sm:$0xff]
        %v2952 = vld [vmem:[#allocation2 + $0x88] sm:$0xff]
        %v2953 = vld [vmem:[#allocation2 + $0x90] sm:$0xff]
        %v2954 = vld [vmem:[#allocation2 + $0x98] sm:$0xff]
        %v2955 = vld [vmem:[#allocation2 + $0xa0] sm:$0xff]
        %v2956 = vld [vmem:[#allocation2 + $0xa8] sm:$0xff]
        %v2957 = vld [vmem:[#allocation2 + $0xb0] sm:$0xff]
        %v2958 = vld [vmem:[#allocation2 + $0xb8] sm:$0xff]
        %v2959 = vld [vmem:[#allocation2 + $0xc0] sm:$0xff]
        %v2960 = vld [vmem:[#allocation2 + $0xc8] sm:$0xff]
        %v2961 = vld [vmem:[#allocation2 + $0xd0] sm:$0xff]
        %v2962 = vld [vmem:[#allocation2 + $0xd8] sm:$0xff]
        %v2963 = vld [vmem:[#allocation2 + $0xe0] sm:$0x1]
        %v2964 = vpack.c.bf16 %v2936, %v2935
        %v2965 = vpack.c.bf16 %v2938, %v2937
        %v2966 = vpack.c.bf16 %v2940, %v2939
        %v2967 = vpack.c.bf16 %v2942, %v2941
        %v2968 = vpack.c.bf16 %v2944, %v2943
        %v2969 = vpack.c.bf16 %v2946, %v2945
        %v2970 = vpack.c.bf16 %v2948, %v2947
        %v2971 = vpack.c.bf16 %v2950, %v2949
        %v2972 = vpack.c.bf16 %v2952, %v2951
        %v2973 = vpack.c.bf16 %v2954, %v2953
        %v2974 = vpack.c.bf16 %v2956, %v2955
        %v2975 = vpack.c.bf16 %v2958, %v2957
        %v2976 = vpack.c.bf16 %v2960, %v2959
        %v2977 = vpack.c.bf16 %v2962, %v2961
        %v2978 = vpack.c.bf16 %v2963, %v2963
        %v2979 = vld [vmem:[%s3] sm:$0xf]
        %v2980 = vld [vmem:[%s3 + $0x4] sm:$0xf]
        %v2981 = vld [vmem:[%s3 + $0x8] sm:$0xf]
        %v2982 = vld [vmem:[%s3 + $0xc] sm:$0xf]
        %v2983 = vld [vmem:[%s3 + $0x10] sm:$0xf]
        %v2984 = vld [vmem:[%s3 + $0x14] sm:$0xf]
        %v2985 = vld [vmem:[%s3 + $0x18] sm:$0x7]
        %v2993 = vunpack.c.l.b16 %v2979
        %v2994 = vunpack.c.l.b16 %v2980
        %v2995 = vunpack.c.l.b16 %v2981
        %v2996 = vunpack.c.l.b16 %v2982
        %v2997 = vunpack.c.l.b16 %v2983
        %v2998 = vunpack.c.l.b16 %v2984
        %v2999 = vunpack.c.l.b16 %v2985
        %v3000 = vpack.c.b16 %v2994, %v2993
        %v3001 = vpack.c.b16 %v2996, %v2995
        %v3002 = vpack.c.b16 %v2998, %v2997
        %v3003 = vpack.c.b16 %v2999, %v2999
        %v3008 = vsel %vm1954, %v2964, 0
        %v3011 = vsel %vm1954, %v2965, 0
        %v3014 = vsel %vm1954, %v2966, 0
        %v3017 = vsel %vm1954, %v2967, 0
        %v3020 = vsel %vm1954, %v2968, 0
        %v3023 = vsel %vm1954, %v2969, 0
        %v3026 = vsel %vm1954, %v2970, 0
        %v3029 = vsel %vm1954, %v2971, 0
        %v3032 = vsel %vm1954, %v2972, 0
        %v3035 = vsel %vm1954, %v2973, 0
        %v3038 = vsel %vm1954, %v2974, 0
        %v3041 = vsel %vm1954, %v2975, 0
        %v3044 = vsel %vm1954, %v2976, 0
        %v3047 = vsel %vm1954, %v2977, 0
        %v3050 = vsel %vm1954, %v2978, 0
        %vm3052 = vcmask 1042432
        %v3054 = vsel %vm3052, %v3003, 0
        %3056 = vmatprep.subr.bf16.mxu0 0
        %3057 = vmatpush1.bf16.msra.mxu0 %v3000
        %3058 = vmatprep.subr.bf16.mxu0 0
        %3059 = vmatpush1.bf16.msra.mxu0 %v3001
        %3060 = vmatprep.subr.bf16.mxu0 0
        %3061 = vmatpush1.bf16.msra.mxu0 %v3002
        %3062 = vmatprep.subr.bf16.mxu0 0
        %3063 = vmatpush1.bf16.msra.mxu0 %v3054
        %3064 = vmatprep.subr.bf16.mxu0 0
        %3065 = vmatpush1.bf16.msra.mxu0 0
        %3066 = vmatprep.subr.bf16.mxu0 0
        %3067 = vmatpush1.bf16.msra.mxu0 0
        %3068 = vmatprep.subr.bf16.mxu0 0
        %3069 = vmatpush1.bf16.msra.mxu0 0
        %3070 = vmatprep.subr.bf16.mxu0 0
        %3071 = vmatpush1.bf16.msra.mxu0 0
        %3072 = vmatprep.subr.bf16.mxu0 0
        %3073 = vmatpush1.bf16.msra.mxu0 0
        %3074 = vmatprep.subr.bf16.mxu0 0
        %3075 = vmatpush1.bf16.msra.mxu0 0
        %3076 = vmatprep.subr.bf16.mxu0 0
        %3077 = vmatpush1.bf16.msra.mxu0 0
        %3078 = vmatprep.subr.bf16.mxu0 0
        %3079 = vmatpush1.bf16.msra.mxu0 0
        %3080 = vmatprep.subr.bf16.mxu0 0
        %3081 = vmatpush1.bf16.msra.mxu0 0
        %3082 = vmatprep.subr.bf16.mxu0 0
        %3083 = vmatpush1.bf16.msra.mxu0 0
        %3084 = vmatprep.subr.bf16.mxu0 0
        %3085 = vmatpush1.bf16.msra.mxu0 0
        %3086 = vmatprep.subr.bf16.mxu0 0
        %3087 = vmatpush1.bf16.msra.mxu0 0
        %3088 = vmatprep.mubr.bf16.mxu0 0
        %3089 = vmatmul.mubr.bf16.gmra.mrb[0].mxu0 %v3008
        %v3090 = vpop.f32.mrb[0].mxu0
        %v3091 = vadd.f32 0.0, %v3090
        %v3092 = vpop.f32.mrb[0].mxu0
        %v3093 = vpop.f32.mrb[0].mxu0
        %v3094 = vadd.f32 0.0, %v3093
        %v3095 = vpop.f32.mrb[0].mxu0
        %3096 = vmatprep.mubr.bf16.mxu0 0
        %3097 = vmatmul.mubr.bf16.gmra.mrb[0].mxu0 %v3011
        %v3098 = vpop.f32.mrb[0].mxu0
        %v3099 = vadd.f32 0.0, %v3098
        %v3100 = vpop.f32.mrb[0].mxu0
        %v3101 = vpop.f32.mrb[0].mxu0
        %v3102 = vadd.f32 0.0, %v3101
        %v3103 = vpop.f32.mrb[0].mxu0
        %3104 = vmatprep.mubr.bf16.mxu0 0
        %3105 = vmatmul.mubr.bf16.gmra.mrb[0].mxu0 %v3014
        %v3106 = vpop.f32.mrb[0].mxu0
        %v3107 = vadd.f32 0.0, %v3106
        %v3108 = vpop.f32.mrb[0].mxu0
        %v3109 = vpop.f32.mrb[0].mxu0
        %v3110 = vadd.f32 0.0, %v3109
        %v3111 = vpop.f32.mrb[0].mxu0
        %3112 = vmatprep.mubr.bf16.mxu0 0
        %3113 = vmatmul.mubr.bf16.gmra.mrb[0].mxu0 %v3017
        %v3114 = vpop.f32.mrb[0].mxu0
        %v3115 = vadd.f32 0.0, %v3114
        %v3116 = vpop.f32.mrb[0].mxu0
        %v3117 = vpop.f32.mrb[0].mxu0
        %v3118 = vadd.f32 0.0, %v3117
        %v3119 = vpop.f32.mrb[0].mxu0
        %3120 = vmatprep.mubr.bf16.mxu0 0
        %3121 = vmatmul.mubr.bf16.gmra.mrb[0].mxu0 %v3020
        %v3122 = vpop.f32.mrb[0].mxu0
        %v3123 = vadd.f32 0.0, %v3122
        %v3124 = vpop.f32.mrb[0].mxu0
        %v3125 = vpop.f32.mrb[0].mxu0
        %v3126 = vadd.f32 0.0, %v3125
        %v3127 = vpop.f32.mrb[0].mxu0
        %3128 = vmatprep.mubr.bf16.mxu0 0
        %3129 = vmatmul.mubr.bf16.gmra.mrb[0].mxu0 %v3023
        %v3130 = vpop.f32.mrb[0].mxu0
        %v3131 = vadd.f32 0.0, %v3130
        %v3132 = vpop.f32.mrb[0].mxu0
        %v3133 = vpop.f32.mrb[0].mxu0
        %v3134 = vadd.f32 0.0, %v3133
        %v3135 = vpop.f32.mrb[0].mxu0
        %3136 = vmatprep.mubr.bf16.mxu0 0
        %3137 = vmatmul.mubr.bf16.gmra.mrb[0].mxu0 %v3026
        %v3138 = vpop.f32.mrb[0].mxu0
        %v3139 = vadd.f32 0.0, %v3138
        %v3140 = vpop.f32.mrb[0].mxu0
        %v3141 = vpop.f32.mrb[0].mxu0
        %v3142 = vadd.f32 0.0, %v3141
        %v3143 = vpop.f32.mrb[0].mxu0
        %3144 = vmatprep.mubr.bf16.mxu0 0
        %3145 = vmatmul.mubr.bf16.gmra.mrb[0].mxu0 %v3029
        %v3146 = vpop.f32.mrb[0].mxu0
        %v3147 = vadd.f32 0.0, %v3146
        %v3148 = vpop.f32.mrb[0].mxu0
        %v3149 = vpop.f32.mrb[0].mxu0
        %v3150 = vadd.f32 0.0, %v3149
        %v3151 = vpop.f32.mrb[0].mxu0
        %3152 = vmatprep.mubr.bf16.mxu0 0
        %3153 = vmatmul.mubr.bf16.gmra.mrb[0].mxu0 %v3032
        %v3154 = vpop.f32.mrb[0].mxu0
        %v3155 = vadd.f32 0.0, %v3154
        %v3156 = vpop.f32.mrb[0].mxu0
        %v3157 = vpop.f32.mrb[0].mxu0
        %v3158 = vadd.f32 0.0, %v3157
        %v3159 = vpop.f32.mrb[0].mxu0
        %3160 = vmatprep.mubr.bf16.mxu0 0
        %3161 = vmatmul.mubr.bf16.gmra.mrb[0].mxu0 %v3035
        %v3162 = vpop.f32.mrb[0].mxu0
        %v3163 = vadd.f32 0.0, %v3162
        %v3164 = vpop.f32.mrb[0].mxu0
        %v3165 = vpop.f32.mrb[0].mxu0
        %v3166 = vadd.f32 0.0, %v3165
        %v3167 = vpop.f32.mrb[0].mxu0
        %3168 = vmatprep.mubr.bf16.mxu0 0
        %3169 = vmatmul.mubr.bf16.gmra.mrb[0].mxu0 %v3038
        %v3170 = vpop.f32.mrb[0].mxu0
        %v3171 = vadd.f32 0.0, %v3170
        %v3172 = vpop.f32.mrb[0].mxu0
        %v3173 = vpop.f32.mrb[0].mxu0
        %v3174 = vadd.f32 0.0, %v3173
        %v3175 = vpop.f32.mrb[0].mxu0
        %3176 = vmatprep.mubr.bf16.mxu0 0
        %3177 = vmatmul.mubr.bf16.gmra.mrb[0].mxu0 %v3041
        %v3178 = vpop.f32.mrb[0].mxu0
        %v3179 = vadd.f32 0.0, %v3178
        %v3180 = vpop.f32.mrb[0].mxu0
        %v3181 = vpop.f32.mrb[0].mxu0
        %v3182 = vadd.f32 0.0, %v3181
        %v3183 = vpop.f32.mrb[0].mxu0
        %3184 = vmatprep.mubr.bf16.mxu0 0
        %3185 = vmatmul.mubr.bf16.gmra.mrb[0].mxu0 %v3044
        %v3186 = vpop.f32.mrb[0].mxu0
        %v3187 = vpop.f32.mrb[0].mxu0
        %v3188 = vpop.f32.mrb[0].mxu0
        %v3189 = vpop.f32.mrb[0].mxu0
        %3190 = vmatprep.mubr.bf16.mxu0 0
        %3191 = vmatmul.mubr.bf16.gmra.mrb[0].mxu0 %v3047
        %v3192 = vpop.f32.mrb[0].mxu0
        %v3193 = vpop.f32.mrb[0].mxu0
        %v3194 = vpop.f32.mrb[0].mxu0
        %v3195 = vpop.f32.mrb[0].mxu0
        %3196 = vmatprep.mubr.bf16.mxu0 0
        %3197 = vmatmul.mubr.bf16.gmra.mrb[0].mxu0 %v3050
        %v3198 = vpop.f32.mrb[0].mxu0
        %v3199 = vpop.f32.mrb[0].mxu0
        %v3200 = vpop.f32.mrb[0].mxu0
        %v3201 = vpop.f32.mrb[0].mxu0
        %3202 = vdwg.mxu0
        %v3223 = vrot.slane %v3091, 1
        %v3224 = vrot.slane %v3094, 1
        %v3225 = vsel %vm1484, %v3223, %v3224
        %v3226 = vrot.slane %v3099, 1
        %v3227 = vsel %vm1484, %v3224, %v3226
        %v3228 = vrot.slane %v3102, 1
        %v3229 = vrot.slane %v3107, 1
        %v3230 = vsel %vm1484, %v3228, %v3229
        %v3231 = vrot.slane %v3110, 1
        %v3232 = vsel %vm1484, %v3229, %v3231
        %v3233 = vrot.slane %v3115, 1
        %v3234 = vsel %vm1484, %v3231, %v3233
        %v3235 = vrot.slane %v3118, 1
        %v3236 = vrot.slane %v3123, 1
        %v3237 = vsel %vm1484, %v3235, %v3236
        %v3238 = vrot.slane %v3126, 1
        %v3239 = vsel %vm1484, %v3236, %v3238
        %v3240 = vrot.slane %v3134, 1
        %v3241 = vrot.slane %v3139, 1
        %v3242 = vsel %vm1484, %v3240, %v3241
        %v3243 = vrot.slane %v3142, 1
        %v3244 = vsel %vm1484, %v3241, %v3243
        %v3245 = vrot.slane %v3150, 1
        %v3246 = vrot.slane %v3155, 1
        %v3247 = vsel %vm1484, %v3245, %v3246
        %v3248 = vrot.slane %v3158, 1
        %v3249 = vsel %vm1484, %v3246, %v3248
        %v3250 = vrot.slane %v3163, 1
        %v3251 = vrot.slane %v3166, 1
        %v3252 = vsel %vm1484, %v3250, %v3251
        %v3253 = vrot.slane %v3171, 1
        %v3254 = vsel %vm1484, %v3251, %v3253
        %v3255 = vrot.slane %v3174, 1
        %v3256 = vsel %vm1484, %v3253, %v3255
        %v3271 = vmax.f32 %v3091, %v3225
        %v3272 = vmax.f32 %v3094, %v3227
        %v3273 = vmax.f32 %v3102, %v3230
        %v3274 = vmax.f32 %v3107, %v3232
        %v3275 = vmax.f32 %v3110, %v3234
        %v3276 = vmax.f32 %v3118, %v3237
        %v3277 = vmax.f32 %v3123, %v3239
        %v3278 = vmax.f32 %v3134, %v3242
        %v3279 = vmax.f32 %v3139, %v3244
        %v3280 = vmax.f32 %v3150, %v3247
        %v3281 = vmax.f32 %v3155, %v3249
        %v3282 = vmax.f32 %v3163, %v3252
        %v3283 = vmax.f32 %v3166, %v3254
        %v3284 = vmax.f32 %v3171, %v3256
        %v3289 = vsel %vm1484, %v3226, %v3228
        %v3290 = vsel %vm1484, %v3233, %v3235
        %v3291 = vrot.slane %v3131, 1
        %v3292 = vsel %vm1484, %v3238, %v3291
        %v3293 = vsel %vm1484, %v3291, %v3240
        %v3294 = vrot.slane %v3147, 1
        %v3295 = vsel %vm1484, %v3243, %v3294
        %v3296 = vsel %vm1484, %v3294, %v3245
        %v3297 = vsel %vm1484, %v3248, %v3250
        %v3298 = vrot.slane %v3179, 1
        %v3299 = vsel %vm1484, %v3255, %v3298
        %v3300 = vrot.slane %v3182, 1
        %v3301 = vsel %vm1484, %v3298, %v3300
        %v3312 = vmax.f32 %v3094, %v3226
        %v3313 = vmax.f32 %v3099, %v3289
        %v3314 = vmax.f32 %v3115, %v3290
        %v3315 = vmax.f32 %v3126, %v3292
        %v3316 = vmax.f32 %v3131, %v3293
        %v3317 = vmax.f32 %v3142, %v3295
        %v3318 = vmax.f32 %v3147, %v3296
        %v3319 = vmax.f32 %v3158, %v3297
        %v3320 = vmax.f32 %v3174, %v3299
        %v3321 = vmax.f32 %v3179, %v3301
        %vm3342 = vcmask 1040384
        %v3343 = vrot.slane %v3312, 7
        %v3344 = vrot.slane %v3313, 7
        %v3345 = vsel %vm3342, %v3343, %v3344
        %v3346 = vrot.slane %v3273, 7
        %v3347 = vsel %vm3342, %v3344, %v3346
        %v3348 = vrot.slane %v3274, 7
        %v3349 = vrot.slane %v3275, 7
        %v3350 = vsel %vm3342, %v3348, %v3349
        %v3351 = vrot.slane %v3314, 7
        %v3352 = vsel %vm3342, %v3349, %v3351
        %v3353 = vrot.slane %v3276, 7
        %v3354 = vsel %vm3342, %v3351, %v3353
        %v3355 = vrot.slane %v3277, 7
        %v3356 = vrot.slane %v3315, 7
        %v3357 = vsel %vm3342, %v3355, %v3356
        %v3358 = vrot.slane %v3316, 7
        %v3359 = vsel %vm3342, %v3356, %v3358
        %v3360 = vrot.slane %v3279, 7
        %v3361 = vrot.slane %v3317, 7
        %v3362 = vsel %vm3342, %v3360, %v3361
        %v3363 = vrot.slane %v3318, 7
        %v3364 = vsel %vm3342, %v3361, %v3363
        %v3365 = vrot.slane %v3281, 7
        %v3366 = vrot.slane %v3319, 7
        %v3367 = vsel %vm3342, %v3365, %v3366
        %v3368 = vrot.slane %v3282, 7
        %v3369 = vsel %vm3342, %v3366, %v3368
        %v3370 = vrot.slane %v3283, 7
        %v3371 = vrot.slane %v3284, 7
        %v3372 = vsel %vm3342, %v3370, %v3371
        %v3373 = vrot.slane %v3320, 7
        %v3374 = vsel %vm3342, %v3371, %v3373
        %v3375 = vrot.slane %v3321, 7
        %v3376 = vsel %vm3342, %v3373, %v3375
        %v3391 = vmax.f32 %v3271, %v3345
        %v3392 = vmax.f32 %v3272, %v3347
        %v3393 = vmax.f32 %v3273, %v3350
        %v3394 = vmax.f32 %v3274, %v3352
        %v3395 = vmax.f32 %v3275, %v3354
        %v3396 = vmax.f32 %v3276, %v3357
        %v3397 = vmax.f32 %v3277, %v3359
        %v3398 = vmax.f32 %v3278, %v3362
        %v3399 = vmax.f32 %v3279, %v3364
        %v3400 = vmax.f32 %v3280, %v3367
        %v3401 = vmax.f32 %v3281, %v3369
        %v3402 = vmax.f32 %v3282, %v3372
        %v3403 = vmax.f32 %v3283, %v3374
        %v3404 = vmax.f32 %v3284, %v3376
        %v3405 = vld [vmem:[%s4] sm:$0x1]
        %v3407 = vlaneseq
        %v3408 = vshrl.u32 %v3407, 7
        %v3409 = vsub.s32 0, %v3408
        %v3410 = vrot.slane %v3405, %v3409
        %v3412 = vadd.f32 %v3391, %v3410
        %v3413 = vadd.f32 %v3392, %v3410
        %v3414 = vadd.f32 %v3393, %v3410
        %v3415 = vadd.f32 %v3394, %v3410
        %v3416 = vadd.f32 %v3395, %v3410
        %v3417 = vadd.f32 %v3396, %v3410
        %v3418 = vadd.f32 %v3397, %v3410
        %v3419 = vadd.f32 %v3398, %v3410
        %v3420 = vadd.f32 %v3399, %v3410
        %v3421 = vadd.f32 %v3400, %v3410
        %v3422 = vadd.f32 %v3401, %v3410
        %v3423 = vadd.f32 %v3402, %v3410
        %v3424 = vadd.f32 %v3403, %v3410
        %v3425 = vadd.f32 %v3404, %v3410
        %v3426 = vmax.f32 %v3412, 0.0
        %v3427 = vmax.f32 %v3413, 0.0
        %v3428 = vmax.f32 %v3414, 0.0
        %v3429 = vmax.f32 %v3415, 0.0
        %v3430 = vmax.f32 %v3416, 0.0
        %v3431 = vmax.f32 %v3417, 0.0
        %v3432 = vmax.f32 %v3418, 0.0
        %v3433 = vmax.f32 %v3419, 0.0
        %v3434 = vmax.f32 %v3420, 0.0
        %v3435 = vmax.f32 %v3421, 0.0
        %v3436 = vmax.f32 %v3422, 0.0
        %v3437 = vmax.f32 %v3423, 0.0
        %v3438 = vmax.f32 %v3424, 0.0
        %v3439 = vmax.f32 %v3425, 0.0
        %v3440 = vlaneseq
        %vm3441 = vcmp.ge.s32.totalorder %v3440, 0
        %vm3442 = vcmp.lt.s32.totalorder %v3440, 16
        %vm3443 = vmand %vm3441, %vm3442
        %3444 = vst.msk [vmem:[#allocation3] sm:$0x1] %vm3443, %v3426
        %v3447 = vunpack.c.l.s4 1966171168
        %v3448 = vunpack.c.0.s8 %v3447
        %v3449 = vlaneseq
        %v3450 = vshrl.u32 %v3449, 7
        %v3451 = vsub.s32 %v3448, %v3450
        %v3452 = vrot.slane %v3426, %v3451
        %v3454 = vunpack.c.l.s4 1966171168
        %v3455 = vunpack.c.0.s8 %v3454
        %v3456 = vlaneseq
        %v3457 = vshrl.u32 %v3456, 7
        %v3458 = vsub.s32 %v3455, %v3457
        %v3459 = vrot.slane %v3452, %v3458
        %v3460 = vcombine.high %v3459, %v3459
        %3461 = vrot.lane.b32.xlu0 %v3460, 16
        %v3462 = vpop.permute.xlu0 %3461
        %vm3464 = vcmp.ge.s32.totalorder %v3440, 16
        %vm3465 = vcmp.lt.s32.totalorder %v3440, 32
        %vm3466 = vmand %vm3464, %vm3465
        %3467 = vst.msk [vmem:[#allocation3] sm:$0x1] %vm3466, %v3462
        %v3468 = vcombine.high %v3426, %v3426
        %v3470 = vunpack.c.l.s4 1966171168
        %v3471 = vunpack.c.0.s8 %v3470
        %v3472 = vlaneseq
        %v3473 = vshrl.u32 %v3472, 7
        %v3474 = vsub.s32 %v3471, %v3473
        %v3475 = vrot.slane %v3468, %v3474
        %v3477 = vunpack.c.l.s4 1966171168
        %v3478 = vunpack.c.0.s8 %v3477
        %v3479 = vlaneseq
        %v3480 = vshrl.u32 %v3479, 7
        %v3481 = vsub.s32 %v3478, %v3480
        %v3482 = vrot.slane %v3475, %v3481
        %3483 = vrot.lane.b32.xlu0 %v3482, 32
        %v3484 = vpop.permute.xlu0 %3483
        %vm3486 = vcmp.ge.s32.totalorder %v3440, 32
        %vm3487 = vcmp.lt.s32.totalorder %v3440, 48
        %vm3488 = vmand %vm3486, %vm3487
        %3489 = vst.msk [vmem:[#allocation3] sm:$0x1] %vm3488, %v3484
        %v3490 = vcombine.high %v3482, %v3482
        %3491 = vrot.lane.b32.xlu0 %v3490, 48
        %v3492 = vpop.permute.xlu0 %3491
        %vm3494 = vcmp.ge.s32.totalorder %v3440, 48
        %vm3495 = vcmp.lt.s32.totalorder %v3440, 64
        %vm3496 = vmand %vm3494, %vm3495
        %3497 = vst.msk [vmem:[#allocation3] sm:$0x1] %vm3496, %v3492
        %v3500 = vunpack.c.l.s4 1966171168
        %v3501 = vunpack.c.0.s8 %v3500
        %v3502 = vlaneseq
        %v3503 = vshrl.u32 %v3502, 7
        %v3504 = vsub.s32 %v3501, %v3503
        %v3505 = vrot.slane %v3427, %v3504
        %v3507 = vunpack.c.l.s4 1966171168
        %v3508 = vunpack.c.0.s8 %v3507
        %v3509 = vlaneseq
        %v3510 = vshrl.u32 %v3509, 7
        %v3511 = vsub.s32 %v3508, %v3510
        %v3512 = vrot.slane %v3505, %v3511
        %3513 = vrot.lane.b32.xlu0 %v3512, 64
        %v3514 = vpop.permute.xlu0 %3513
        %vm3516 = vcmp.ge.s32.totalorder %v3440, 64
        %vm3517 = vcmp.lt.s32.totalorder %v3440, 80
        %vm3518 = vmand %vm3516, %vm3517
        %3519 = vst.msk [vmem:[#allocation3] sm:$0x1] %vm3518, %v3514
        %v3520 = vcombine.high %v3512, %v3512
        %3521 = vrot.lane.b32.xlu0 %v3520, 80
        %v3522 = vpop.permute.xlu0 %3521
        %vm3524 = vcmp.ge.s32.totalorder %v3440, 80
        %vm3525 = vcmp.lt.s32.totalorder %v3440, 96
        %vm3526 = vmand %vm3524, %vm3525
        %3527 = vst.msk [vmem:[#allocation3] sm:$0x1] %vm3526, %v3522
        %v3529 = vcombine.high %v3428, %v3428
        %v3531 = vunpack.c.l.s4 1966171168
        %v3532 = vunpack.c.0.s8 %v3531
        %v3533 = vlaneseq
        %v3534 = vshrl.u32 %v3533, 7
        %v3535 = vsub.s32 %v3532, %v3534
        %v3536 = vrot.slane %v3529, %v3535
        %v3538 = vunpack.c.l.s4 1966171168
        %v3539 = vunpack.c.0.s8 %v3538
        %v3540 = vlaneseq
        %v3541 = vshrl.u32 %v3540, 7
        %v3542 = vsub.s32 %v3539, %v3541
        %v3543 = vrot.slane %v3536, %v3542
        %v3544 = vcombine.high %v3543, %v3543
        %3545 = vrot.lane.b32.xlu0 %v3544, 96
        %v3546 = vpop.permute.xlu0 %3545
        %vm3548 = vcmp.ge.s32.totalorder %v3440, 96
        %vm3549 = vcmp.lt.s32.totalorder %v3440, 112
        %vm3550 = vmand %vm3548, %vm3549
        %3551 = vst.msk [vmem:[#allocation3] sm:$0x1] %vm3550, %v3546
        %v3554 = vunpack.c.l.s4 1966171168
        %v3555 = vunpack.c.0.s8 %v3554
        %v3556 = vlaneseq
        %v3557 = vshrl.u32 %v3556, 7
        %v3558 = vsub.s32 %v3555, %v3557
        %v3559 = vrot.slane %v3429, %v3558
        %v3561 = vunpack.c.l.s4 1966171168
        %v3562 = vunpack.c.0.s8 %v3561
        %v3563 = vlaneseq
        %v3564 = vshrl.u32 %v3563, 7
        %v3565 = vsub.s32 %v3562, %v3564
        %v3566 = vrot.slane %v3559, %v3565
        %3567 = vrot.lane.b32.xlu0 %v3566, 112
        %v3568 = vpop.permute.xlu0 %3567
        %vm3570 = vcmp.ge.s32.totalorder %v3440, 112
        %vm3571 = vcmp.lt.s32.totalorder %v3440, 128
        %vm3572 = vmand %vm3570, %vm3571
        %3573 = vst.msk [vmem:[#allocation3] sm:$0x1] %vm3572, %v3568
        %v3574 = vcombine.high %v3566, %v3566
        %3576 = vst.msk [vmem:[#allocation3 + $0x1] sm:$0x1] %vm3443, %v3574
        %v3577 = vcombine.high %v3429, %v3429
        %v3579 = vunpack.c.l.s4 1966171168
        %v3580 = vunpack.c.0.s8 %v3579
        %v3581 = vlaneseq
        %v3582 = vshrl.u32 %v3581, 7
        %v3583 = vsub.s32 %v3580, %v3582
        %v3584 = vrot.slane %v3577, %v3583
        %v3586 = vunpack.c.l.s4 1966171168
        %v3587 = vunpack.c.0.s8 %v3586
        %v3588 = vlaneseq
        %v3589 = vshrl.u32 %v3588, 7
        %v3590 = vsub.s32 %v3587, %v3589
        %v3591 = vrot.slane %v3584, %v3590
        %3592 = vrot.lane.b32.xlu0 %v3591, 16
        %v3593 = vpop.permute.xlu0 %3592
        %3595 = vst.msk [vmem:[#allocation3 + $0x1] sm:$0x1] %vm3466, %v3593
        %v3596 = vcombine.high %v3591, %v3591
        %3597 = vrot.lane.b32.xlu0 %v3596, 32
        %v3598 = vpop.permute.xlu0 %3597
        %3600 = vst.msk [vmem:[#allocation3 + $0x1] sm:$0x1] %vm3488, %v3598
        %v3603 = vunpack.c.l.s4 1966171168
        %v3604 = vunpack.c.0.s8 %v3603
        %v3605 = vlaneseq
        %v3606 = vshrl.u32 %v3605, 7
        %v3607 = vsub.s32 %v3604, %v3606
        %v3608 = vrot.slane %v3430, %v3607
        %v3610 = vunpack.c.l.s4 1966171168
        %v3611 = vunpack.c.0.s8 %v3610
        %v3612 = vlaneseq
        %v3613 = vshrl.u32 %v3612, 7
        %v3614 = vsub.s32 %v3611, %v3613
        %v3615 = vrot.slane %v3608, %v3614
        %3616 = vrot.lane.b32.xlu0 %v3615, 48
        %v3617 = vpop.permute.xlu0 %3616
        %3619 = vst.msk [vmem:[#allocation3 + $0x1] sm:$0x1] %vm3496, %v3617
        %v3621 = vcombine.high %v3431, %v3431
        %v3623 = vunpack.c.l.s4 1966171168
        %v3624 = vunpack.c.0.s8 %v3623
        %v3625 = vlaneseq
        %v3626 = vshrl.u32 %v3625, 7
        %v3627 = vsub.s32 %v3624, %v3626
        %v3628 = vrot.slane %v3621, %v3627
        %v3630 = vunpack.c.l.s4 1966171168
        %v3631 = vunpack.c.0.s8 %v3630
        %v3632 = vlaneseq
        %v3633 = vshrl.u32 %v3632, 7
        %v3634 = vsub.s32 %v3631, %v3633
        %v3635 = vrot.slane %v3628, %v3634
        %3636 = vrot.lane.b32.xlu0 %v3635, 64
        %v3637 = vpop.permute.xlu0 %3636
        %3639 = vst.msk [vmem:[#allocation3 + $0x1] sm:$0x1] %vm3518, %v3637
        %v3640 = vcombine.high %v3635, %v3635
        %3641 = vrot.lane.b32.xlu0 %v3640, 80
        %v3642 = vpop.permute.xlu0 %3641
        %3644 = vst.msk [vmem:[#allocation3 + $0x1] sm:$0x1] %vm3526, %v3642
        %v3647 = vunpack.c.l.s4 1966171168
        %v3648 = vunpack.c.0.s8 %v3647
        %v3649 = vlaneseq
        %v3650 = vshrl.u32 %v3649, 7
        %v3651 = vsub.s32 %v3648, %v3650
        %v3652 = vrot.slane %v3432, %v3651
        %v3654 = vunpack.c.l.s4 1966171168
        %v3655 = vunpack.c.0.s8 %v3654
        %v3656 = vlaneseq
        %v3657 = vshrl.u32 %v3656, 7
        %v3658 = vsub.s32 %v3655, %v3657
        %v3659 = vrot.slane %v3652, %v3658
        %3660 = vrot.lane.b32.xlu0 %v3659, 96
        %v3661 = vpop.permute.xlu0 %3660
        %3663 = vst.msk [vmem:[#allocation3 + $0x1] sm:$0x1] %vm3550, %v3661
        %v3664 = vcombine.high %v3659, %v3659
        %3665 = vrot.lane.b32.xlu0 %v3664, 112
        %v3666 = vpop.permute.xlu0 %3665
        %3668 = vst.msk [vmem:[#allocation3 + $0x1] sm:$0x1] %vm3572, %v3666
        %v3669 = vcombine.high %v3432, %v3432
        %v3671 = vunpack.c.l.s4 1966171168
        %v3672 = vunpack.c.0.s8 %v3671
        %v3673 = vlaneseq
        %v3674 = vshrl.u32 %v3673, 7
        %v3675 = vsub.s32 %v3672, %v3674
        %v3676 = vrot.slane %v3669, %v3675
        %v3678 = vunpack.c.l.s4 1966171168
        %v3679 = vunpack.c.0.s8 %v3678
        %v3680 = vlaneseq
        %v3681 = vshrl.u32 %v3680, 7
        %v3682 = vsub.s32 %v3679, %v3681
        %v3683 = vrot.slane %v3676, %v3682
        %3685 = vst.msk [vmem:[#allocation3 + $0x2] sm:$0x1] %vm3443, %v3683
        %v3686 = vcombine.high %v3683, %v3683
        %3687 = vrot.lane.b32.xlu0 %v3686, 16
        %v3688 = vpop.permute.xlu0 %3687
        %3690 = vst.msk [vmem:[#allocation3 + $0x2] sm:$0x1] %vm3466, %v3688
        %v3693 = vunpack.c.l.s4 1966171168
        %v3694 = vunpack.c.0.s8 %v3693
        %v3695 = vlaneseq
        %v3696 = vshrl.u32 %v3695, 7
        %v3697 = vsub.s32 %v3694, %v3696
        %v3698 = vrot.slane %v3433, %v3697
        %v3700 = vunpack.c.l.s4 1966171168
        %v3701 = vunpack.c.0.s8 %v3700
        %v3702 = vlaneseq
        %v3703 = vshrl.u32 %v3702, 7
        %v3704 = vsub.s32 %v3701, %v3703
        %v3705 = vrot.slane %v3698, %v3704
        %v3706 = vcombine.high %v3705, %v3705
        %3707 = vrot.lane.b32.xlu0 %v3706, 32
        %v3708 = vpop.permute.xlu0 %3707
        %3710 = vst.msk [vmem:[#allocation3 + $0x2] sm:$0x1] %vm3488, %v3708
        %v3711 = vcombine.high %v3433, %v3433
        %v3713 = vunpack.c.l.s4 1966171168
        %v3714 = vunpack.c.0.s8 %v3713
        %v3715 = vlaneseq
        %v3716 = vshrl.u32 %v3715, 7
        %v3717 = vsub.s32 %v3714, %v3716
        %v3718 = vrot.slane %v3711, %v3717
        %v3720 = vunpack.c.l.s4 1966171168
        %v3721 = vunpack.c.0.s8 %v3720
        %v3722 = vlaneseq
        %v3723 = vshrl.u32 %v3722, 7
        %v3724 = vsub.s32 %v3721, %v3723
        %v3725 = vrot.slane %v3718, %v3724
        %3726 = vrot.lane.b32.xlu0 %v3725, 48
        %v3727 = vpop.permute.xlu0 %3726
        %3729 = vst.msk [vmem:[#allocation3 + $0x2] sm:$0x1] %vm3496, %v3727
        %v3730 = vcombine.high %v3725, %v3725
        %3731 = vrot.lane.b32.xlu0 %v3730, 64
        %v3732 = vpop.permute.xlu0 %3731
        %3734 = vst.msk [vmem:[#allocation3 + $0x2] sm:$0x1] %vm3518, %v3732
        %v3737 = vunpack.c.l.s4 1966171168
        %v3738 = vunpack.c.0.s8 %v3737
        %v3739 = vlaneseq
        %v3740 = vshrl.u32 %v3739, 7
        %v3741 = vsub.s32 %v3738, %v3740
        %v3742 = vrot.slane %v3434, %v3741
        %v3744 = vunpack.c.l.s4 1966171168
        %v3745 = vunpack.c.0.s8 %v3744
        %v3746 = vlaneseq
        %v3747 = vshrl.u32 %v3746, 7
        %v3748 = vsub.s32 %v3745, %v3747
        %v3749 = vrot.slane %v3742, %v3748
        %3750 = vrot.lane.b32.xlu0 %v3749, 80
        %v3751 = vpop.permute.xlu0 %3750
        %3753 = vst.msk [vmem:[#allocation3 + $0x2] sm:$0x1] %vm3526, %v3751
        %v3754 = vcombine.high %v3749, %v3749
        %3755 = vrot.lane.b32.xlu0 %v3754, 96
        %v3756 = vpop.permute.xlu0 %3755
        %3758 = vst.msk [vmem:[#allocation3 + $0x2] sm:$0x1] %vm3550, %v3756
        %v3759 = vcombine.high %v3434, %v3434
        %v3761 = vunpack.c.l.s4 1966171168
        %v3762 = vunpack.c.0.s8 %v3761
        %v3763 = vlaneseq
        %v3764 = vshrl.u32 %v3763, 7
        %v3765 = vsub.s32 %v3762, %v3764
        %v3766 = vrot.slane %v3759, %v3765
        %v3768 = vunpack.c.l.s4 1966171168
        %v3769 = vunpack.c.0.s8 %v3768
        %v3770 = vlaneseq
        %v3771 = vshrl.u32 %v3770, 7
        %v3772 = vsub.s32 %v3769, %v3771
        %v3773 = vrot.slane %v3766, %v3772
        %3774 = vrot.lane.b32.xlu0 %v3773, 112
        %v3775 = vpop.permute.xlu0 %3774
        %3777 = vst.msk [vmem:[#allocation3 + $0x2] sm:$0x1] %vm3572, %v3775
        %3778 = vst.msk [vmem:[#allocation3 + $0x3] sm:$0x1] %vm3443, %v3435
        %v3781 = vunpack.c.l.s4 1966171168
        %v3782 = vunpack.c.0.s8 %v3781
        %v3783 = vlaneseq
        %v3784 = vshrl.u32 %v3783, 7
        %v3785 = vsub.s32 %v3782, %v3784
        %v3786 = vrot.slane %v3435, %v3785
        %v3788 = vunpack.c.l.s4 1966171168
        %v3789 = vunpack.c.0.s8 %v3788
        %v3790 = vlaneseq
        %v3791 = vshrl.u32 %v3790, 7
        %v3792 = vsub.s32 %v3789, %v3791
        %v3793 = vrot.slane %v3786, %v3792
        %v3794 = vcombine.high %v3793, %v3793
        %3795 = vrot.lane.b32.xlu0 %v3794, 16
        %v3796 = vpop.permute.xlu0 %3795
        %3798 = vst.msk [vmem:[#allocation3 + $0x3] sm:$0x1] %vm3466, %v3796
        %v3799 = vcombine.high %v3435, %v3435
        %v3801 = vunpack.c.l.s4 1966171168
        %v3802 = vunpack.c.0.s8 %v3801
        %v3803 = vlaneseq
        %v3804 = vshrl.u32 %v3803, 7
        %v3805 = vsub.s32 %v3802, %v3804
        %v3806 = vrot.slane %v3799, %v3805
        %v3808 = vunpack.c.l.s4 1966171168
        %v3809 = vunpack.c.0.s8 %v3808
        %v3810 = vlaneseq
        %v3811 = vshrl.u32 %v3810, 7
        %v3812 = vsub.s32 %v3809, %v3811
        %v3813 = vrot.slane %v3806, %v3812
        %3814 = vrot.lane.b32.xlu0 %v3813, 32
        %v3815 = vpop.permute.xlu0 %3814
        %3817 = vst.msk [vmem:[#allocation3 + $0x3] sm:$0x1] %vm3488, %v3815
        %v3818 = vcombine.high %v3813, %v3813
        %3819 = vrot.lane.b32.xlu0 %v3818, 48
        %v3820 = vpop.permute.xlu0 %3819
        %3822 = vst.msk [vmem:[#allocation3 + $0x3] sm:$0x1] %vm3496, %v3820
        %v3825 = vunpack.c.l.s4 1966171168
        %v3826 = vunpack.c.0.s8 %v3825
        %v3827 = vlaneseq
        %v3828 = vshrl.u32 %v3827, 7
        %v3829 = vsub.s32 %v3826, %v3828
        %v3830 = vrot.slane %v3436, %v3829
        %v3832 = vunpack.c.l.s4 1966171168
        %v3833 = vunpack.c.0.s8 %v3832
        %v3834 = vlaneseq
        %v3835 = vshrl.u32 %v3834, 7
        %v3836 = vsub.s32 %v3833, %v3835
        %v3837 = vrot.slane %v3830, %v3836
        %3838 = vrot.lane.b32.xlu0 %v3837, 64
        %v3839 = vpop.permute.xlu0 %3838
        %3841 = vst.msk [vmem:[#allocation3 + $0x3] sm:$0x1] %vm3518, %v3839
        %v3842 = vcombine.high %v3837, %v3837
        %3843 = vrot.lane.b32.xlu0 %v3842, 80
        %v3844 = vpop.permute.xlu0 %3843
        %3846 = vst.msk [vmem:[#allocation3 + $0x3] sm:$0x1] %vm3526, %v3844
        %v3848 = vcombine.high %v3437, %v3437
        %v3850 = vunpack.c.l.s4 1966171168
        %v3851 = vunpack.c.0.s8 %v3850
        %v3852 = vlaneseq
        %v3853 = vshrl.u32 %v3852, 7
        %v3854 = vsub.s32 %v3851, %v3853
        %v3855 = vrot.slane %v3848, %v3854
        %v3857 = vunpack.c.l.s4 1966171168
        %v3858 = vunpack.c.0.s8 %v3857
        %v3859 = vlaneseq
        %v3860 = vshrl.u32 %v3859, 7
        %v3861 = vsub.s32 %v3858, %v3860
        %v3862 = vrot.slane %v3855, %v3861
        %v3863 = vcombine.high %v3862, %v3862
        %3864 = vrot.lane.b32.xlu0 %v3863, 96
        %v3865 = vpop.permute.xlu0 %3864
        %3867 = vst.msk [vmem:[#allocation3 + $0x3] sm:$0x1] %vm3550, %v3865
        %v3870 = vunpack.c.l.s4 1966171168
        %v3871 = vunpack.c.0.s8 %v3870
        %v3872 = vlaneseq
        %v3873 = vshrl.u32 %v3872, 7
        %v3874 = vsub.s32 %v3871, %v3873
        %v3875 = vrot.slane %v3438, %v3874
        %v3877 = vunpack.c.l.s4 1966171168
        %v3878 = vunpack.c.0.s8 %v3877
        %v3879 = vlaneseq
        %v3880 = vshrl.u32 %v3879, 7
        %v3881 = vsub.s32 %v3878, %v3880
        %v3882 = vrot.slane %v3875, %v3881
        %3883 = vrot.lane.b32.xlu0 %v3882, 112
        %v3884 = vpop.permute.xlu0 %3883
        %3886 = vst.msk [vmem:[#allocation3 + $0x3] sm:$0x1] %vm3572, %v3884
        %v3887 = vcombine.high %v3882, %v3882
        %3889 = vst.msk [vmem:[#allocation3 + $0x4] sm:$0x1] %vm3443, %v3887
        %v3890 = vcombine.high %v3438, %v3438
        %v3892 = vunpack.c.l.s4 1966171168
        %v3893 = vunpack.c.0.s8 %v3892
        %v3894 = vlaneseq
        %v3895 = vshrl.u32 %v3894, 7
        %v3896 = vsub.s32 %v3893, %v3895
        %v3897 = vrot.slane %v3890, %v3896
        %v3899 = vunpack.c.l.s4 1966171168
        %v3900 = vunpack.c.0.s8 %v3899
        %v3901 = vlaneseq
        %v3902 = vshrl.u32 %v3901, 7
        %v3903 = vsub.s32 %v3900, %v3902
        %v3904 = vrot.slane %v3897, %v3903
        %3905 = vrot.lane.b32.xlu0 %v3904, 16
        %v3906 = vpop.permute.xlu0 %3905
        %3908 = vst.msk [vmem:[#allocation3 + $0x4] sm:$0x1] %vm3466, %v3906
        %v3909 = vcombine.high %v3904, %v3904
        %3910 = vrot.lane.b32.xlu0 %v3909, 32
        %v3911 = vpop.permute.xlu0 %3910
        %3913 = vst.msk [vmem:[#allocation3 + $0x4] sm:$0x1] %vm3488, %v3911
        %v3916 = vunpack.c.l.s4 1966171168
        %v3917 = vunpack.c.0.s8 %v3916
        %v3918 = vlaneseq
        %v3919 = vshrl.u32 %v3918, 7
        %v3920 = vsub.s32 %v3917, %v3919
        %v3921 = vrot.slane %v3439, %v3920
        %v3923 = vunpack.c.l.s4 1966171168
        %v3924 = vunpack.c.0.s8 %v3923
        %v3925 = vlaneseq
        %v3926 = vshrl.u32 %v3925, 7
        %v3927 = vsub.s32 %v3924, %v3926
        %v3928 = vrot.slane %v3921, %v3927
        %3929 = vrot.lane.b32.xlu0 %v3928, 48
        %v3930 = vpop.permute.xlu0 %3929
        %3932 = vst.msk [vmem:[#allocation3 + $0x4] sm:$0x1] %vm3496, %v3930
        %v3933 = vld [vmem:[#allocation3] sm:$0x1f]
        %v3935 = vlaneseq
        %v3936 = vshrl.u32 %v3935, 7
        %v3937 = vsub.s32 0, %v3936
        %v3938 = vrot.slane %v3933, %v3937
        %v3939 = vlaneseq
        %v3940 = vshrl.u32 %v3939, 7
        %v3941 = vsub.s32 1, %v3940
        %v3942 = vrot.slane %v3933, %v3941
        %v3943 = vlaneseq
        %v3944 = vshrl.u32 %v3943, 7
        %v3945 = vsub.s32 2, %v3944
        %v3946 = vrot.slane %v3933, %v3945
        %v3947 = vlaneseq
        %v3948 = vshrl.u32 %v3947, 7
        %v3949 = vsub.s32 3, %v3948
        %v3950 = vrot.slane %v3933, %v3949
        %v3951 = vlaneseq
        %v3952 = vshrl.u32 %v3951, 7
        %v3953 = vsub.s32 4, %v3952
        %v3954 = vrot.slane %v3933, %v3953
        %v3960 = vpack.c.bf16 %v3938, %v3938
        %v3961 = vpack.c.bf16 %v3942, %v3942
        %v3962 = vpack.c.bf16 %v3946, %v3946
        %v3963 = vpack.c.bf16 %v3950, %v3950
        %v3964 = vpack.c.bf16 %v3954, %v3954
        %v3965 = vld [vmem:[%s5] sm:$0xf]
        %v3966 = vld [vmem:[%s5 + $0x4] sm:$0xf]
        %v3967 = vld [vmem:[%s5 + $0x8] sm:$0xf]
        %v3968 = vld [vmem:[%s5 + $0xc] sm:$0xf]
        %v3969 = vld [vmem:[%s5 + $0x10] sm:$0xf]
        %v3970 = vld [vmem:[%s5 + $0x14] sm:$0xf]
        %v3971 = vld [vmem:[%s5 + $0x18] sm:$0xf]
        %v3972 = vld [vmem:[%s5 + $0x1c] sm:$0xf]
        %v3973 = vld [vmem:[%s5 + $0x20] sm:$0xf]
        %v3974 = vld [vmem:[%s5 + $0x24] sm:$0xf]
        %v3975 = vld [vmem:[%s5 + $0x28] sm:$0xf]
        %v3976 = vld [vmem:[%s5 + $0x2c] sm:$0xf]
        %v3977 = vld [vmem:[%s5 + $0x30] sm:$0xf]
        %v3978 = vld [vmem:[%s5 + $0x34] sm:$0xf]
        %v3979 = vld [vmem:[%s5 + $0x38] sm:$0xf]
        %v3980 = vld [vmem:[%s5 + $0x3c] sm:$0xf]
        %v3981 = vld [vmem:[%s5 + $0x40] sm:$0xf]
        %v3982 = vld [vmem:[%s5 + $0x44] sm:$0xf]
        %v3983 = vld [vmem:[%s5 + $0x48] sm:$0xf]
        %v3984 = vld [vmem:[%s5 + $0x4c] sm:$0xf]
        %v3985 = vld [vmem:[%s5 + $0x50] sm:$0xf]
        %v3986 = vld [vmem:[%s5 + $0x54] sm:$0xf]
        %v3987 = vld [vmem:[%s5 + $0x58] sm:$0xf]
        %v3988 = vld [vmem:[%s5 + $0x5c] sm:$0xf]
        %v3989 = vld [vmem:[%s5 + $0x60] sm:$0xf]
        %v3990 = vld [vmem:[%s5 + $0x64] sm:$0xf]
        %v3991 = vld [vmem:[%s5 + $0x68] sm:$0xf]
        %v3992 = vld [vmem:[%s5 + $0x6c] sm:$0xf]
        %v3993 = vld [vmem:[%s5 + $0x70] sm:$0xf]
        %v3994 = vld [vmem:[%s5 + $0x74] sm:$0xf]
        %v3995 = vld [vmem:[%s5 + $0x78] sm:$0xf]
        %v3996 = vld [vmem:[%s5 + $0x7c] sm:$0xf]
        %v3997 = vld [vmem:[%s5 + $0x80] sm:$0xf]
        %v3998 = vld [vmem:[%s5 + $0x84] sm:$0xf]
        %v3999 = vld [vmem:[%s5 + $0x88] sm:$0xf]
        %v4000 = vld [vmem:[%s5 + $0x8c] sm:$0xf]
        %v4001 = vld [vmem:[%s5 + $0x90] sm:$0xf]
        %v4002 = vld [vmem:[%s5 + $0x94] sm:$0xf]
        %v4003 = vld [vmem:[%s5 + $0x98] sm:$0xf]
        %v4004 = vld [vmem:[%s5 + $0x9c] sm:$0xf]
        %v4005 = vld [vmem:[%s5 + $0xa0] sm:$0xf]
        %v4006 = vld [vmem:[%s5 + $0xa4] sm:$0xf]
        %v4007 = vld [vmem:[%s5 + $0xa8] sm:$0xf]
        %v4008 = vld [vmem:[%s5 + $0xac] sm:$0xf]
        %v4009 = vld [vmem:[%s5 + $0xb0] sm:$0xf]
        %v4010 = vld [vmem:[%s5 + $0xb4] sm:$0xf]
        %v4011 = vld [vmem:[%s5 + $0xb8] sm:$0xf]
        %v4012 = vld [vmem:[%s5 + $0xbc] sm:$0xf]
        %v4013 = vld [vmem:[%s5 + $0xc0] sm:$0xf]
        %v4014 = vld [vmem:[%s5 + $0xc4] sm:$0xf]
        %v4015 = vld [vmem:[%s5 + $0xc8] sm:$0xf]
        %v4016 = vld [vmem:[%s5 + $0xcc] sm:$0xf]
        %v4017 = vld [vmem:[%s5 + $0xd0] sm:$0xf]
        %v4018 = vld [vmem:[%s5 + $0xd4] sm:$0xf]
        %v4019 = vld [vmem:[%s5 + $0xd8] sm:$0xf]
        %v4020 = vld [vmem:[%s5 + $0xdc] sm:$0xf]
        %v4021 = vld [vmem:[%s5 + $0xe0] sm:$0xf]
        %v4022 = vld [vmem:[%s5 + $0xe4] sm:$0xf]
        %v4023 = vld [vmem:[%s5 + $0xe8] sm:$0xf]
        %v4024 = vld [vmem:[%s5 + $0xec] sm:$0xf]
        %v4025 = vld [vmem:[%s5 + $0xf0] sm:$0xf]
        %v4026 = vld [vmem:[%s5 + $0xf4] sm:$0xf]
        %v4027 = vld [vmem:[%s5 + $0xf8] sm:$0xf]
        %v4028 = vld [vmem:[%s5 + $0xfc] sm:$0xf]
        %v4029 = vld [vmem:[%s5 + $0x100] sm:$0xf]
        %v4030 = vld [vmem:[%s5 + $0x104] sm:$0xf]
        %v4031 = vld [vmem:[%s5 + $0x108] sm:$0xf]
        %v4032 = vld [vmem:[%s5 + $0x10c] sm:$0xf]
        %v4033 = vld [vmem:[%s5 + $0x110] sm:$0xf]
        %v4034 = vld [vmem:[%s5 + $0x114] sm:$0xf]
        %v4035 = vld [vmem:[%s5 + $0x118] sm:$0xf]
        %v4036 = vld [vmem:[%s5 + $0x11c] sm:$0xf]
        %v4037 = vld [vmem:[%s6] sm:$0x1]
        %v4110 = vunpack.c.l.b16 %v3965
        %v4111 = vunpack.c.l.b16 %v3966
        %v4112 = vunpack.c.l.b16 %v3967
        %v4113 = vunpack.c.l.b16 %v3968
        %v4114 = vunpack.c.l.b16 %v3969
        %v4115 = vunpack.c.l.b16 %v3970
        %v4116 = vunpack.c.l.b16 %v3971
        %v4117 = vunpack.c.l.b16 %v3972
        %v4118 = vunpack.c.l.b16 %v3973
        %v4119 = vunpack.c.l.b16 %v3974
        %v4120 = vunpack.c.l.b16 %v3975
        %v4121 = vunpack.c.l.b16 %v3976
        %v4122 = vunpack.c.l.b16 %v3977
        %v4123 = vunpack.c.l.b16 %v3978
        %v4124 = vunpack.c.l.b16 %v3979
        %v4125 = vunpack.c.l.b16 %v3980
        %v4126 = vunpack.c.l.b16 %v3981
        %v4127 = vunpack.c.l.b16 %v3982
        %v4128 = vunpack.c.l.b16 %v3983
        %v4129 = vunpack.c.l.b16 %v3984
        %v4130 = vunpack.c.l.b16 %v3985
        %v4131 = vunpack.c.l.b16 %v3986
        %v4132 = vunpack.c.l.b16 %v3987
        %v4133 = vunpack.c.l.b16 %v3988
        %v4134 = vunpack.c.l.b16 %v3989
        %v4135 = vunpack.c.l.b16 %v3990
        %v4136 = vunpack.c.l.b16 %v3991
        %v4137 = vunpack.c.l.b16 %v3992
        %v4138 = vunpack.c.l.b16 %v3993
        %v4139 = vunpack.c.l.b16 %v3994
        %v4140 = vunpack.c.l.b16 %v3995
        %v4141 = vunpack.c.l.b16 %v3996
        %v4142 = vunpack.c.l.b16 %v3997
        %v4143 = vunpack.c.l.b16 %v3998
        %v4144 = vunpack.c.l.b16 %v3999
        %v4145 = vunpack.c.l.b16 %v4000
        %v4146 = vunpack.c.l.b16 %v4001
        %v4147 = vunpack.c.l.b16 %v4002
        %v4148 = vunpack.c.l.b16 %v4003
        %v4149 = vunpack.c.l.b16 %v4004
        %v4150 = vunpack.c.l.b16 %v4005
        %v4151 = vunpack.c.l.b16 %v4006
        %v4152 = vunpack.c.l.b16 %v4007
        %v4153 = vunpack.c.l.b16 %v4008
        %v4154 = vunpack.c.l.b16 %v4009
        %v4155 = vunpack.c.l.b16 %v4010
        %v4156 = vunpack.c.l.b16 %v4011
        %v4157 = vunpack.c.l.b16 %v4012
        %v4158 = vunpack.c.l.b16 %v4013
        %v4159 = vunpack.c.l.b16 %v4014
        %v4160 = vunpack.c.l.b16 %v4015
        %v4161 = vunpack.c.l.b16 %v4016
        %v4162 = vunpack.c.l.b16 %v4017
        %v4163 = vunpack.c.l.b16 %v4018
        %v4164 = vunpack.c.l.b16 %v4019
        %v4165 = vunpack.c.l.b16 %v4020
        %v4166 = vunpack.c.l.b16 %v4021
        %v4167 = vunpack.c.l.b16 %v4022
        %v4168 = vunpack.c.l.b16 %v4023
        %v4169 = vunpack.c.l.b16 %v4024
        %v4170 = vunpack.c.l.b16 %v4025
        %v4171 = vunpack.c.l.b16 %v4026
        %v4172 = vunpack.c.l.b16 %v4027
        %v4173 = vunpack.c.l.b16 %v4028
        %v4174 = vunpack.c.l.b16 %v4029
        %v4175 = vunpack.c.l.b16 %v4030
        %v4176 = vunpack.c.l.b16 %v4031
        %v4177 = vunpack.c.l.b16 %v4032
        %v4178 = vunpack.c.l.b16 %v4033
        %v4179 = vunpack.c.l.b16 %v4034
        %v4180 = vunpack.c.l.b16 %v4035
        %v4181 = vunpack.c.l.b16 %v4036
        %v4182 = vpack.c.b16 %v4111, %v4110
        %v4183 = vpack.c.b16 %v4113, %v4112
        %v4184 = vpack.c.b16 %v4115, %v4114
        %v4185 = vpack.c.b16 %v4117, %v4116
        %v4186 = vpack.c.b16 %v4119, %v4118
        %v4187 = vpack.c.b16 %v4121, %v4120
        %v4188 = vpack.c.b16 %v4123, %v4122
        %v4189 = vpack.c.b16 %v4125, %v4124
        %v4190 = vpack.c.b16 %v4127, %v4126
        %v4191 = vpack.c.b16 %v4129, %v4128
        %v4192 = vpack.c.b16 %v4131, %v4130
        %v4193 = vpack.c.b16 %v4133, %v4132
        %v4194 = vpack.c.b16 %v4135, %v4134
        %v4195 = vpack.c.b16 %v4137, %v4136
        %v4196 = vpack.c.b16 %v4139, %v4138
        %v4197 = vpack.c.b16 %v4141, %v4140
        %v4198 = vpack.c.b16 %v4143, %v4142
        %v4199 = vpack.c.b16 %v4145, %v4144
        %v4200 = vpack.c.b16 %v4147, %v4146
        %v4201 = vpack.c.b16 %v4149, %v4148
        %v4202 = vpack.c.b16 %v4151, %v4150
        %v4203 = vpack.c.b16 %v4153, %v4152
        %v4204 = vpack.c.b16 %v4155, %v4154
        %v4205 = vpack.c.b16 %v4157, %v4156
        %v4206 = vpack.c.b16 %v4159, %v4158
        %v4207 = vpack.c.b16 %v4161, %v4160
        %v4208 = vpack.c.b16 %v4163, %v4162
        %v4209 = vpack.c.b16 %v4165, %v4164
        %v4210 = vpack.c.b16 %v4167, %v4166
        %v4211 = vpack.c.b16 %v4169, %v4168
        %v4212 = vpack.c.b16 %v4171, %v4170
        %v4213 = vpack.c.b16 %v4173, %v4172
        %v4214 = vpack.c.b16 %v4175, %v4174
        %v4215 = vpack.c.b16 %v4177, %v4176
        %v4216 = vpack.c.b16 %v4179, %v4178
        %v4217 = vpack.c.b16 %v4181, %v4180
        %vm4254 = vcmask 523264
        %v4256 = vsel %vm4254, %v3964, 0
        %4258 = vmatprep.subr.bf16.mxu0 0
        %4259 = vmatpush1.bf16.msra.mxu0 %v4182
        %4260 = vmatprep.subr.bf16.mxu0 0
        %4261 = vmatpush1.bf16.msra.mxu0 %v4183
        %4262 = vmatprep.subr.bf16.mxu0 0
        %4263 = vmatpush1.bf16.msra.mxu0 %v4184
        %4264 = vmatprep.subr.bf16.mxu0 0
        %4265 = vmatpush1.bf16.msra.mxu0 %v4185
        %4266 = vmatprep.subr.bf16.mxu0 0
        %4267 = vmatpush1.bf16.msra.mxu0 %v4186
        %4268 = vmatprep.subr.bf16.mxu0 0
        %4269 = vmatpush1.bf16.msra.mxu0 %v4187
        %4270 = vmatprep.subr.bf16.mxu0 0
        %4271 = vmatpush1.bf16.msra.mxu0 %v4188
        %4272 = vmatprep.subr.bf16.mxu0 0
        %4273 = vmatpush1.bf16.msra.mxu0 %v4189
        %4274 = vmatprep.subr.bf16.mxu0 0
        %4275 = vmatpush1.bf16.msra.mxu0 %v4190
        %4276 = vmatprep.subr.bf16.mxu0 0
        %4277 = vmatpush1.bf16.msra.mxu0 %v4191
        %4278 = vmatprep.subr.bf16.mxu0 0
        %4279 = vmatpush1.bf16.msra.mxu0 %v4192
        %4280 = vmatprep.subr.bf16.mxu0 0
        %4281 = vmatpush1.bf16.msra.mxu0 %v4193
        %4282 = vmatprep.subr.bf16.mxu0 0
        %4283 = vmatpush1.bf16.msra.mxu0 %v4194
        %4284 = vmatprep.subr.bf16.mxu0 0
        %4285 = vmatpush1.bf16.msra.mxu0 %v4195
        %4286 = vmatprep.subr.bf16.mxu0 0
        %4287 = vmatpush1.bf16.msra.mxu0 %v4196
        %4288 = vmatprep.subr.bf16.mxu0 0
        %4289 = vmatpush1.bf16.msra.mxu0 %v4197
        %4290 = vmatprep.mubr.bf16.mxu0 %v3961
        %4291 = vmatmul.mubr.bf16.gmra.mrb[0].mxu0 %v3960
        %v4292 = vpop.f32.mrb[0].mxu0
        %v4293 = vadd.f32 %v4037, %v4292
        %v4294 = vpop.f32.mrb[0].mxu0
        %v4295 = vpop.f32.mrb[0].mxu0
        %v4296 = vpop.f32.mrb[0].mxu0
        %4297 = vdwg.mxu0
        %4298 = vmatprep.subr.bf16.mxu0 0
        %4299 = vmatpush1.bf16.msra.mxu0 %v4198
        %4300 = vmatprep.subr.bf16.mxu0 0
        %4301 = vmatpush1.bf16.msra.mxu0 %v4199
        %4302 = vmatprep.subr.bf16.mxu0 0
        %4303 = vmatpush1.bf16.msra.mxu0 %v4200
        %4304 = vmatprep.subr.bf16.mxu0 0
        %4305 = vmatpush1.bf16.msra.mxu0 %v4201
        %4306 = vmatprep.subr.bf16.mxu0 0
        %4307 = vmatpush1.bf16.msra.mxu0 %v4202
        %4308 = vmatprep.subr.bf16.mxu0 0
        %4309 = vmatpush1.bf16.msra.mxu0 %v4203
        %4310 = vmatprep.subr.bf16.mxu0 0
        %4311 = vmatpush1.bf16.msra.mxu0 %v4204
        %4312 = vmatprep.subr.bf16.mxu0 0
        %4313 = vmatpush1.bf16.msra.mxu0 %v4205
        %4314 = vmatprep.subr.bf16.mxu0 0
        %4315 = vmatpush1.bf16.msra.mxu0 %v4206
        %4316 = vmatprep.subr.bf16.mxu0 0
        %4317 = vmatpush1.bf16.msra.mxu0 %v4207
        %4318 = vmatprep.subr.bf16.mxu0 0
        %4319 = vmatpush1.bf16.msra.mxu0 %v4208
        %4320 = vmatprep.subr.bf16.mxu0 0
        %4321 = vmatpush1.bf16.msra.mxu0 %v4209
        %4322 = vmatprep.subr.bf16.mxu0 0
        %4323 = vmatpush1.bf16.msra.mxu0 %v4210
        %4324 = vmatprep.subr.bf16.mxu0 0
        %4325 = vmatpush1.bf16.msra.mxu0 %v4211
        %4326 = vmatprep.subr.bf16.mxu0 0
        %4327 = vmatpush1.bf16.msra.mxu0 %v4212
        %4328 = vmatprep.subr.bf16.mxu0 0
        %4329 = vmatpush1.bf16.msra.mxu0 %v4213
        %4330 = vmatprep.mubr.bf16.mxu0 %v3963
        %4331 = vmatmul.mubr.bf16.gmra.mrb[0].mxu0 %v3962
        %v4332 = vpop.f32.mrb[0].mxu0
        %v4333 = vadd.f32 %v4293, %v4332
        %v4334 = vpop.f32.mrb[0].mxu0
        %v4335 = vpop.f32.mrb[0].mxu0
        %v4336 = vpop.f32.mrb[0].mxu0
        %4337 = vdwg.mxu0
        %4338 = vmatprep.subr.bf16.mxu0 0
        %4339 = vmatpush1.bf16.msra.mxu0 %v4214
        %4340 = vmatprep.subr.bf16.mxu0 0
        %4341 = vmatpush1.bf16.msra.mxu0 %v4215
        %4342 = vmatprep.subr.bf16.mxu0 0
        %4343 = vmatpush1.bf16.msra.mxu0 %v4216
        %4344 = vmatprep.subr.bf16.mxu0 0
        %4345 = vmatpush1.bf16.msra.mxu0 %v4217
        %4346 = vmatprep.subr.bf16.mxu0 0
        %4347 = vmatpush1.bf16.msra.mxu0 0
        %4348 = vmatprep.subr.bf16.mxu0 0
        %4349 = vmatpush1.bf16.msra.mxu0 0
        %4350 = vmatprep.subr.bf16.mxu0 0
        %4351 = vmatpush1.bf16.msra.mxu0 0
        %4352 = vmatprep.subr.bf16.mxu0 0
        %4353 = vmatpush1.bf16.msra.mxu0 0
        %4354 = vmatprep.subr.bf16.mxu0 0
        %4355 = vmatpush1.bf16.msra.mxu0 0
        %4356 = vmatprep.subr.bf16.mxu0 0
        %4357 = vmatpush1.bf16.msra.mxu0 0
        %4358 = vmatprep.subr.bf16.mxu0 0
        %4359 = vmatpush1.bf16.msra.mxu0 0
        %4360 = vmatprep.subr.bf16.mxu0 0
        %4361 = vmatpush1.bf16.msra.mxu0 0
        %4362 = vmatprep.subr.bf16.mxu0 0
        %4363 = vmatpush1.bf16.msra.mxu0 0
        %4364 = vmatprep.subr.bf16.mxu0 0
        %4365 = vmatpush1.bf16.msra.mxu0 0
        %4366 = vmatprep.subr.bf16.mxu0 0
        %4367 = vmatpush1.bf16.msra.mxu0 0
        %4368 = vmatprep.subr.bf16.mxu0 0
        %4369 = vmatpush1.bf16.msra.mxu0 0
        %4370 = vmatprep.mubr.bf16.mxu0 0
        %4371 = vmatmul.mubr.bf16.gmra.mrb[0].mxu0 %v4256
        %v4372 = vpop.f32.mrb[0].mxu0
        %v4373 = vadd.f32 %v4333, %v4372
        %v4374 = vpop.f32.mrb[0].mxu0
        %v4375 = vpop.f32.mrb[0].mxu0
        %v4376 = vpop.f32.mrb[0].mxu0
        %4377 = vdwg.mxu0
        %v4378 = vmax.f32 %v4373, 0.0
        %v4379 = vpack.c.bf16 %v4378, %v4378
        %v4380 = vld [vmem:[%s7] sm:$0xf]
        %v4381 = vld [vmem:[%s7 + $0x4] sm:$0xf]
        %v4382 = vld [vmem:[%s7 + $0x8] sm:$0xf]
        %v4383 = vld [vmem:[%s7 + $0xc] sm:$0xf]
        %v4384 = vld [vmem:[%s7 + $0x10] sm:$0xf]
        %v4385 = vld [vmem:[%s7 + $0x14] sm:$0xf]
        %v4386 = vld [vmem:[%s7 + $0x18] sm:$0xf]
        %v4387 = vld [vmem:[%s7 + $0x1c] sm:$0xf]
        %v4388 = vld [vmem:[%s7 + $0x20] sm:$0xf]
        %v4389 = vld [vmem:[%s7 + $0x24] sm:$0xf]
        %v4390 = vld [vmem:[%s7 + $0x28] sm:$0xf]
        %v4391 = vld [vmem:[%s7 + $0x2c] sm:$0xf]
        %v4392 = vld [vmem:[%s7 + $0x30] sm:$0xf]
        %v4393 = vld [vmem:[%s7 + $0x34] sm:$0xf]
        %v4394 = vld [vmem:[%s7 + $0x38] sm:$0xf]
        %v4395 = vld [vmem:[%s8] sm:$0x1]
        %v4411 = vunpack.c.l.b16 %v4380
        %v4412 = vunpack.c.l.b16 %v4381
        %v4413 = vunpack.c.l.b16 %v4382
        %v4414 = vunpack.c.l.b16 %v4383
        %v4415 = vunpack.c.l.b16 %v4384
        %v4416 = vunpack.c.l.b16 %v4385
        %v4417 = vunpack.c.l.b16 %v4386
        %v4418 = vunpack.c.l.b16 %v4387
        %v4419 = vunpack.c.l.b16 %v4388
        %v4420 = vunpack.c.l.b16 %v4389
        %v4421 = vunpack.c.l.b16 %v4390
        %v4422 = vunpack.c.l.b16 %v4391
        %v4423 = vunpack.c.l.b16 %v4392
        %v4424 = vunpack.c.l.b16 %v4393
        %v4425 = vunpack.c.l.b16 %v4394
        %v4426 = vpack.c.b16 %v4412, %v4411
        %v4427 = vpack.c.b16 %v4414, %v4413
        %v4428 = vpack.c.b16 %v4416, %v4415
        %v4429 = vpack.c.b16 %v4418, %v4417
        %v4430 = vpack.c.b16 %v4420, %v4419
        %v4431 = vpack.c.b16 %v4422, %v4421
        %v4432 = vpack.c.b16 %v4424, %v4423
        %v4433 = vpack.c.b16 %v4425, %v4425
        %vm4441 = vcmask 982016
        %v4443 = vsel %vm4441, %v4379, 0
        %v4446 = vsel %vm960, %v4433, 0
        %4448 = vmatprep.subr.bf16.mxu0 0
        %4449 = vmatpush1.bf16.msra.mxu0 %v4426
        %4450 = vmatprep.subr.bf16.mxu0 0
        %4451 = vmatpush1.bf16.msra.mxu0 %v4427
        %4452 = vmatprep.subr.bf16.mxu0 0
        %4453 = vmatpush1.bf16.msra.mxu0 %v4428
        %4454 = vmatprep.subr.bf16.mxu0 0
        %4455 = vmatpush1.bf16.msra.mxu0 %v4429
        %4456 = vmatprep.subr.bf16.mxu0 0
        %4457 = vmatpush1.bf16.msra.mxu0 %v4430
        %4458 = vmatprep.subr.bf16.mxu0 0
        %4459 = vmatpush1.bf16.msra.mxu0 %v4431
        %4460 = vmatprep.subr.bf16.mxu0 0
        %4461 = vmatpush1.bf16.msra.mxu0 %v4432
        %4462 = vmatprep.subr.bf16.mxu0 0
        %4463 = vmatpush1.bf16.msra.mxu0 %v4446
        %4464 = vmatprep.subr.bf16.mxu0 0
        %4465 = vmatpush1.bf16.msra.mxu0 0
        %4466 = vmatprep.subr.bf16.mxu0 0
        %4467 = vmatpush1.bf16.msra.mxu0 0
        %4468 = vmatprep.subr.bf16.mxu0 0
        %4469 = vmatpush1.bf16.msra.mxu0 0
        %4470 = vmatprep.subr.bf16.mxu0 0
        %4471 = vmatpush1.bf16.msra.mxu0 0
        %4472 = vmatprep.subr.bf16.mxu0 0
        %4473 = vmatpush1.bf16.msra.mxu0 0
        %4474 = vmatprep.subr.bf16.mxu0 0
        %4475 = vmatpush1.bf16.msra.mxu0 0
        %4476 = vmatprep.subr.bf16.mxu0 0
        %4477 = vmatpush1.bf16.msra.mxu0 0
        %4478 = vmatprep.subr.bf16.mxu0 0
        %4479 = vmatpush1.bf16.msra.mxu0 0
        %4480 = vmatprep.mubr.bf16.mxu0 0
        %4481 = vmatmul.mubr.bf16.gmra.mrb[0].mxu0 %v4443
        %v4482 = vpop.f32.mrb[0].mxu0
        %v4483 = vadd.f32 %v4395, %v4482
        %v4484 = vpop.f32.mrb[0].mxu0
        %v4485 = vpop.f32.mrb[0].mxu0
        %v4486 = vpop.f32.mrb[0].mxu0
        %4487 = vdwg.mxu0
        %v4488 = vmax.f32 %v4483, 0.0
        %v4489 = vpack.c.bf16 %v4488, %v4488
        %v4490 = vld [vmem:[%s9] sm:$0xf]
        %v4491 = vld [vmem:[%s9 + $0x4] sm:$0xf]
        %v4492 = vld [vmem:[%s9 + $0x8] sm:$0xf]
        %v4493 = vld [vmem:[%s9 + $0xc] sm:$0xf]
        %v4494 = vld [vmem:[%s9 + $0x10] sm:$0xf]
        %v4495 = vld [vmem:[%s9 + $0x14] sm:$0xf]
        %v4496 = vld [vmem:[%s9 + $0x18] sm:$0xf]
        %v4497 = vld [vmem:[%s9 + $0x1c] sm:$0xf]
        %v4498 = vld [vmem:[%s9 + $0x20] sm:$0xf]
        %v4499 = vld [vmem:[%s9 + $0x24] sm:$0xf]
        %v4500 = vld [vmem:[%s9 + $0x28] sm:$0x3]
        %v4501 = vld [vmem:[%s10] sm:$0x1]
        %v4513 = vunpack.c.l.b16 %v4490
        %v4514 = vunpack.c.l.b16 %v4491
        %v4515 = vunpack.c.l.b16 %v4492
        %v4516 = vunpack.c.l.b16 %v4493
        %v4517 = vunpack.c.l.b16 %v4494
        %v4518 = vunpack.c.l.b16 %v4495
        %v4519 = vunpack.c.l.b16 %v4496
        %v4520 = vunpack.c.l.b16 %v4497
        %v4521 = vunpack.c.l.b16 %v4498
        %v4522 = vunpack.c.l.b16 %v4499
        %v4523 = vunpack.c.l.b16 %v4500
        %v4524 = vpack.c.b16 %v4514, %v4513
        %v4525 = vpack.c.b16 %v4516, %v4515
        %v4526 = vpack.c.b16 %v4518, %v4517
        %v4527 = vpack.c.b16 %v4520, %v4519
        %v4528 = vpack.c.b16 %v4522, %v4521
        %v4529 = vpack.c.b16 %v4523, %v4523
        %vm4535 = vcmask 687104
        %v4537 = vsel %vm4535, %v4489, 0
        %vm4539 = vcmask 1041408
        %v4541 = vsel %vm4539, %v4529, 0
        %4543 = vmatprep.subr.bf16.mxu0 0
        %4544 = vmatpush1.bf16.msra.mxu0 %v4524
        %4545 = vmatprep.subr.bf16.mxu0 0
        %4546 = vmatpush1.bf16.msra.mxu0 %v4525
        %4547 = vmatprep.subr.bf16.mxu0 0
        %4548 = vmatpush1.bf16.msra.mxu0 %v4526
        %4549 = vmatprep.subr.bf16.mxu0 0
        %4550 = vmatpush1.bf16.msra.mxu0 %v4527
        %4551 = vmatprep.subr.bf16.mxu0 0
        %4552 = vmatpush1.bf16.msra.mxu0 %v4528
        %4553 = vmatprep.subr.bf16.mxu0 0
        %4554 = vmatpush1.bf16.msra.mxu0 %v4541
        %4555 = vmatprep.subr.bf16.mxu0 0
        %4556 = vmatpush1.bf16.msra.mxu0 0
        %4557 = vmatprep.subr.bf16.mxu0 0
        %4558 = vmatpush1.bf16.msra.mxu0 0
        %4559 = vmatprep.subr.bf16.mxu0 0
        %4560 = vmatpush1.bf16.msra.mxu0 0
        %4561 = vmatprep.subr.bf16.mxu0 0
        %4562 = vmatpush1.bf16.msra.mxu0 0
        %4563 = vmatprep.subr.bf16.mxu0 0
        %4564 = vmatpush1.bf16.msra.mxu0 0
        %4565 = vmatprep.subr.bf16.mxu0 0
        %4566 = vmatpush1.bf16.msra.mxu0 0
        %4567 = vmatprep.subr.bf16.mxu0 0
        %4568 = vmatpush1.bf16.msra.mxu0 0
        %4569 = vmatprep.subr.bf16.mxu0 0
        %4570 = vmatpush1.bf16.msra.mxu0 0
        %4571 = vmatprep.subr.bf16.mxu0 0
        %4572 = vmatpush1.bf16.msra.mxu0 0
        %4573 = vmatprep.subr.bf16.mxu0 0
        %4574 = vmatpush1.bf16.msra.mxu0 0
        %4575 = vmatprep.mubr.bf16.mxu0 0
        %4576 = vmatmul.mubr.bf16.gmra.mrb[0].mxu0 %v4537
        %v4577 = vpop.f32.mrb[0].mxu0
        %v4578 = vadd.f32 %v4501, %v4577
        %v4579 = vpop.f32.mrb[0].mxu0
        %v4580 = vpop.f32.mrb[0].mxu0
        %v4581 = vpop.f32.mrb[0].mxu0
        %4582 = vdwg.mxu0
        %vm4583 = vcmask 73728
        %4584 = vst.msk [vmem:[%s378] sm:$0x1] %vm4583, %v4578
        %s4585 = sand.u32 %s269, 1
        %s4586 = scalar_lea.sflag [#allocation5], %s4585
        %s4587 = sand.u32 %s269, 1
        %s4588 = scalar_lea.vmem [#allocation4], %s4587
        // Predicated region
        $region65: #{net_forward.1} parent=63 // pred_check
          %p4589 = pneg %p279
        $region66: #{net_forward.1} parent=63 // pred_check_branch
          %4591 = sbr.rel (%p4589) target = $region68
        $region67: #{net_forward.1} parent=63 // pred_region
          %s4593 = ssub.s32 16, 16
          %4594 = vsyncadd %s4586, %s4593
          %s4595 = smul.addr %s25, 16
          %s4596 = scalar_lea.hbm %s11, %s4595
          %s4598 = sshll.u32 %s4588, 4
          %s4599 = int_to_ptr.vmem [resolvable:$true] %s4598
          %4601 = dma.vmem_to_hbm [thread:$0]  %s4599, 16, %s4596, %s4586
        $region68: #{net_forward.1} parent=63 // pred_fallthru
          _
      $region64: #{net_forward.1} parent=5 // pred_fallthru
        _
      %p4602 = scmp.le.s32.totalorder 2, %s20
      // Predicated region
      $region69: #{net_forward.1} parent=5 // pred_check
        %p4603 = pneg %p4602
      $region70: #{net_forward.1} parent=5 // pred_check_branch
        %4605 = sbr.rel (%p4603) target = $region72
      $region71: #{net_forward.1} parent=5 // pred_region
        %s4606 = ssub.s32 %s20, 2
        // Predicated region
        $region73: #{net_forward.1} parent=71 // pred_check
          %p4607 = pneg %p285
        $region74: #{net_forward.1} parent=71 // pred_check_branch
          %4609 = sbr.rel (%p4607) target = $region76
        $region75: #{net_forward.1} parent=71 // pred_region
          %s4610 = sand.u32 %s270, 1
          %s4611 = scalar_lea.sflag [#allocation5], %s4610
          %s4612 = sand.u32 %s270, 1
          %s4613 = scalar_lea.vmem [#allocation4], %s4612
          %4614 = dma.done %s4611, 16
        $region76: #{net_forward.1} parent=71 // pred_fallthru
          _
      $region72: #{net_forward.1} parent=5 // pred_fallthru
        _
    $region6: #{net_forward.1} parent=1 // loop_footer
      %s24 = sadd.s32 1, %s20
    $region7: #{net_forward.1} parent=1 // loop_footer_branch
      %19 = sbr.rel target = $region3
    $region8: #{net_forward.1} parent=1 // loop_exit
      _
    %4615 = vsyncpa [#allocation5], 1
    %s4616 = scalar_lea.sflag [#allocation5], 1
    %4617 = vsyncpa %s4616, 1

</llo_original>
